<compile_context>
chip_gen: v6e
topology: v6e:2x2x1
jax: 0.10.0
libtpu: 0.0.40
codegen_flags: <defaults>
</compile_context>

<pallas_src>
import math

import jax
import jax.numpy as jnp
from jax.experimental import pallas as pl
from jax.experimental.pallas import tpu as pltpu


LANE = 128


# ----------------------------- helpers ---------------------------------------


def _gelu_exact(x):
    # PyTorch nn.GELU() default: exact erf-based GELU (f32 path).
    # TODO(synk): optionally switch to tanh-approx GELU (EUP slot) behind a flag
    # when a bundle dump shows the VALU saturating; kept exact to match PyTorch.
    return 0.5 * x * (1.0 + jax.lax.erf(x * (1.0 / math.sqrt(2.0))))


def _round_up(n, m):
    return ((n + m - 1) // m) * m


def _pad2d(a, rows, cols):
    r, c = a.shape
    if r == rows and c == cols:
        return a
    return jnp.pad(a, ((0, rows - r), (0, cols - c)))


def _vmem_capacity_bytes():
    try:
        cap = int(pltpu.get_tpu_info().vmem_capacity_bytes)
        if cap > 0:
            return cap
    except Exception:
        pass
    return 128 << 20  # v5e / v6e default


# ----------------------------- kernel ----------------------------------------


def _make_fan_kernel(n_fan, p_pad):
    """Kernel closure over the number of FAN layers and the p/g lane boundary.

    Ref order (positional):
      x_ref,
      we, be,                               # embedding Linear (padded, bf16 W)
      w0, b0,                               # first FAN layer: [wp0 | wg0]
      [wc, ws, wg, b] * (n_fan - 1),        # column-fused, row-split layers
      wo_c, wo_s, wo_g, bo,                 # final Linear (row-split)
      o_ref
    """

    def kernel(*refs):
        x_ref = refs[0]
        o_ref = refs[-1]
        idx = 1

        # Embedding: bf16 operands, f32 accumulation, f32 bias add.
        we, be = refs[idx], refs[idx + 1]
        idx += 2
        h = jnp.dot(x_ref[...], we[...], preferred_element_type=jnp.float32) + be[...]

        # First FAN layer: one wide dot against the fused [wp0 | wg0] slab.
        w0, b0 = refs[idx], refs[idx + 1]
        idx += 2
        slab = (
            jnp.dot(h.astype(jnp.bfloat16), w0[...], preferred_element_type=jnp.float32)
            + b0[...]
        )
        p = slab[:, :p_pad]        # lane-aligned slice (p_pad % 128 == 0)
        gp = slab[:, p_pad:]
        c = jnp.cos(p).astype(jnp.bfloat16)
        s = jnp.sin(p).astype(jnp.bfloat16)
        g = _gelu_exact(gp).astype(jnp.bfloat16)

        # Remaining FAN layers: 3 wide dots (cos/sin/g row blocks, fused p|g cols).
        for _ in range(n_fan - 1):
            wc, ws, wgm, b = refs[idx : idx + 4]
            idx += 4
            slab = (
                jnp.dot(c, wc[...], preferred_element_type=jnp.float32)
                + jnp.dot(s, ws[...], preferred_element_type=jnp.float32)
                + jnp.dot(g, wgm[...], preferred_element_type=jnp.float32)
                + b[...]
            )
            p = slab[:, :p_pad]
            gp = slab[:, p_pad:]
            c = jnp.cos(p).astype(jnp.bfloat16)
            s = jnp.sin(p).astype(jnp.bfloat16)
            g = _gelu_exact(gp).astype(jnp.bfloat16)

        # Final Linear: row-split wout (cos / sin / g blocks).
        wo_c, wo_s, wo_g, bo = refs[idx : idx + 4]
        out = (
            jnp.dot(c, wo_c[...], preferred_element_type=jnp.float32)
            + jnp.dot(s, wo_s[...], preferred_element_type=jnp.float32)
            + jnp.dot(g, wo_g[...], preferred_element_type=jnp.float32)
            + bo[...]
        )
        o_ref[...] = out.astype(o_ref.dtype)

    return kernel


# ----------------------------- wrapper ----------------------------------------


def _prepare_params(params):
    """Pad feature dims to lane multiples, column-fuse p/g branches, row-split
    the "next layer" weights into [W_cos; W_sin; W_g], pre-cast weights to bf16."""
    we, be = params["we"], params["be"]
    wout, bout = params["wout"], params["bout"]
    layers = params["layers"]
    n_fan = len(layers)
    assert n_fan >= 1, "need num_layers >= 2 (at least one FANLayer)"

    in_dim, hidden = we.shape
    out_dim = wout.shape[1]
    assert hidden % 4 == 0, "FAN requires hidden_dim % 4 == 0 (same as PyTorch module)"
    p_dim = hidden // 4
    g_dim = hidden - hidden // 2

    in_pad = _round_up(in_dim, LANE)
    hid_pad = _round_up(hidden, LANE)
    p_pad = _round_up(p_dim, LANE)
    g_pad = _round_up(g_dim, LANE)
    out_pad = _round_up(out_dim, LANE)
    pg_pad = p_pad + g_pad

    wdt = jnp.bfloat16

    def fuse_cols(w_p_branch, w_g_branch, rows):
        # lane-axis pack: [pad(W_p) | pad(W_g)]  ->  [rows, p_pad + g_pad]
        return jnp.concatenate(
            [_pad2d(w_p_branch, rows, p_pad), _pad2d(w_g_branch, rows, g_pad)], axis=1
        )

    flat = [_pad2d(we, in_pad, hid_pad).astype(wdt), _pad2d(be, 1, hid_pad)]

    # First FAN layer takes the full hidden-width embedding; fuse p|g columns.
    wp0, bp0, wg0, bg0 = layers[0]
    flat += [fuse_cols(wp0, wg0, hid_pad).astype(wdt), fuse_cols(bp0, bg0, 1)]

    def split_rows(w):
        # rows [0:p_dim] multiply cos(p), [p_dim:2p] multiply sin(p), rest multiply g
        return w[:p_dim], w[p_dim : 2 * p_dim], w[2 * p_dim :]

    for (wp, bp, wg, bg) in layers[1:]:
        wpc, wps, wpg = split_rows(wp)
        wgc, wgs, wgg = split_rows(wg)
        flat += [
            fuse_cols(wpc, wgc, p_pad).astype(wdt),   # multiplies cos(p)
            fuse_cols(wps, wgs, p_pad).astype(wdt),   # multiplies sin(p)
            fuse_cols(wpg, wgg, g_pad).astype(wdt),   # multiplies g
            fuse_cols(bp, bg, 1),                     # fused bias [bp | bg], f32
        ]

    woc, wos, wog = split_rows(wout)
    flat += [
        _pad2d(woc, p_pad, out_pad).astype(wdt),
        _pad2d(wos, p_pad, out_pad).astype(wdt),
        _pad2d(wog, g_pad, out_pad).astype(wdt),
        _pad2d(bout, 1, out_pad),
    ]

    dims = dict(
        in_dim=in_dim, out_dim=out_dim, n_fan=n_fan,
        in_pad=in_pad, hid_pad=hid_pad, p_pad=p_pad, g_pad=g_pad,
        out_pad=out_pad, pg_pad=pg_pad,
    )
    return flat, dims


def _pick_block_b(B, d, flat_params):
    """Largest batch tile (multiple of 128, or of 8 for small B) whose footprint
    fits this generation's VMEM.  Batch is padded up to a tile multiple instead
    of hunting for exact divisors."""
    cap = int(0.80 * _vmem_capacity_bytes())
    # Conservative: count weights double-buffered (in case Buffered(1) falls back).
    weight_bytes = sum(2 * p.size * p.dtype.itemsize for p in flat_params)
    pg = d["pg_pad"]
    per_row = (
        2 * d["in_pad"] * 2        # x tile, double-buffered, bf16
        + 2 * d["out_pad"] * 4     # out tile, double-buffered, f32
        + d["hid_pad"] * 6         # embedding (f32) + bf16 copy
        + pg * 4                   # f32 slab
        + pg * 2 * 2               # bf16 c/s/g (+ one generation of slack)
        + 2048                     # misc / spill headroom
    )
    budget_rows = (cap - weight_bytes - (8 << 20)) // per_row
    b_up8 = _round_up(B, 8)
    tile = max(8, min(int(budget_rows), 1024, b_up8))
    if tile >= 128:
        tile = (tile // 128) * 128
    else:
        tile = max(8, (tile // 8) * 8)
    return min(tile, b_up8)


def _estimate_vmem_bytes(block_b, d, flat_params, single_buffer_weights):
    byt = 0
    byt += 2 * block_b * d["in_pad"] * 2        # x tile (bf16), double-buffered
    byt += 2 * block_b * d["out_pad"] * 4       # out tile (f32), double-buffered
    wmul = 1 if single_buffer_weights else 2
    for p in flat_params:
        byt += wmul * p.size * p.dtype.itemsize
    pg = d["pg_pad"]
    byt += block_b * (d["hid_pad"] * 6 + pg * 4 + pg * 2 * 2)   # live intermediates
    byt = int(byt * 1.25) + (4 << 20)            # headroom
    cap = int(0.875 * _vmem_capacity_bytes())    # per-generation cap (56 MiB on v7x)
    return min(max(byt, 32 << 20), cap)


def _cost_estimate(B_pad, d, flat_params):
    pg = d["pg_pad"]
    kxn = d["in_pad"] * d["hid_pad"]                                # embedding
    kxn += d["hid_pad"] * pg                                        # first FAN layer
    kxn += (d["n_fan"] - 1) * (2 * d["p_pad"] + d["g_pad"]) * pg    # remaining layers
    kxn += (2 * d["p_pad"] + d["g_pad"]) * d["out_pad"]             # output Linear
    flops = 2 * B_pad * kxn
    transcendentals = B_pad * d["n_fan"] * (2 * d["p_pad"] + d["g_pad"])
    bytes_accessed = (
        B_pad * d["in_pad"] * 2
        + B_pad * d["out_pad"] * 4
        + sum(p.size * p.dtype.itemsize for p in flat_params)
    )
    return pl.CostEstimate(
        flops=int(flops),
        transcendentals=int(transcendentals),
        bytes_accessed=int(bytes_accessed),
    )


def fan_forward_pallas(x, params, *, block_b=None):
    """FAN forward pass (embedding -> FANLayers -> Linear) in one Pallas kernel.

    x:      [B, input_dim] float32
    params: dict with 'we','be', list 'layers' of (wp,bp,wg,bg), 'wout','bout';
            weights stored [in_features, out_features], biases [1, out_features].
    """
    B, in_dim = x.shape
    flat_params, d = _prepare_params(params)
    assert in_dim == d["in_dim"]

    if block_b is None:
        block_b = _pick_block_b(B, d, flat_params)
    assert block_b % 8 == 0, "batch tile must be a multiple of 8"

    # Pad batch rows to a tile multiple and features to the lane pad; cast bf16
    # (halves x DMA traffic).  Padded rows/lanes are sliced off after the call.
    B_pad = _round_up(B, block_b)
    xp = jnp.pad(
        x.astype(jnp.float32), ((0, B_pad - B), (0, d["in_pad"] - in_dim))
    ).astype(jnp.bfloat16)

    grid = (B_pad // block_b,)
    x_spec = pl.BlockSpec((block_b, d["in_pad"]), lambda i: (i, 0))
    out_spec = pl.BlockSpec((block_b, d["out_pad"]), lambda i: (i, 0))
    kernel = _make_fan_kernel(d["n_fan"], d["p_pad"])
    cost = _cost_estimate(B_pad, d, flat_params)

    def run(single_buffer_weights):
        if single_buffer_weights:
            # Grid-invariant weights: single-buffered (double-buffering them is waste).
            param_specs = [
                pl.BlockSpec(p.shape, lambda i: (0, 0), pipeline_mode=pl.Buffered(1))
                for p in flat_params
            ]
        else:
            param_specs = [
                pl.BlockSpec(p.shape, lambda i: (0, 0)) for p in flat_params
            ]
        vmem_limit = _estimate_vmem_bytes(block_b, d, flat_params, single_buffer_weights)
        out = pl.pallas_call(
            kernel,
            out_shape=jax.ShapeDtypeStruct((B_pad, d["out_pad"]), jnp.float32),
            grid_spec=pltpu.PrefetchScalarGridSpec(
                num_scalar_prefetch=0,
                grid=grid,
                in_specs=[x_spec] + param_specs,
                out_specs=out_spec,
            ),
            compiler_params=pltpu.CompilerParams(
                dimension_semantics=("parallel",),
                vmem_limit_bytes=vmem_limit,
            ),
            cost_estimate=cost,
        )(xp, *flat_params)
        return jax.block_until_ready(out)

    try:
        out = run(single_buffer_weights=True)
    except Exception:
        # Fallback if this JAX/Mosaic build rejects Buffered(1) weight specs.
        out = run(single_buffer_weights=False)

    # Slice batch/lane padding off outside the kernel (store stays 128-dense).
    return out[:B, : d["out_dim"]]


# ----------------------------- glue (plain JAX) -------------------------------


def ensure_compatible_input(x, in_features):
    """JAX port of _ensure_compatible_input (shape plumbing only)."""
    if x.ndim == 2 and x.shape[1] == 1 and in_features > 1:
        x = jnp.broadcast_to(x, (x.shape[0], in_features))
    if x.ndim >= 3:
        x = x.reshape(x.shape[0], -1)
    if x.shape[1] != in_features:
        if x.shape[1] > in_features:
            x = x[:, :in_features]
        else:
            pad = jnp.zeros((x.shape[0], in_features - x.shape[1]), x.dtype)
            x = jnp.concatenate([x, pad], axis=1)
    return x


def init_fan_params(key, input_dim, output_dim, hidden_dim, num_layers):
    """Deterministic init matching the PyTorch module's parameter shapes.
    Weights are stored as [in_features, out_features]."""

    def linear(key, fan_in, fan_out):
        kw, kb = jax.random.split(key)
        bound = 1.0 / math.sqrt(fan_in)
        w = jax.random.uniform(kw, (fan_in, fan_out), jnp.float32, -bound, bound)
        b = jax.random.uniform(kb, (1, fan_out), jnp.float32, -bound, bound)
        return w, b

    keys = jax.random.split(key, 2 + 2 * (num_layers - 1))
    we, be = linear(keys[0], input_dim, hidden_dim)

    layers = []
    p_dim = hidden_dim // 4
    g_dim = hidden_dim - hidden_dim // 2
    for li in range(num_layers - 1):
        wp, bp = linear(keys[1 + 2 * li], hidden_dim, p_dim)
        wg, bg = linear(keys[2 + 2 * li], hidden_dim, g_dim)
        layers.append((wp, bp, wg, bg))

    wout, bout = linear(keys[-1], hidden_dim, output_dim)
    return {"we": we, "be": be, "layers": layers, "wout": wout, "bout": bout}


def fan_forward_reference(x, params, dot_dtype=jnp.float32):
    """Pure-JAX reference of the same forward pass (for verification).
    dot_dtype=bf16 mimics the kernel's MXU operand precision."""

    def mm(a, w):
        return jnp.dot(
            a.astype(dot_dtype), w.astype(dot_dtype),
            preferred_element_type=jnp.float32,
        )

    h = mm(x, params["we"]) + params["be"]
    for (wp, bp, wg, bg) in params["layers"]:
        p = mm(h, wp) + bp
        g = _gelu_exact(mm(h, wg) + bg)
        h = jnp.concatenate([jnp.cos(p), jnp.sin(p), g], axis=-1)
    return mm(h, params["wout"]) + params["bout"]


# ----------------------------- main --------------------------------------------

if __name__ == "__main__":
    # Small shapes consistent with the module (scaled down):
    #   input_dim=4, hidden_dim=32, output_dim=2, num_layers=3, batch=8.
    input_dim, hidden_dim, output_dim, num_layers = 4, 32, 2, 3
    batch = 8

    key = jax.random.PRNGKey(0)
    k_x, k_p = jax.random.split(key)

    # 3D input exercises the _ensure_compatible_input flattening path.
    x_raw = jax.random.normal(k_x, (batch, 2, 2), dtype=jnp.float32)
    params = init_fan_params(k_p, input_dim, output_dim, hidden_dim, num_layers)

    x = ensure_compatible_input(x_raw, input_dim)

    out = fan_forward_pallas(x, params)
    out = jax.block_until_ready(out)
    assert out.shape == (batch, output_dim)

    # Tight check against a bf16-operand reference (same MXU precision)...
    ref_bf16 = fan_forward_reference(x, params, dot_dtype=jnp.bfloat16)
    assert jnp.allclose(out, ref_bf16, rtol=1e-3, atol=1e-3), "mismatch vs bf16 reference"
    # ...and a loose check against the full-f32 module semantics.
    ref_f32 = fan_forward_reference(x, params, dot_dtype=jnp.float32)
    assert jnp.allclose(out, ref_f32, rtol=5e-2, atol=5e-2), "mismatch vs f32 reference"

    print("KERNEL_OK")
</pallas_src>

<mosaic_0001>
module attributes {stable_mosaic.version = 11 : i64} {
  func.func @kernel(%arg0: i32, %arg1: memref<8x128xbf16, #tpu.memory_space<vmem>>, %arg2: memref<128x128xbf16, #tpu.memory_space<vmem>>, %arg3: memref<1x128xf32, #tpu.memory_space<vmem>>, %arg4: memref<128x256xbf16, #tpu.memory_space<vmem>>, %arg5: memref<1x256xf32, #tpu.memory_space<vmem>>, %arg6: memref<128x256xbf16, #tpu.memory_space<vmem>>, %arg7: memref<128x256xbf16, #tpu.memory_space<vmem>>, %arg8: memref<128x256xbf16, #tpu.memory_space<vmem>>, %arg9: memref<1x256xf32, #tpu.memory_space<vmem>>, %arg10: memref<128x128xbf16, #tpu.memory_space<vmem>>, %arg11: memref<128x128xbf16, #tpu.memory_space<vmem>>, %arg12: memref<128x128xbf16, #tpu.memory_space<vmem>>, %arg13: memref<1x128xf32, #tpu.memory_space<vmem>>, %arg14: memref<8x128xf32, #tpu.memory_space<vmem>>) attributes {dimension_semantics = [#tpu.dimension_semantics<parallel>], iteration_bounds = array<i64: 1>, scalar_prefetch = 0 : i64, scratch_operands = 0 : i64, tpu.core_type = #tpu.core_type<tc>, window_params = [{transform_indices = @transform_0, window_bounds = array<i64: 8, 128>}, {pipeline_mode = #tpu.pipeline_mode<synchronous>, transform_indices = @transform_1, window_bounds = array<i64: 128, 128>}, {pipeline_mode = #tpu.pipeline_mode<synchronous>, transform_indices = @transform_2, window_bounds = array<i64: 1, 128>}, {pipeline_mode = #tpu.pipeline_mode<synchronous>, transform_indices = @transform_3, window_bounds = array<i64: 128, 256>}, {pipeline_mode = #tpu.pipeline_mode<synchronous>, transform_indices = @transform_4, window_bounds = array<i64: 1, 256>}, {pipeline_mode = #tpu.pipeline_mode<synchronous>, transform_indices = @transform_5, window_bounds = array<i64: 128, 256>}, {pipeline_mode = #tpu.pipeline_mode<synchronous>, transform_indices = @transform_6, window_bounds = array<i64: 128, 256>}, {pipeline_mode = #tpu.pipeline_mode<synchronous>, transform_indices = @transform_7, window_bounds = array<i64: 128, 256>}, {pipeline_mode = #tpu.pipeline_mode<synchronous>, transform_indices = @transform_8, window_bounds = array<i64: 1, 256>}, {pipeline_mode = #tpu.pipeline_mode<synchronous>, transform_indices = @transform_9, window_bounds = array<i64: 128, 128>}, {pipeline_mode = #tpu.pipeline_mode<synchronous>, transform_indices = @transform_10, window_bounds = array<i64: 128, 128>}, {pipeline_mode = #tpu.pipeline_mode<synchronous>, transform_indices = @transform_11, window_bounds = array<i64: 128, 128>}, {pipeline_mode = #tpu.pipeline_mode<synchronous>, transform_indices = @transform_12, window_bounds = array<i64: 1, 128>}, {transform_indices = @transform_13, window_bounds = array<i64: 8, 128>}]} {
    %c0 = arith.constant 0 : index
    %c0_0 = arith.constant 0 : index
    %0 = vector.load %arg1[%c0, %c0_0] : memref<8x128xbf16, #tpu.memory_space<vmem>>, vector<8x128xbf16>
    %c0_1 = arith.constant 0 : index
    %c0_2 = arith.constant 0 : index
    %1 = vector.load %arg2[%c0_1, %c0_2] : memref<128x128xbf16, #tpu.memory_space<vmem>>, vector<128x128xbf16>
    %cst = arith.constant dense<0.000000e+00> : vector<8x128xf32>
    %2 = tpu.matmul %0, %1, %cst {dimension_numbers = #tpu.dot_dimension_numbers<[1], [0], [0], [1], [0, 0, 1, 1], [], []>} : vector<8x128xbf16>, vector<128x128xbf16>, vector<8x128xf32> -> vector<8x128xf32>
    %c0_3 = arith.constant 0 : index
    %c0_4 = arith.constant 0 : index
    %3 = vector.load %arg3[%c0_3, %c0_4] : memref<1x128xf32, #tpu.memory_space<vmem>>, vector<1x128xf32>
    %4 = vector.broadcast %3 : vector<1x128xf32> to vector<8x128xf32>
    %5 = arith.addf %2, %4 : vector<8x128xf32>
    %6 = arith.truncf %5 : vector<8x128xf32> to vector<8x128xbf16>
    %c0_5 = arith.constant 0 : index
    %c0_6 = arith.constant 0 : index
    %7 = vector.load %arg4[%c0_5, %c0_6] : memref<128x256xbf16, #tpu.memory_space<vmem>>, vector<128x256xbf16>
    %cst_7 = arith.constant dense<0.000000e+00> : vector<8x256xf32>
    %8 = tpu.matmul %6, %7, %cst_7 {dimension_numbers = #tpu.dot_dimension_numbers<[1], [0], [0], [1], [0, 0, 1, 1], [], []>} : vector<8x128xbf16>, vector<128x256xbf16>, vector<8x256xf32> -> vector<8x256xf32>
    %c0_8 = arith.constant 0 : index
    %c0_9 = arith.constant 0 : index
    %9 = vector.load %arg5[%c0_8, %c0_9] : memref<1x256xf32, #tpu.memory_space<vmem>>, vector<1x256xf32>
    %10 = vector.broadcast %9 : vector<1x256xf32> to vector<8x256xf32>
    %11 = arith.addf %8, %10 : vector<8x256xf32>
    %12 = vector.extract_strided_slice %11 {offsets = [0, 0], sizes = [8, 128], strides = [1, 1]} : vector<8x256xf32> to vector<8x128xf32>
    %13 = vector.extract_strided_slice %11 {offsets = [0, 128], sizes = [8, 128], strides = [1, 1]} : vector<8x256xf32> to vector<8x128xf32>
    %14 = math.cos %12 : vector<8x128xf32>
    %15 = arith.truncf %14 : vector<8x128xf32> to vector<8x128xbf16>
    %16 = math.sin %12 : vector<8x128xf32>
    %17 = arith.truncf %16 : vector<8x128xf32> to vector<8x128xbf16>
    %cst_10 = arith.constant 5.000000e-01 : f32
    %18 = vector.broadcast %cst_10 : f32 to vector<8x128xf32>
    %19 = arith.mulf %18, %13 : vector<8x128xf32>
    %cst_11 = arith.constant 0.707106769 : f32
    %20 = vector.broadcast %cst_11 : f32 to vector<8x128xf32>
    %21 = arith.mulf %13, %20 : vector<8x128xf32>
    %22 = math.erf %21 : vector<8x128xf32>
    %cst_12 = arith.constant 1.000000e+00 : f32
    %23 = vector.broadcast %cst_12 : f32 to vector<8x128xf32>
    %24 = arith.addf %23, %22 : vector<8x128xf32>
    %25 = arith.mulf %19, %24 : vector<8x128xf32>
    %26 = arith.truncf %25 : vector<8x128xf32> to vector<8x128xbf16>
    %c0_13 = arith.constant 0 : index
    %c0_14 = arith.constant 0 : index
    %27 = vector.load %arg6[%c0_13, %c0_14] : memref<128x256xbf16, #tpu.memory_space<vmem>>, vector<128x256xbf16>
    %cst_15 = arith.constant dense<0.000000e+00> : vector<8x256xf32>
    %28 = tpu.matmul %15, %27, %cst_15 {dimension_numbers = #tpu.dot_dimension_numbers<[1], [0], [0], [1], [0, 0, 1, 1], [], []>} : vector<8x128xbf16>, vector<128x256xbf16>, vector<8x256xf32> -> vector<8x256xf32>
    %c0_16 = arith.constant 0 : index
    %c0_17 = arith.constant 0 : index
    %29 = vector.load %arg7[%c0_16, %c0_17] : memref<128x256xbf16, #tpu.memory_space<vmem>>, vector<128x256xbf16>
    %cst_18 = arith.constant dense<0.000000e+00> : vector<8x256xf32>
    %30 = tpu.matmul %17, %29, %cst_18 {dimension_numbers = #tpu.dot_dimension_numbers<[1], [0], [0], [1], [0, 0, 1, 1], [], []>} : vector<8x128xbf16>, vector<128x256xbf16>, vector<8x256xf32> -> vector<8x256xf32>
    %31 = arith.addf %28, %30 : vector<8x256xf32>
    %c0_19 = arith.constant 0 : index
    %c0_20 = arith.constant 0 : index
    %32 = vector.load %arg8[%c0_19, %c0_20] : memref<128x256xbf16, #tpu.memory_space<vmem>>, vector<128x256xbf16>
    %cst_21 = arith.constant dense<0.000000e+00> : vector<8x256xf32>
    %33 = tpu.matmul %26, %32, %cst_21 {dimension_numbers = #tpu.dot_dimension_numbers<[1], [0], [0], [1], [0, 0, 1, 1], [], []>} : vector<8x128xbf16>, vector<128x256xbf16>, vector<8x256xf32> -> vector<8x256xf32>
    %34 = arith.addf %31, %33 : vector<8x256xf32>
    %c0_22 = arith.constant 0 : index
    %c0_23 = arith.constant 0 : index
    %35 = vector.load %arg9[%c0_22, %c0_23] : memref<1x256xf32, #tpu.memory_space<vmem>>, vector<1x256xf32>
    %36 = vector.broadcast %35 : vector<1x256xf32> to vector<8x256xf32>
    %37 = arith.addf %34, %36 : vector<8x256xf32>
    %38 = vector.extract_strided_slice %37 {offsets = [0, 0], sizes = [8, 128], strides = [1, 1]} : vector<8x256xf32> to vector<8x128xf32>
    %39 = vector.extract_strided_slice %37 {offsets = [0, 128], sizes = [8, 128], strides = [1, 1]} : vector<8x256xf32> to vector<8x128xf32>
    %40 = math.cos %38 : vector<8x128xf32>
    %41 = arith.truncf %40 : vector<8x128xf32> to vector<8x128xbf16>
    %42 = math.sin %38 : vector<8x128xf32>
    %43 = arith.truncf %42 : vector<8x128xf32> to vector<8x128xbf16>
    %cst_24 = arith.constant 5.000000e-01 : f32
    %44 = vector.broadcast %cst_24 : f32 to vector<8x128xf32>
    %45 = arith.mulf %44, %39 : vector<8x128xf32>
    %cst_25 = arith.constant 0.707106769 : f32
    %46 = vector.broadcast %cst_25 : f32 to vector<8x128xf32>
    %47 = arith.mulf %39, %46 : vector<8x128xf32>
    %48 = math.erf %47 : vector<8x128xf32>
    %cst_26 = arith.constant 1.000000e+00 : f32
    %49 = vector.broadcast %cst_26 : f32 to vector<8x128xf32>
    %50 = arith.addf %49, %48 : vector<8x128xf32>
    %51 = arith.mulf %45, %50 : vector<8x128xf32>
    %52 = arith.truncf %51 : vector<8x128xf32> to vector<8x128xbf16>
    %c0_27 = arith.constant 0 : index
    %c0_28 = arith.constant 0 : index
    %53 = vector.load %arg10[%c0_27, %c0_28] : memref<128x128xbf16, #tpu.memory_space<vmem>>, vector<128x128xbf16>
    %cst_29 = arith.constant dense<0.000000e+00> : vector<8x128xf32>
    %54 = tpu.matmul %41, %53, %cst_29 {dimension_numbers = #tpu.dot_dimension_numbers<[1], [0], [0], [1], [0, 0, 1, 1], [], []>} : vector<8x128xbf16>, vector<128x128xbf16>, vector<8x128xf32> -> vector<8x128xf32>
    %c0_30 = arith.constant 0 : index
    %c0_31 = arith.constant 0 : index
    %55 = vector.load %arg11[%c0_30, %c0_31] : memref<128x128xbf16, #tpu.memory_space<vmem>>, vector<128x128xbf16>
    %cst_32 = arith.constant dense<0.000000e+00> : vector<8x128xf32>
    %56 = tpu.matmul %43, %55, %cst_32 {dimension_numbers = #tpu.dot_dimension_numbers<[1], [0], [0], [1], [0, 0, 1, 1], [], []>} : vector<8x128xbf16>, vector<128x128xbf16>, vector<8x128xf32> -> vector<8x128xf32>
    %57 = arith.addf %54, %56 : vector<8x128xf32>
    %c0_33 = arith.constant 0 : index
    %c0_34 = arith.constant 0 : index
    %58 = vector.load %arg12[%c0_33, %c0_34] : memref<128x128xbf16, #tpu.memory_space<vmem>>, vector<128x128xbf16>
    %cst_35 = arith.constant dense<0.000000e+00> : vector<8x128xf32>
    %59 = tpu.matmul %52, %58, %cst_35 {dimension_numbers = #tpu.dot_dimension_numbers<[1], [0], [0], [1], [0, 0, 1, 1], [], []>} : vector<8x128xbf16>, vector<128x128xbf16>, vector<8x128xf32> -> vector<8x128xf32>
    %60 = arith.addf %57, %59 : vector<8x128xf32>
    %c0_36 = arith.constant 0 : index
    %c0_37 = arith.constant 0 : index
    %61 = vector.load %arg13[%c0_36, %c0_37] : memref<1x128xf32, #tpu.memory_space<vmem>>, vector<1x128xf32>
    %62 = vector.broadcast %61 : vector<1x128xf32> to vector<8x128xf32>
    %63 = arith.addf %60, %62 : vector<8x128xf32>
    %c0_38 = arith.constant 0 : index
    %c0_39 = arith.constant 0 : index
    %64 = vector.load %arg14[%c0_38, %c0_39] : memref<8x128xf32, #tpu.memory_space<vmem>>, vector<8x128xf32>
    tpu.vector_store %arg14[%c0_38, %c0_39], %63 {strides = array<i32>} : memref<8x128xf32, #tpu.memory_space<vmem>>, vector<8x128xf32>,
    return
  }
  func.func @transform_0(%arg0: i32) -> (i32, i32) {
    %c0_i32 = arith.constant 0 : i32
    %c0_i32_0 = arith.constant 0 : i32
    return %arg0, %c0_i32 : i32, i32
  }
  func.func @transform_1(%arg0: i32) -> (i32, i32) {
    %c0_i32 = arith.constant 0 : i32
    %c0_i32_0 = arith.constant 0 : i32
    %c0_i32_1 = arith.constant 0 : i32
    return %c0_i32, %c0_i32_0 : i32, i32
  }
  func.func @transform_2(%arg0: i32) -> (i32, i32) {
    %c0_i32 = arith.constant 0 : i32
    %c0_i32_0 = arith.constant 0 : i32
    %c0_i32_1 = arith.constant 0 : i32
    return %c0_i32, %c0_i32_0 : i32, i32
  }
  func.func @transform_3(%arg0: i32) -> (i32, i32) {
    %c0_i32 = arith.constant 0 : i32
    %c0_i32_0 = arith.constant 0 : i32
    %c0_i32_1 = arith.constant 0 : i32
    return %c0_i32, %c0_i32_0 : i32, i32
  }
  func.func @transform_4(%arg0: i32) -> (i32, i32) {
    %c0_i32 = arith.constant 0 : i32
    %c0_i32_0 = arith.constant 0 : i32
    %c0_i32_1 = arith.constant 0 : i32
    return %c0_i32, %c0_i32_0 : i32, i32
  }
  func.func @transform_5(%arg0: i32) -> (i32, i32) {
    %c0_i32 = arith.constant 0 : i32
    %c0_i32_0 = arith.constant 0 : i32
    %c0_i32_1 = arith.constant 0 : i32
    return %c0_i32, %c0_i32_0 : i32, i32
  }
  func.func @transform_6(%arg0: i32) -> (i32, i32) {
    %c0_i32 = arith.constant 0 : i32
    %c0_i32_0 = arith.constant 0 : i32
    %c0_i32_1 = arith.constant 0 : i32
    return %c0_i32, %c0_i32_0 : i32, i32
  }
  func.func @transform_7(%arg0: i32) -> (i32, i32) {
    %c0_i32 = arith.constant 0 : i32
    %c0_i32_0 = arith.constant 0 : i32
    %c0_i32_1 = arith.constant 0 : i32
    return %c0_i32, %c0_i32_0 : i32, i32
  }
  func.func @transform_8(%arg0: i32) -> (i32, i32) {
    %c0_i32 = arith.constant 0 : i32
    %c0_i32_0 = arith.constant 0 : i32
    %c0_i32_1 = arith.constant 0 : i32
    return %c0_i32, %c0_i32_0 : i32, i32
  }
  func.func @transform_9(%arg0: i32) -> (i32, i32) {
    %c0_i32 = arith.constant 0 : i32
    %c0_i32_0 = arith.constant 0 : i32
    %c0_i32_1 = arith.constant 0 : i32
    return %c0_i32, %c0_i32_0 : i32, i32
  }
  func.func @transform_10(%arg0: i32) -> (i32, i32) {
    %c0_i32 = arith.constant 0 : i32
    %c0_i32_0 = arith.constant 0 : i32
    %c0_i32_1 = arith.constant 0 : i32
    return %c0_i32, %c0_i32_0 : i32, i32
  }
  func.func @transform_11(%arg0: i32) -> (i32, i32) {
    %c0_i32 = arith.constant 0 : i32
    %c0_i32_0 = arith.constant 0 : i32
    %c0_i32_1 = arith.constant 0 : i32
    return %c0_i32, %c0_i32_0 : i32, i32
  }
  func.func @transform_12(%arg0: i32) -> (i32, i32) {
    %c0_i32 = arith.constant 0 : i32
    %c0_i32_0 = arith.constant 0 : i32
    %c0_i32_1 = arith.constant 0 : i32
    return %c0_i32, %c0_i32_0 : i32, i32
  }
  func.func @transform_13(%arg0: i32) -> (i32, i32) {
    %c0_i32 = arith.constant 0 : i32
    %c0_i32_0 = arith.constant 0 : i32
    return %arg0, %c0_i32 : i32, i32
  }
}

module attributes {stable_mosaic.version = 11 : i64} {
  func.func @kernel(%arg0: i32, %arg1: memref<8x128xbf16, #tpu.memory_space<vmem>>, %arg2: memref<128x128xbf16, #tpu.memory_space<vmem>>, %arg3: memref<1x128xf32, #tpu.memory_space<vmem>>, %arg4: memref<128x256xbf16, #tpu.memory_space<vmem>>, %arg5: memref<1x256xf32, #tpu.memory_space<vmem>>, %arg6: memref<128x256xbf16, #tpu.memory_space<vmem>>, %arg7: memref<128x256xbf16, #tpu.memory_space<vmem>>, %arg8: memref<128x256xbf16, #tpu.memory_space<vmem>>, %arg9: memref<1x256xf32, #tpu.memory_space<vmem>>, %arg10: memref<128x128xbf16, #tpu.memory_space<vmem>>, %arg11: memref<128x128xbf16, #tpu.memory_space<vmem>>, %arg12: memref<128x128xbf16, #tpu.memory_space<vmem>>, %arg13: memref<1x128xf32, #tpu.memory_space<vmem>>, %arg14: memref<8x128xf32, #tpu.memory_space<vmem>>) attributes {dimension_semantics = [#tpu.dimension_semantics<parallel>], iteration_bounds = array<i64: 1>, scalar_prefetch = 0 : i64, scratch_operands = 0 : i64, tpu.core_type = #tpu.core_type<tc>, window_params = [{transform_indices = @transform_0, window_bounds = array<i64: 8, 128>}, {pipeline_mode = #tpu.pipeline_mode<synchronous>, transform_indices = @transform_1, window_bounds = array<i64: 128, 128>}, {pipeline_mode = #tpu.pipeline_mode<synchronous>, transform_indices = @transform_2, window_bounds = array<i64: 1, 128>}, {pipeline_mode = #tpu.pipeline_mode<synchronous>, transform_indices = @transform_3, window_bounds = array<i64: 128, 256>}, {pipeline_mode = #tpu.pipeline_mode<synchronous>, transform_indices = @transform_4, window_bounds = array<i64: 1, 256>}, {pipeline_mode = #tpu.pipeline_mode<synchronous>, transform_indices = @transform_5, window_bounds = array<i64: 128, 256>}, {pipeline_mode = #tpu.pipeline_mode<synchronous>, transform_indices = @transform_6, window_bounds = array<i64: 128, 256>}, {pipeline_mode = #tpu.pipeline_mode<synchronous>, transform_indices = @transform_7, window_bounds = array<i64: 128, 256>}, {pipeline_mode = #tpu.pipeline_mode<synchronous>, transform_indices = @transform_8, window_bounds = array<i64: 1, 256>}, {pipeline_mode = #tpu.pipeline_mode<synchronous>, transform_indices = @transform_9, window_bounds = array<i64: 128, 128>}, {pipeline_mode = #tpu.pipeline_mode<synchronous>, transform_indices = @transform_10, window_bounds = array<i64: 128, 128>}, {pipeline_mode = #tpu.pipeline_mode<synchronous>, transform_indices = @transform_11, window_bounds = array<i64: 128, 128>}, {pipeline_mode = #tpu.pipeline_mode<synchronous>, transform_indices = @transform_12, window_bounds = array<i64: 1, 128>}, {transform_indices = @transform_13, window_bounds = array<i64: 8, 128>}]} {
    %c0 = arith.constant 0 : index
    %c0_0 = arith.constant 0 : index
    %0 = vector.load %arg1[%c0, %c0_0] : memref<8x128xbf16, #tpu.memory_space<vmem>>, vector<8x128xbf16>
    %c0_1 = arith.constant 0 : index
    %c0_2 = arith.constant 0 : index
    %1 = vector.load %arg2[%c0_1, %c0_2] : memref<128x128xbf16, #tpu.memory_space<vmem>>, vector<128x128xbf16>
    %cst = arith.constant dense<0.000000e+00> : vector<8x128xf32>
    %2 = tpu.matmul %0, %1, %cst {dimension_numbers = #tpu.dot_dimension_numbers<[1], [0], [0], [1], [0, 0, 1, 1], [], []>} : vector<8x128xbf16>, vector<128x128xbf16>, vector<8x128xf32> -> vector<8x128xf32>
    %c0_3 = arith.constant 0 : index
    %c0_4 = arith.constant 0 : index
    %3 = vector.load %arg3[%c0_3, %c0_4] : memref<1x128xf32, #tpu.memory_space<vmem>>, vector<1x128xf32>
    %4 = vector.broadcast %3 : vector<1x128xf32> to vector<8x128xf32>
    %5 = arith.addf %2, %4 : vector<8x128xf32>
    %6 = arith.truncf %5 : vector<8x128xf32> to vector<8x128xbf16>
    %c0_5 = arith.constant 0 : index
    %c0_6 = arith.constant 0 : index
    %7 = vector.load %arg4[%c0_5, %c0_6] : memref<128x256xbf16, #tpu.memory_space<vmem>>, vector<128x256xbf16>
    %cst_7 = arith.constant dense<0.000000e+00> : vector<8x256xf32>
    %8 = tpu.matmul %6, %7, %cst_7 {dimension_numbers = #tpu.dot_dimension_numbers<[1], [0], [0], [1], [0, 0, 1, 1], [], []>} : vector<8x128xbf16>, vector<128x256xbf16>, vector<8x256xf32> -> vector<8x256xf32>
    %c0_8 = arith.constant 0 : index
    %c0_9 = arith.constant 0 : index
    %9 = vector.load %arg5[%c0_8, %c0_9] : memref<1x256xf32, #tpu.memory_space<vmem>>, vector<1x256xf32>
    %10 = vector.broadcast %9 : vector<1x256xf32> to vector<8x256xf32>
    %11 = arith.addf %8, %10 : vector<8x256xf32>
    %12 = vector.extract_strided_slice %11 {offsets = [0, 0], sizes = [8, 128], strides = [1, 1]} : vector<8x256xf32> to vector<8x128xf32>
    %13 = vector.extract_strided_slice %11 {offsets = [0, 128], sizes = [8, 128], strides = [1, 1]} : vector<8x256xf32> to vector<8x128xf32>
    %14 = math.cos %12 : vector<8x128xf32>
    %15 = arith.truncf %14 : vector<8x128xf32> to vector<8x128xbf16>
    %16 = math.sin %12 : vector<8x128xf32>
    %17 = arith.truncf %16 : vector<8x128xf32> to vector<8x128xbf16>
    %cst_10 = arith.constant 5.000000e-01 : f32
    %18 = vector.broadcast %cst_10 : f32 to vector<8x128xf32>
    %19 = arith.mulf %18, %13 : vector<8x128xf32>
    %cst_11 = arith.constant 0.707106769 : f32
    %20 = vector.broadcast %cst_11 : f32 to vector<8x128xf32>
    %21 = arith.mulf %13, %20 : vector<8x128xf32>
    %22 = math.erf %21 : vector<8x128xf32>
    %cst_12 = arith.constant 1.000000e+00 : f32
    %23 = vector.broadcast %cst_12 : f32 to vector<8x128xf32>
    %24 = arith.addf %23, %22 : vector<8x128xf32>
    %25 = arith.mulf %19, %24 : vector<8x128xf32>
    %26 = arith.truncf %25 : vector<8x128xf32> to vector<8x128xbf16>
    %c0_13 = arith.constant 0 : index
    %c0_14 = arith.constant 0 : index
    %27 = vector.load %arg6[%c0_13, %c0_14] : memref<128x256xbf16, #tpu.memory_space<vmem>>, vector<128x256xbf16>
    %cst_15 = arith.constant dense<0.000000e+00> : vector<8x256xf32>
    %28 = tpu.matmul %15, %27, %cst_15 {dimension_numbers = #tpu.dot_dimension_numbers<[1], [0], [0], [1], [0, 0, 1, 1], [], []>} : vector<8x128xbf16>, vector<128x256xbf16>, vector<8x256xf32> -> vector<8x256xf32>
    %c0_16 = arith.constant 0 : index
    %c0_17 = arith.constant 0 : index
    %29 = vector.load %arg7[%c0_16, %c0_17] : memref<128x256xbf16, #tpu.memory_space<vmem>>, vector<128x256xbf16>
    %cst_18 = arith.constant dense<0.000000e+00> : vector<8x256xf32>
    %30 = tpu.matmul %17, %29, %cst_18 {dimension_numbers = #tpu.dot_dimension_numbers<[1], [0], [0], [1], [0, 0, 1, 1], [], []>} : vector<8x128xbf16>, vector<128x256xbf16>, vector<8x256xf32> -> vector<8x256xf32>
    %31 = arith.addf %28, %30 : vector<8x256xf32>
    %c0_19 = arith.constant 0 : index
    %c0_20 = arith.constant 0 : index
    %32 = vector.load %arg8[%c0_19, %c0_20] : memref<128x256xbf16, #tpu.memory_space<vmem>>, vector<128x256xbf16>
    %cst_21 = arith.constant dense<0.000000e+00> : vector<8x256xf32>
    %33 = tpu.matmul %26, %32, %cst_21 {dimension_numbers = #tpu.dot_dimension_numbers<[1], [0], [0], [1], [0, 0, 1, 1], [], []>} : vector<8x128xbf16>, vector<128x256xbf16>, vector<8x256xf32> -> vector<8x256xf32>
    %34 = arith.addf %31, %33 : vector<8x256xf32>
    %c0_22 = arith.constant 0 : index
    %c0_23 = arith.constant 0 : index
    %35 = vector.load %arg9[%c0_22, %c0_23] : memref<1x256xf32, #tpu.memory_space<vmem>>, vector<1x256xf32>
    %36 = vector.broadcast %35 : vector<1x256xf32> to vector<8x256xf32>
    %37 = arith.addf %34, %36 : vector<8x256xf32>
    %38 = vector.extract_strided_slice %37 {offsets = [0, 0], sizes = [8, 128], strides = [1, 1]} : vector<8x256xf32> to vector<8x128xf32>
    %39 = vector.extract_strided_slice %37 {offsets = [0, 128], sizes = [8, 128], strides = [1, 1]} : vector<8x256xf32> to vector<8x128xf32>
    %40 = math.cos %38 : vector<8x128xf32>
    %41 = arith.truncf %40 : vector<8x128xf32> to vector<8x128xbf16>
    %42 = math.sin %38 : vector<8x128xf32>
    %43 = arith.truncf %42 : vector<8x128xf32> to vector<8x128xbf16>
    %cst_24 = arith.constant 5.000000e-01 : f32
    %44 = vector.broadcast %cst_24 : f32 to vector<8x128xf32>
    %45 = arith.mulf %44, %39 : vector<8x128xf32>
    %cst_25 = arith.constant 0.707106769 : f32
    %46 = vector.broadcast %cst_25 : f32 to vector<8x128xf32>
    %47 = arith.mulf %39, %46 : vector<8x128xf32>
    %48 = math.erf %47 : vector<8x128xf32>
    %cst_26 = arith.constant 1.000000e+00 : f32
    %49 = vector.broadcast %cst_26 : f32 to vector<8x128xf32>
    %50 = arith.addf %49, %48 : vector<8x128xf32>
    %51 = arith.mulf %45, %50 : vector<8x128xf32>
    %52 = arith.truncf %51 : vector<8x128xf32> to vector<8x128xbf16>
    %c0_27 = arith.constant 0 : index
    %c0_28 = arith.constant 0 : index
    %53 = vector.load %arg10[%c0_27, %c0_28] : memref<128x128xbf16, #tpu.memory_space<vmem>>, vector<128x128xbf16>
    %cst_29 = arith.constant dense<0.000000e+00> : vector<8x128xf32>
    %54 = tpu.matmul %41, %53, %cst_29 {dimension_numbers = #tpu.dot_dimension_numbers<[1], [0], [0], [1], [0, 0, 1, 1], [], []>} : vector<8x128xbf16>, vector<128x128xbf16>, vector<8x128xf32> -> vector<8x128xf32>
    %c0_30 = arith.constant 0 : index
    %c0_31 = arith.constant 0 : index
    %55 = vector.load %arg11[%c0_30, %c0_31] : memref<128x128xbf16, #tpu.memory_space<vmem>>, vector<128x128xbf16>
    %cst_32 = arith.constant dense<0.000000e+00> : vector<8x128xf32>
    %56 = tpu.matmul %43, %55, %cst_32 {dimension_numbers = #tpu.dot_dimension_numbers<[1], [0], [0], [1], [0, 0, 1, 1], [], []>} : vector<8x128xbf16>, vector<128x128xbf16>, vector<8x128xf32> -> vector<8x128xf32>
    %57 = arith.addf %54, %56 : vector<8x128xf32>
    %c0_33 = arith.constant 0 : index
    %c0_34 = arith.constant 0 : index
    %58 = vector.load %arg12[%c0_33, %c0_34] : memref<128x128xbf16, #tpu.memory_space<vmem>>, vector<128x128xbf16>
    %cst_35 = arith.constant dense<0.000000e+00> : vector<8x128xf32>
    %59 = tpu.matmul %52, %58, %cst_35 {dimension_numbers = #tpu.dot_dimension_numbers<[1], [0], [0], [1], [0, 0, 1, 1], [], []>} : vector<8x128xbf16>, vector<128x128xbf16>, vector<8x128xf32> -> vector<8x128xf32>
    %60 = arith.addf %57, %59 : vector<8x128xf32>
    %c0_36 = arith.constant 0 : index
    %c0_37 = arith.constant 0 : index
    %61 = vector.load %arg13[%c0_36, %c0_37] : memref<1x128xf32, #tpu.memory_space<vmem>>, vector<1x128xf32>
    %62 = vector.broadcast %61 : vector<1x128xf32> to vector<8x128xf32>
    %63 = arith.addf %60, %62 : vector<8x128xf32>
    %c0_38 = arith.constant 0 : index
    %c0_39 = arith.constant 0 : index
    %64 = vector.load %arg14[%c0_38, %c0_39] : memref<8x128xf32, #tpu.memory_space<vmem>>, vector<8x128xf32>
    tpu.vector_store %arg14[%c0_38, %c0_39], %63 {strides = array<i32>} : memref<8x128xf32, #tpu.memory_space<vmem>>, vector<8x128xf32>,
    return
  }
  func.func @transform_0(%arg0: i32) -> (i32, i32) {
    %c0_i32 = arith.constant 0 : i32
    %c0_i32_0 = arith.constant 0 : i32
    return %arg0, %c0_i32 : i32, i32
  }
  func.func @transform_1(%arg0: i32) -> (i32, i32) {
    %c0_i32 = arith.constant 0 : i32
    %c0_i32_0 = arith.constant 0 : i32
    %c0_i32_1 = arith.constant 0 : i32
    return %c0_i32, %c0_i32_0 : i32, i32
  }
  func.func @transform_2(%arg0: i32) -> (i32, i32) {
    %c0_i32 = arith.constant 0 : i32
    %c0_i32_0 = arith.constant 0 : i32
    %c0_i32_1 = arith.constant 0 : i32
    return %c0_i32, %c0_i32_0 : i32, i32
  }
  func.func @transform_3(%arg0: i32) -> (i32, i32) {
    %c0_i32 = arith.constant 0 : i32
    %c0_i32_0 = arith.constant 0 : i32
    %c0_i32_1 = arith.constant 0 : i32
    return %c0_i32, %c0_i32_0 : i32, i32
  }
  func.func @transform_4(%arg0: i32) -> (i32, i32) {
    %c0_i32 = arith.constant 0 : i32
    %c0_i32_0 = arith.constant 0 : i32
    %c0_i32_1 = arith.constant 0 : i32
    return %c0_i32, %c0_i32_0 : i32, i32
  }
  func.func @transform_5(%arg0: i32) -> (i32, i32) {
    %c0_i32 = arith.constant 0 : i32
    %c0_i32_0 = arith.constant 0 : i32
    %c0_i32_1 = arith.constant 0 : i32
    return %c0_i32, %c0_i32_0 : i32, i32
  }
  func.func @transform_6(%arg0: i32) -> (i32, i32) {
    %c0_i32 = arith.constant 0 : i32
    %c0_i32_0 = arith.constant 0 : i32
    %c0_i32_1 = arith.constant 0 : i32
    return %c0_i32, %c0_i32_0 : i32, i32
  }
  func.func @transform_7(%arg0: i32) -> (i32, i32) {
    %c0_i32 = arith.constant 0 : i32
    %c0_i32_0 = arith.constant 0 : i32
    %c0_i32_1 = arith.constant 0 : i32
    return %c0_i32, %c0_i32_0 : i32, i32
  }
  func.func @transform_8(%arg0: i32) -> (i32, i32) {
    %c0_i32 = arith.constant 0 : i32
    %c0_i32_0 = arith.constant 0 : i32
    %c0_i32_1 = arith.constant 0 : i32
    return %c0_i32, %c0_i32_0 : i32, i32
  }
  func.func @transform_9(%arg0: i32) -> (i32, i32) {
    %c0_i32 = arith.constant 0 : i32
    %c0_i32_0 = arith.constant 0 : i32
    %c0_i32_1 = arith.constant 0 : i32
    return %c0_i32, %c0_i32_0 : i32, i32
  }
  func.func @transform_10(%arg0: i32) -> (i32, i32) {
    %c0_i32 = arith.constant 0 : i32
    %c0_i32_0 = arith.constant 0 : i32
    %c0_i32_1 = arith.constant 0 : i32
    return %c0_i32, %c0_i32_0 : i32, i32
  }
  func.func @transform_11(%arg0: i32) -> (i32, i32) {
    %c0_i32 = arith.constant 0 : i32
    %c0_i32_0 = arith.constant 0 : i32
    %c0_i32_1 = arith.constant 0 : i32
    return %c0_i32, %c0_i32_0 : i32, i32
  }
  func.func @transform_12(%arg0: i32) -> (i32, i32) {
    %c0_i32 = arith.constant 0 : i32
    %c0_i32_0 = arith.constant 0 : i32
    %c0_i32_1 = arith.constant 0 : i32
    return %c0_i32, %c0_i32_0 : i32, i32
  }
  func.func @transform_13(%arg0: i32) -> (i32, i32) {
    %c0_i32 = arith.constant 0 : i32
    %c0_i32_0 = arith.constant 0 : i32
    return %arg0, %c0_i32 : i32, i32
  }
}

</mosaic_0001>

<llo_original>
// kernel: tpu_custom_call.1
$region0: #{tpu_custom_call.1}
  #allocation0 [shape = 'u32[]', space=smem, size = 0x4, offset = 0x4, fixed_abs, tag = 'smem constant byte address 0x4 - core index']
  #allocation1 [shape = 'u32[144,128]{1,0:T(1,128)}', space=vmem, size = 0x12000, scoped, tag = 'internal scratch']
  %s0 = inlined_call_operand.hbm [shape: bf16[8,128], index: 0, kind: input, shape index: {}]
  %s1 = inlined_call_operand.hbm [shape: bf16[128,128], index: 1, kind: input, shape index: {}]
  %s2 = inlined_call_operand.vmem [shape: f32[1,128], index: 2, kind: input, shape index: {}]
  %s3 = inlined_call_operand.hbm [shape: bf16[128,256], index: 3, kind: input, shape index: {}]
  %s4 = inlined_call_operand.vmem [shape: f32[1,256], index: 4, kind: input, shape index: {}]
  %s5 = inlined_call_operand.hbm [shape: bf16[128,256], index: 5, kind: input, shape index: {}]
  %s6 = inlined_call_operand.hbm [shape: bf16[128,256], index: 6, kind: input, shape index: {}]
  %s7 = inlined_call_operand.hbm [shape: bf16[128,256], index: 7, kind: input, shape index: {}]
  %s8 = inlined_call_operand.vmem [shape: f32[1,256], index: 8, kind: input, shape index: {}]
  %s9 = inlined_call_operand.hbm [shape: bf16[128,128], index: 9, kind: input, shape index: {}]
  %s10 = inlined_call_operand.hbm [shape: bf16[128,128], index: 10, kind: input, shape index: {}]
  %s11 = inlined_call_operand.hbm [shape: bf16[128,128], index: 11, kind: input, shape index: {}]
  %s12 = inlined_call_operand.vmem [shape: f32[1,128], index: 12, kind: input, shape index: {}]
  %s13 = inlined_call_operand.hbm [shape: f32[8,128], index: 13, kind: output, shape index: {}]
  %s14 = sld [smem:[#allocation0]]
  $region98: #{tpu_custom_call.1} parent=0
    _
  %s16 = ssub.s32 1, %s14
  %s17 = scalar_select 0, %s16, %s14
  $region1: #{tpu_custom_call.1} parent=0
    #allocation2 [shape = 'u8[2048]{0}', space=vmem, size = 0x800, scoped, tag = 'input window, operand 0, single buffered']
    #allocation3 [shape = 's32[1]{0}', space=sflag, size = 0x4, scoped, tag = 'scoped memory for tpu_custom_call.1']
    #allocation4 [shape = 's32[1]{0}', space=sflag, size = 0x4, scoped, tag = 'scoped memory for tpu_custom_call.1']
    #allocation5 [shape = 'u8[32768]{0}', space=vmem, size = 0x8000, scoped, tag = 'input window, operand 1, single buffered']
    #allocation6 [shape = 's32[1]{0}', space=sflag, size = 0x4, scoped, tag = 'scoped memory for tpu_custom_call.1']
    #allocation7 [shape = 'u8[65536]{0}', space=vmem, size = 0x10000, scoped, tag = 'input window, operand 3, single buffered']
    #allocation8 [shape = 'u8[65536]{0}', space=vmem, size = 0x10000, scoped, tag = 'input window, operand 5, single buffered']
    #allocation9 [shape = 's32[1]{0}', space=sflag, size = 0x4, scoped, tag = 'scoped memory for tpu_custom_call.1']
    #allocation10 [shape = 'u8[65536]{0}', space=vmem, size = 0x10000, scoped, tag = 'input window, operand 6, single buffered']
    #allocation11 [shape = 'u8[65536]{0}', space=vmem, size = 0x10000, scoped, tag = 'input window, operand 7, single buffered']
    #allocation12 [shape = 's32[1]{0}', space=sflag, size = 0x4, scoped, tag = 'scoped memory for tpu_custom_call.1']
    #allocation13 [shape = 'u8[32768]{0}', space=vmem, size = 0x8000, scoped, tag = 'input window, operand 9, single buffered']
    #allocation14 [shape = 'u8[32768]{0}', space=vmem, size = 0x8000, scoped, tag = 'input window, operand 10, single buffered']
    #allocation15 [shape = 's32[1]{0}', space=sflag, size = 0x4, scoped, tag = 'scoped memory for tpu_custom_call.1']
    #allocation16 [shape = 'u8[32768]{0}', space=vmem, size = 0x8000, scoped, tag = 'input window, operand 11, single buffered']
    #allocation17 [shape = 'u8[4096]{0}', space=vmem, size = 0x1000, scoped, tag = 'output window, operand 0, single buffered']
    %18 = vsyncpa [#allocation3], 0
    %19 = vsyncpa [#allocation6], 0
    %20 = vsyncpa [#allocation9], 0
    %21 = vsyncpa [#allocation12], 0
    %22 = vsyncpa [#allocation15], 0
    %23 = vsyncpa [#allocation4], 0
    // Predicated region
    $region2: #{tpu_custom_call.1} parent=1 // pred_check
      _
    $region3: #{tpu_custom_call.1} parent=1 // pred_check_branch
      %25 = sbr.rel (0) target = $region5
    $region4: #{tpu_custom_call.1} parent=1 // pred_region
      %s27 = ssub.s32 64, 64
      %28 = vsyncadd [#allocation3], %s27
      %s30 = sshll.u32 [#allocation2], 4
      %s31 = int_to_ptr.vmem [resolvable:$true] %s30
      %33 = dma.hbm_to_vmem [thread:$0]  %s0, 64, %s31, [#allocation3]
    $region5: #{tpu_custom_call.1} parent=1 // pred_fallthru
      _
    // Predicated region
    $region6: #{tpu_custom_call.1} parent=1 // pred_check
      _
    $region7: #{tpu_custom_call.1} parent=1 // pred_check_branch
      %35 = sbr.rel (0) target = $region9
    $region8: #{tpu_custom_call.1} parent=1 // pred_region
      %s37 = ssub.s32 1024, 1024
      %38 = vsyncadd [#allocation6], %s37
      %s39 = sshll.u32 [#allocation5], 4
      %s40 = int_to_ptr.vmem [resolvable:$true] %s39
      %45 = dma.hbm_to_vmem [thread:$0]  %s1, 1024, %s40, [#allocation6], 64, 64, 4
    $region9: #{tpu_custom_call.1} parent=1 // pred_fallthru
      _
    // Predicated region
    $region10: #{tpu_custom_call.1} parent=1 // pred_check
      _
    $region11: #{tpu_custom_call.1} parent=1 // pred_check_branch
      %47 = sbr.rel (0) target = $region13
    $region12: #{tpu_custom_call.1} parent=1 // pred_region
      _
    $region13: #{tpu_custom_call.1} parent=1 // pred_fallthru
      _
    // Predicated region
    $region14: #{tpu_custom_call.1} parent=1 // pred_check
      _
    $region15: #{tpu_custom_call.1} parent=1 // pred_check_branch
      %49 = sbr.rel (0) target = $region17
    $region16: #{tpu_custom_call.1} parent=1 // pred_region
      %s51 = ssub.s32 2048, 2048
      %52 = vsyncadd [#allocation6], %s51
      %s53 = sshll.u32 [#allocation7], 4
      %s54 = int_to_ptr.vmem [resolvable:$true] %s53
      %59 = dma.hbm_to_vmem [thread:$0]  %s3, 2048, %s54, [#allocation6], 128, 128, 8
    $region17: #{tpu_custom_call.1} parent=1 // pred_fallthru
      _
    // Predicated region
    $region18: #{tpu_custom_call.1} parent=1 // pred_check
      _
    $region19: #{tpu_custom_call.1} parent=1 // pred_check_branch
      %61 = sbr.rel (0) target = $region21
    $region20: #{tpu_custom_call.1} parent=1 // pred_region
      _
    $region21: #{tpu_custom_call.1} parent=1 // pred_fallthru
      _
    // Predicated region
    $region22: #{tpu_custom_call.1} parent=1 // pred_check
      _
    $region23: #{tpu_custom_call.1} parent=1 // pred_check_branch
      %63 = sbr.rel (0) target = $region25
    $region24: #{tpu_custom_call.1} parent=1 // pred_region
      %s65 = ssub.s32 2048, 2048
      %66 = vsyncadd [#allocation9], %s65
      %s67 = sshll.u32 [#allocation8], 4
      %s68 = int_to_ptr.vmem [resolvable:$true] %s67
      %73 = dma.hbm_to_vmem [thread:$0]  %s5, 2048, %s68, [#allocation9], 128, 128, 8
    $region25: #{tpu_custom_call.1} parent=1 // pred_fallthru
      _
    // Predicated region
    $region26: #{tpu_custom_call.1} parent=1 // pred_check
      _
    $region27: #{tpu_custom_call.1} parent=1 // pred_check_branch
      %75 = sbr.rel (0) target = $region29
    $region28: #{tpu_custom_call.1} parent=1 // pred_region
      %s77 = ssub.s32 2048, 2048
      %78 = vsyncadd [#allocation9], %s77
      %s79 = sshll.u32 [#allocation10], 4
      %s80 = int_to_ptr.vmem [resolvable:$true] %s79
      %85 = dma.hbm_to_vmem [thread:$0]  %s6, 2048, %s80, [#allocation9], 128, 128, 8
    $region29: #{tpu_custom_call.1} parent=1 // pred_fallthru
      _
    // Predicated region
    $region30: #{tpu_custom_call.1} parent=1 // pred_check
      _
    $region31: #{tpu_custom_call.1} parent=1 // pred_check_branch
      %87 = sbr.rel (0) target = $region33
    $region32: #{tpu_custom_call.1} parent=1 // pred_region
      %s89 = ssub.s32 2048, 2048
      %90 = vsyncadd [#allocation12], %s89
      %s91 = sshll.u32 [#allocation11], 4
      %s92 = int_to_ptr.vmem [resolvable:$true] %s91
      %97 = dma.hbm_to_vmem [thread:$0]  %s7, 2048, %s92, [#allocation12], 128, 128, 8
    $region33: #{tpu_custom_call.1} parent=1 // pred_fallthru
      _
    // Predicated region
    $region34: #{tpu_custom_call.1} parent=1 // pred_check
      _
    $region35: #{tpu_custom_call.1} parent=1 // pred_check_branch
      %99 = sbr.rel (0) target = $region37
    $region36: #{tpu_custom_call.1} parent=1 // pred_region
      _
    $region37: #{tpu_custom_call.1} parent=1 // pred_fallthru
      _
    // Predicated region
    $region38: #{tpu_custom_call.1} parent=1 // pred_check
      _
    $region39: #{tpu_custom_call.1} parent=1 // pred_check_branch
      %101 = sbr.rel (0) target = $region41
    $region40: #{tpu_custom_call.1} parent=1 // pred_region
      %s103 = ssub.s32 1024, 1024
      %104 = vsyncadd [#allocation12], %s103
      %s105 = sshll.u32 [#allocation13], 4
      %s106 = int_to_ptr.vmem [resolvable:$true] %s105
      %111 = dma.hbm_to_vmem [thread:$0]  %s9, 1024, %s106, [#allocation12], 64, 64, 4
    $region41: #{tpu_custom_call.1} parent=1 // pred_fallthru
      _
    // Predicated region
    $region42: #{tpu_custom_call.1} parent=1 // pred_check
      _
    $region43: #{tpu_custom_call.1} parent=1 // pred_check_branch
      %113 = sbr.rel (0) target = $region45
    $region44: #{tpu_custom_call.1} parent=1 // pred_region
      %s115 = ssub.s32 1024, 1024
      %116 = vsyncadd [#allocation15], %s115
      %s117 = sshll.u32 [#allocation14], 4
      %s118 = int_to_ptr.vmem [resolvable:$true] %s117
      %123 = dma.hbm_to_vmem [thread:$0]  %s10, 1024, %s118, [#allocation15], 64, 64, 4
    $region45: #{tpu_custom_call.1} parent=1 // pred_fallthru
      _
    // Predicated region
    $region46: #{tpu_custom_call.1} parent=1 // pred_check
      _
    $region47: #{tpu_custom_call.1} parent=1 // pred_check_branch
      %125 = sbr.rel (0) target = $region49
    $region48: #{tpu_custom_call.1} parent=1 // pred_region
      %s127 = ssub.s32 1024, 1024
      %128 = vsyncadd [#allocation15], %s127
      %s129 = sshll.u32 [#allocation16], 4
      %s130 = int_to_ptr.vmem [resolvable:$true] %s129
      %135 = dma.hbm_to_vmem [thread:$0]  %s11, 1024, %s130, [#allocation15], 64, 64, 4
    $region49: #{tpu_custom_call.1} parent=1 // pred_fallthru
      _
    // Predicated region
    $region50: #{tpu_custom_call.1} parent=1 // pred_check
      _
    $region51: #{tpu_custom_call.1} parent=1 // pred_check_branch
      %137 = sbr.rel (0) target = $region53
    $region52: #{tpu_custom_call.1} parent=1 // pred_region
      _
    $region53: #{tpu_custom_call.1} parent=1 // pred_fallthru
      _
    // Predicated region
    $region54: #{tpu_custom_call.1} parent=1 // pred_check
      _
    $region55: #{tpu_custom_call.1} parent=1 // pred_check_branch
      %139 = sbr.rel (0) target = $region57
    $region56: #{tpu_custom_call.1} parent=1 // pred_region
      %140 = dma.done [#allocation3], 64
    $region57: #{tpu_custom_call.1} parent=1 // pred_fallthru
      _
    // Predicated region
    $region58: #{tpu_custom_call.1} parent=1 // pred_check
      _
    $region59: #{tpu_custom_call.1} parent=1 // pred_check_branch
      %142 = sbr.rel (0) target = $region61
    $region60: #{tpu_custom_call.1} parent=1 // pred_region
      %143 = dma.done [#allocation6], 1024
    $region61: #{tpu_custom_call.1} parent=1 // pred_fallthru
      _
    // Predicated region
    $region62: #{tpu_custom_call.1} parent=1 // pred_check
      _
    $region63: #{tpu_custom_call.1} parent=1 // pred_check_branch
      %145 = sbr.rel (0) target = $region65
    $region64: #{tpu_custom_call.1} parent=1 // pred_region
      %146 = dma.done [#allocation6], 2048
    $region65: #{tpu_custom_call.1} parent=1 // pred_fallthru
      _
    // Predicated region
    $region66: #{tpu_custom_call.1} parent=1 // pred_check
      _
    $region67: #{tpu_custom_call.1} parent=1 // pred_check_branch
      %148 = sbr.rel (0) target = $region69
    $region68: #{tpu_custom_call.1} parent=1 // pred_region
      %149 = dma.done [#allocation9], 2048
    $region69: #{tpu_custom_call.1} parent=1 // pred_fallthru
      _
    // Predicated region
    $region70: #{tpu_custom_call.1} parent=1 // pred_check
      _
    $region71: #{tpu_custom_call.1} parent=1 // pred_check_branch
      %151 = sbr.rel (0) target = $region73
    $region72: #{tpu_custom_call.1} parent=1 // pred_region
      %152 = dma.done [#allocation9], 2048
    $region73: #{tpu_custom_call.1} parent=1 // pred_fallthru
      _
    // Predicated region
    $region74: #{tpu_custom_call.1} parent=1 // pred_check
      _
    $region75: #{tpu_custom_call.1} parent=1 // pred_check_branch
      %154 = sbr.rel (0) target = $region77
    $region76: #{tpu_custom_call.1} parent=1 // pred_region
      %155 = dma.done [#allocation12], 2048
    $region77: #{tpu_custom_call.1} parent=1 // pred_fallthru
      _
    // Predicated region
    $region78: #{tpu_custom_call.1} parent=1 // pred_check
      _
    $region79: #{tpu_custom_call.1} parent=1 // pred_check_branch
      %157 = sbr.rel (0) target = $region81
    $region80: #{tpu_custom_call.1} parent=1 // pred_region
      %158 = dma.done [#allocation12], 1024
    $region81: #{tpu_custom_call.1} parent=1 // pred_fallthru
      _
    // Predicated region
    $region82: #{tpu_custom_call.1} parent=1 // pred_check
      _
    $region83: #{tpu_custom_call.1} parent=1 // pred_check_branch
      %160 = sbr.rel (0) target = $region85
    $region84: #{tpu_custom_call.1} parent=1 // pred_region
      %161 = dma.done [#allocation15], 1024
    $region85: #{tpu_custom_call.1} parent=1 // pred_fallthru
      _
    // Predicated region
    $region86: #{tpu_custom_call.1} parent=1 // pred_check
      _
    $region87: #{tpu_custom_call.1} parent=1 // pred_check_branch
      %163 = sbr.rel (0) target = $region89
    $region88: #{tpu_custom_call.1} parent=1 // pred_region
      %164 = dma.done [#allocation15], 1024
    $region89: #{tpu_custom_call.1} parent=1 // pred_fallthru
      _
    %v166 = vld [vmem:[#allocation2] sm:$0xf]
    %v167 = vld [vmem:[#allocation5] sm:$0xf]
    %v168 = vld [vmem:[#allocation5 + $0x4] sm:$0xf]
    %v169 = vld [vmem:[#allocation5 + $0x8] sm:$0xf]
    %v170 = vld [vmem:[#allocation5 + $0xc] sm:$0xf]
    %v171 = vld [vmem:[#allocation5 + $0x10] sm:$0xf]
    %v172 = vld [vmem:[#allocation5 + $0x14] sm:$0xf]
    %v173 = vld [vmem:[#allocation5 + $0x18] sm:$0xf]
    %v174 = vld [vmem:[#allocation5 + $0x1c] sm:$0xf]
    %v175 = vld [vmem:[#allocation5 + $0x20] sm:$0xf]
    %v176 = vld [vmem:[#allocation5 + $0x24] sm:$0xf]
    %v177 = vld [vmem:[#allocation5 + $0x28] sm:$0xf]
    %v178 = vld [vmem:[#allocation5 + $0x2c] sm:$0xf]
    %v179 = vld [vmem:[#allocation5 + $0x30] sm:$0xf]
    %v180 = vld [vmem:[#allocation5 + $0x34] sm:$0xf]
    %v181 = vld [vmem:[#allocation5 + $0x38] sm:$0xf]
    %v182 = vld [vmem:[#allocation5 + $0x3c] sm:$0xf]
    %v183 = vld [vmem:[%s2] sm:$0x1]
    %v185 = vlaneseq
    %v186 = vshrl.u32 %v185, 7
    %v187 = vsub.s32 0, %v186
    %v188 = vrot.slane %v183, %v187
    %v206 = vunpack.c.l.b16 %v167
    %v207 = vunpack.c.l.b16 %v168
    %v208 = vunpack.c.l.b16 %v169
    %v209 = vunpack.c.l.b16 %v170
    %v210 = vunpack.c.l.b16 %v171
    %v211 = vunpack.c.l.b16 %v172
    %v212 = vunpack.c.l.b16 %v173
    %v213 = vunpack.c.l.b16 %v174
    %v214 = vunpack.c.l.b16 %v175
    %v215 = vunpack.c.l.b16 %v176
    %v216 = vunpack.c.l.b16 %v177
    %v217 = vunpack.c.l.b16 %v178
    %v218 = vunpack.c.l.b16 %v179
    %v219 = vunpack.c.l.b16 %v180
    %v220 = vunpack.c.l.b16 %v181
    %v221 = vunpack.c.l.b16 %v182
    %v222 = vpack.c.b16 %v207, %v206
    %v223 = vpack.c.b16 %v209, %v208
    %v224 = vpack.c.b16 %v211, %v210
    %v225 = vpack.c.b16 %v213, %v212
    %v226 = vpack.c.b16 %v215, %v214
    %v227 = vpack.c.b16 %v217, %v216
    %v228 = vpack.c.b16 %v219, %v218
    %v229 = vpack.c.b16 %v221, %v220
    %238 = vmatprep.subr.bf16.mxu0 0
    %239 = vmatpush1.bf16.msra.mxu0 %v229
    %240 = vmatprep.subr.bf16.mxu0 0
    %241 = vmatpush1.bf16.msra.mxu0 %v228
    %242 = vmatprep.subr.bf16.mxu0 0
    %243 = vmatpush1.bf16.msra.mxu0 %v227
    %244 = vmatprep.subr.bf16.mxu0 0
    %245 = vmatpush1.bf16.msra.mxu0 %v226
    %246 = vmatprep.subr.bf16.mxu0 0
    %247 = vmatpush1.bf16.msra.mxu0 %v225
    %248 = vmatprep.subr.bf16.mxu0 0
    %249 = vmatpush1.bf16.msra.mxu0 %v224
    %250 = vmatprep.subr.bf16.mxu0 0
    %251 = vmatpush1.bf16.msra.mxu0 %v223
    %252 = vmatprep.subr.bf16.mxu0 0
    %253 = vmatpush1.bf16.msra.mxu0 %v222
    %254 = vmatprep.subr.bf16.mxu0 0
    %255 = vmatpush2.bf16.msra.mxu0 0
    %256 = vmatprep.subr.bf16.mxu0 0
    %257 = vmatpush2.bf16.msra.mxu0 0
    %258 = vmatprep.subr.bf16.mxu0 0
    %259 = vmatpush2.bf16.msra.mxu0 0
    %260 = vmatprep.subr.bf16.mxu0 0
    %261 = vmatpush2.bf16.msra.mxu0 0
    %262 = vmatprep.subr.bf16.mxu0 0
    %263 = vmatpush2.bf16.msra.mxu0 0
    %264 = vmatprep.subr.bf16.mxu0 0
    %265 = vmatpush2.bf16.msra.mxu0 0
    %266 = vmatprep.subr.bf16.mxu0 0
    %267 = vmatpush2.bf16.msra.mxu0 0
    %268 = vmatprep.subr.bf16.mxu0 0
    %269 = vmatpush2.bf16.msra.mxu0 0
    %270 = vmatprep.mubr.bf16.mxu0 0
    %271 = vmatmul.mubr.bf16.gmra.mxu0 %v166
    %v272 = vpop.f32.mrf.mxu0
    %v273 = vadd.f32 %v188, %v272
    %v274 = vpop.f32.mrf.mxu0
    %v275 = vpop.f32.mrf.mxu0
    %v276 = vpop.f32.mrf.mxu0
    %277 = vdwg.mxu0
    %v278 = vpack.c.bf16 %v273, %v273
    %v279 = vld [vmem:[#allocation7] sm:$0xff]
    %v280 = vld [vmem:[#allocation7 + $0x8] sm:$0xff]
    %v281 = vld [vmem:[#allocation7 + $0x10] sm:$0xff]
    %v282 = vld [vmem:[#allocation7 + $0x18] sm:$0xff]
    %v283 = vld [vmem:[#allocation7 + $0x20] sm:$0xff]
    %v284 = vld [vmem:[#allocation7 + $0x28] sm:$0xff]
    %v285 = vld [vmem:[#allocation7 + $0x30] sm:$0xff]
    %v286 = vld [vmem:[#allocation7 + $0x38] sm:$0xff]
    %v287 = vld [vmem:[#allocation7 + $0x40] sm:$0xff]
    %v288 = vld [vmem:[#allocation7 + $0x48] sm:$0xff]
    %v289 = vld [vmem:[#allocation7 + $0x50] sm:$0xff]
    %v290 = vld [vmem:[#allocation7 + $0x58] sm:$0xff]
    %v291 = vld [vmem:[#allocation7 + $0x60] sm:$0xff]
    %v292 = vld [vmem:[#allocation7 + $0x68] sm:$0xff]
    %v293 = vld [vmem:[#allocation7 + $0x70] sm:$0xff]
    %v294 = vld [vmem:[#allocation7 + $0x78] sm:$0xff]
    %v295 = vld [vmem:[%s4] sm:$0x3]
    %v297 = vlaneseq
    %v298 = vshrl.u32 %v297, 7
    %v299 = vsub.s32 0, %v298
    %v300 = vrot.slane %v295, %v299
    %v301 = vlaneseq
    %v302 = vshrl.u32 %v301, 7
    %v303 = vsub.s32 1, %v302
    %v304 = vrot.slane %v295, %v303
    %v323 = vunpack.c.l.b16 %v279
    %v324 = vunpack.c.h.b16 %v279
    %v325 = vunpack.c.l.b16 %v280
    %v326 = vunpack.c.h.b16 %v280
    %v327 = vunpack.c.l.b16 %v281
    %v328 = vunpack.c.h.b16 %v281
    %v329 = vunpack.c.l.b16 %v282
    %v330 = vunpack.c.h.b16 %v282
    %v331 = vunpack.c.l.b16 %v283
    %v332 = vunpack.c.h.b16 %v283
    %v333 = vunpack.c.l.b16 %v284
    %v334 = vunpack.c.h.b16 %v284
    %v335 = vunpack.c.l.b16 %v285
    %v336 = vunpack.c.h.b16 %v285
    %v337 = vunpack.c.l.b16 %v286
    %v338 = vunpack.c.h.b16 %v286
    %v339 = vunpack.c.l.b16 %v287
    %v340 = vunpack.c.h.b16 %v287
    %v341 = vunpack.c.l.b16 %v288
    %v342 = vunpack.c.h.b16 %v288
    %v343 = vunpack.c.l.b16 %v289
    %v344 = vunpack.c.h.b16 %v289
    %v345 = vunpack.c.l.b16 %v290
    %v346 = vunpack.c.h.b16 %v290
    %v347 = vunpack.c.l.b16 %v291
    %v348 = vunpack.c.h.b16 %v291
    %v349 = vunpack.c.l.b16 %v292
    %v350 = vunpack.c.h.b16 %v292
    %v351 = vunpack.c.l.b16 %v293
    %v352 = vunpack.c.h.b16 %v293
    %v353 = vunpack.c.l.b16 %v294
    %v354 = vunpack.c.h.b16 %v294
    %v355 = vpack.c.b16 %v325, %v323
    %v356 = vpack.c.b16 %v326, %v324
    %v357 = vpack.c.b16 %v329, %v327
    %v358 = vpack.c.b16 %v330, %v328
    %v359 = vpack.c.b16 %v333, %v331
    %v360 = vpack.c.b16 %v334, %v332
    %v361 = vpack.c.b16 %v337, %v335
    %v362 = vpack.c.b16 %v338, %v336
    %v363 = vpack.c.b16 %v341, %v339
    %v364 = vpack.c.b16 %v342, %v340
    %v365 = vpack.c.b16 %v345, %v343
    %v366 = vpack.c.b16 %v346, %v344
    %v367 = vpack.c.b16 %v349, %v347
    %v368 = vpack.c.b16 %v350, %v348
    %v369 = vpack.c.b16 %v353, %v351
    %v370 = vpack.c.b16 %v354, %v352
    %387 = vmatprep.subr.bf16.mxu0 %v370
    %388 = vmatpush1.bf16.msra.mxu0 %v369
    %389 = vmatprep.subr.bf16.mxu0 %v368
    %390 = vmatpush1.bf16.msra.mxu0 %v367
    %391 = vmatprep.subr.bf16.mxu0 %v366
    %392 = vmatpush1.bf16.msra.mxu0 %v365
    %393 = vmatprep.subr.bf16.mxu0 %v364
    %394 = vmatpush1.bf16.msra.mxu0 %v363
    %395 = vmatprep.subr.bf16.mxu0 %v362
    %396 = vmatpush1.bf16.msra.mxu0 %v361
    %397 = vmatprep.subr.bf16.mxu0 %v360
    %398 = vmatpush1.bf16.msra.mxu0 %v359
    %399 = vmatprep.subr.bf16.mxu0 %v358
    %400 = vmatpush1.bf16.msra.mxu0 %v357
    %401 = vmatprep.subr.bf16.mxu0 %v356
    %402 = vmatpush1.bf16.msra.mxu0 %v355
    %403 = vmatprep.subr.bf16.mxu0 0
    %404 = vmatpush2.bf16.msra.mxu0 0
    %405 = vmatprep.subr.bf16.mxu0 0
    %406 = vmatpush2.bf16.msra.mxu0 0
    %407 = vmatprep.subr.bf16.mxu0 0
    %408 = vmatpush2.bf16.msra.mxu0 0
    %409 = vmatprep.subr.bf16.mxu0 0
    %410 = vmatpush2.bf16.msra.mxu0 0
    %411 = vmatprep.subr.bf16.mxu0 0
    %412 = vmatpush2.bf16.msra.mxu0 0
    %413 = vmatprep.subr.bf16.mxu0 0
    %414 = vmatpush2.bf16.msra.mxu0 0
    %415 = vmatprep.subr.bf16.mxu0 0
    %416 = vmatpush2.bf16.msra.mxu0 0
    %417 = vmatprep.subr.bf16.mxu0 0
    %418 = vmatpush2.bf16.msra.mxu0 0
    %419 = vmatprep.mubr.bf16.mxu0 0
    %420 = vmatmul.mubr.bf16.gmra.mxu0 %v278
    %v421 = vpop.f32.mrf.mxu0
    %v422 = vadd.f32 %v300, %v421
    %v423 = vpop.f32.mrf.mxu0
    %v424 = vadd.f32 %v304, %v423
    %v425 = vpop.f32.mrf.mxu0
    %v426 = vpop.f32.mrf.mxu0
    %427 = vdwg.mxu0
    %v428 = vand.u32 2147483647, %v422
    %vm429 = vcmp.le.f32.partialorder %v428, 0.7853982
    %vm430 = vcmp.lt.s32.totalorder %v422, 0
    %v431 = vand.u32 %v422, 2139095040
    %v432 = vshrl.u32 %v431, 23
    %v433 = vsub.s32 %v432, 127
    %v434 = vand.u32 2147483647, %v422
    %v435 = vand.u32 %v434, 8388607
    %v436 = vor.u32 %v435, 8388608
    %v437 = vsub.s32 0, %v436
    %v438 = vadd.s32 %v433, 1
    %vm439 = vcmp.gt.s32.totalorder %v438, 0
    %v440 = vsel %vm439, %v438, 0
    %v441 = vshrl.u32 %v440, 5
    %v442 = vand.u32 %v440, 31
    %v443 = vsub.s32 32, %v442
    %v444 = vshrl.u32 683565275, %v443
    %v445 = vshll.u32 683565275, %v442
    %v446 = vshrl.u32 2475754826, %v443
    %v447 = vor.u32 %v445, %v446
    %v448 = vshll.u32 2475754826, %v442
    %v449 = vshrl.u32 2131351028, %v443
    %v450 = vor.u32 %v448, %v449
    %v451 = vshll.u32 2131351028, %v442
    %v452 = vshrl.u32 2102212464, %v443
    %v453 = vor.u32 %v451, %v452
    %v454 = vshll.u32 2102212464, %v442
    %v455 = vshrl.u32 920167782, %v443
    %v456 = vor.u32 %v454, %v455
    %v457 = vshll.u32 920167782, %v442
    %v458 = vshrl.u32 1326507024, %v443
    %v459 = vor.u32 %v457, %v458
    %vm460 = vcmp.lt.s32.totalorder %v441, 1
    %vm461 = vcmp.lt.s32.totalorder %v441, 2
    %vm462 = vcmp.lt.s32.totalorder %v441, 3
    %vm463 = vcmp.lt.s32.totalorder %v441, 4
    %v464 = vsel %vm460, %v444, %v447
    %v465 = vsel %vm463, %v453, 2102212464
    %v466 = vsel %vm462, %v450, %v465
    %v467 = vsel %vm461, %v464, %v466
    %v468 = vsel %vm460, %v447, %v450
    %v469 = vsel %vm463, %v456, 920167782
    %v470 = vsel %vm462, %v453, %v469
    %v471 = vsel %vm461, %v468, %v470
    %v472 = vsel %vm460, %v450, %v453
    %v473 = vsel %vm463, %v459, 1326507024
    %v474 = vsel %vm462, %v456, %v473
    %v475 = vsel %vm461, %v472, %v474
    %v476 = vshll.u32 %v436, 8
    %v477 = vmul.u32.u64.compose %v476, %v475
    %v478 = vextract.low.u32 %v477
    %v479 = vextract.high.u32 %v477
    %v480 = vmul.u32.u64.compose %v476, %v471
    %v481 = vextract.low.u32 %v480
    %v482 = vextract.high.u32 %v480
    %v483 = vmul.u32 %v476, %v467
    %v484 = vadd.s32 %v479, %v481
    %vm485 = vc.u32 %v479, %v481
    %v486 = vadd.s32 %v482, 1
    %v487 = vsel %vm485, %v486, %v482
    %v488 = vadd.s32 %v483, %v487
    %v489 = vadd.s32 %v488, 536870912
    %v490 = vshrl.u32 %v489, 30
    %v491 = vshll.u32 %v490, 30
    %v492 = vsub.s32 %v488, %v491
    %vm493 = vcmp.lt.s32.totalorder %v492, 0
    %v494 = vsub.s32 0, %v492
    %v495 = vsel %vm493, %v494, %v492
    %v496 = vclz %v495
    %v497 = vsub.s32 %v496, 2
    %vm498 = vcmp.gt.s32.totalorder 0, %v497
    %v499 = vsel %vm498, 0, %v497
    %v500 = vsub.s32 32, %v499
    %v501 = vshll.u32 %v492, %v499
    %v502 = vshrl.u32 %v484, %v500
    %v503 = vor.u32 %v501, %v502
    %v504 = vsub.s32 4294967266, %v499
    %v505 = vadd.s32 %v504, 127
    %v506 = vshll.u32 %v505, 23
    %v507 = vor.u32 4788187, %v506
    %v508 = vand.u32 2147483647, %v507
    %v510 = vcvt.s32.f32 %v503
    %v511 = vmul.f32 %v510, %v508
    %v512 = vxor.u32 %v511, 2147483648
    %v513 = vsel %vm430, %v512, %v511
    %v514 = vsub.s32 4, %v490
    %v515 = vsel %vm430, %v514, %v490
    %v516 = vsel %vm429, %v422, %v513
    %v517 = vsel %vm429, 0, %v515
    %v518 = vcosq.f32.pop %v516
    %v519 = vsinq.f32.pop %v516
    %vm520 = vweird.f32 %v422
    %v521 = vand.u32 %v517, 3
    %vm522 = vcmp.lt.s32.totalorder %v521, 2
    %vm523 = vcmp.eq.s32.totalorder %v521, 0
    %v524 = vxor.u32 %v519, 2147483648
    %v525 = vsel %vm523, %v518, %v524
    %vm526 = vcmp.eq.s32.totalorder %v521, 2
    %v527 = vxor.u32 %v518, 2147483648
    %v528 = vsel %vm526, %v527, %v519
    %v529 = vsel %vm522, %v525, %v528
    %v530 = vsel %vm520, nan, %v529
    %v531 = vpack.c.bf16 %v530, %v530
    %v532 = vand.u32 2147483647, %v422
    %vm533 = vcmp.le.f32.partialorder %v532, 0.7853982
    %vm534 = vcmp.lt.s32.totalorder %v422, 0
    %v535 = vand.u32 %v422, 2139095040
    %v536 = vshrl.u32 %v535, 23
    %v537 = vsub.s32 %v536, 127
    %v538 = vand.u32 2147483647, %v422
    %v539 = vand.u32 %v538, 8388607
    %v540 = vor.u32 %v539, 8388608
    %v541 = vsub.s32 0, %v540
    %v542 = vadd.s32 %v537, 1
    %vm543 = vcmp.gt.s32.totalorder %v542, 0
    %v544 = vsel %vm543, %v542, 0
    %v545 = vshrl.u32 %v544, 5
    %v546 = vand.u32 %v544, 31
    %v547 = vsub.s32 32, %v546
    %v548 = vshrl.u32 683565275, %v547
    %v549 = vshll.u32 683565275, %v546
    %v550 = vshrl.u32 2475754826, %v547
    %v551 = vor.u32 %v549, %v550
    %v552 = vshll.u32 2475754826, %v546
    %v553 = vshrl.u32 2131351028, %v547
    %v554 = vor.u32 %v552, %v553
    %v555 = vshll.u32 2131351028, %v546
    %v556 = vshrl.u32 2102212464, %v547
    %v557 = vor.u32 %v555, %v556
    %v558 = vshll.u32 2102212464, %v546
    %v559 = vshrl.u32 920167782, %v547
    %v560 = vor.u32 %v558, %v559
    %v561 = vshll.u32 920167782, %v546
    %v562 = vshrl.u32 1326507024, %v547
    %v563 = vor.u32 %v561, %v562
    %vm564 = vcmp.lt.s32.totalorder %v545, 1
    %vm565 = vcmp.lt.s32.totalorder %v545, 2
    %vm566 = vcmp.lt.s32.totalorder %v545, 3
    %vm567 = vcmp.lt.s32.totalorder %v545, 4
    %v568 = vsel %vm564, %v548, %v551
    %v569 = vsel %vm567, %v557, 2102212464
    %v570 = vsel %vm566, %v554, %v569
    %v571 = vsel %vm565, %v568, %v570
    %v572 = vsel %vm564, %v551, %v554
    %v573 = vsel %vm567, %v560, 920167782
    %v574 = vsel %vm566, %v557, %v573
    %v575 = vsel %vm565, %v572, %v574
    %v576 = vsel %vm564, %v554, %v557
    %v577 = vsel %vm567, %v563, 1326507024
    %v578 = vsel %vm566, %v560, %v577
    %v579 = vsel %vm565, %v576, %v578
    %v580 = vshll.u32 %v540, 8
    %v581 = vmul.u32.u64.compose %v580, %v579
    %v582 = vextract.low.u32 %v581
    %v583 = vextract.high.u32 %v581
    %v584 = vmul.u32.u64.compose %v580, %v575
    %v585 = vextract.low.u32 %v584
    %v586 = vextract.high.u32 %v584
    %v587 = vmul.u32 %v580, %v571
    %v588 = vadd.s32 %v583, %v585
    %vm589 = vc.u32 %v583, %v585
    %v590 = vadd.s32 %v586, 1
    %v591 = vsel %vm589, %v590, %v586
    %v592 = vadd.s32 %v587, %v591
    %v593 = vadd.s32 %v592, 536870912
    %v594 = vshrl.u32 %v593, 30
    %v595 = vshll.u32 %v594, 30
    %v596 = vsub.s32 %v592, %v595
    %vm597 = vcmp.lt.s32.totalorder %v596, 0
    %v598 = vsub.s32 0, %v596
    %v599 = vsel %vm597, %v598, %v596
    %v600 = vclz %v599
    %v601 = vsub.s32 %v600, 2
    %vm602 = vcmp.gt.s32.totalorder 0, %v601
    %v603 = vsel %vm602, 0, %v601
    %v604 = vsub.s32 32, %v603
    %v605 = vshll.u32 %v596, %v603
    %v606 = vshrl.u32 %v588, %v604
    %v607 = vor.u32 %v605, %v606
    %v608 = vsub.s32 4294967266, %v603
    %v609 = vadd.s32 %v608, 127
    %v610 = vshll.u32 %v609, 23
    %v611 = vor.u32 4788187, %v610
    %v612 = vand.u32 2147483647, %v611
    %v614 = vcvt.s32.f32 %v607
    %v615 = vmul.f32 %v614, %v612
    %v616 = vxor.u32 %v615, 2147483648
    %v617 = vsel %vm534, %v616, %v615
    %v618 = vsub.s32 4, %v594
    %v619 = vsel %vm534, %v618, %v594
    %v620 = vsel %vm533, %v422, %v617
    %v621 = vsel %vm533, 0, %v619
    %v622 = vcosq.f32.pop %v620
    %v623 = vsinq.f32.pop %v620
    %vm624 = vweird.f32 %v422
    %v625 = vadd.s32 %v621, 3
    %v626 = vand.u32 %v625, 3
    %vm627 = vcmp.lt.s32.totalorder %v626, 2
    %vm628 = vcmp.eq.s32.totalorder %v626, 0
    %v629 = vxor.u32 %v623, 2147483648
    %v630 = vsel %vm628, %v622, %v629
    %vm631 = vcmp.eq.s32.totalorder %v626, 2
    %v632 = vxor.u32 %v622, 2147483648
    %v633 = vsel %vm631, %v632, %v623
    %v634 = vsel %vm627, %v630, %v633
    %v635 = vsel %vm624, nan, %v634
    %v636 = vpack.c.bf16 %v635, %v635
    %v637 = vmul.f32 %v424, 0.5
    %v638 = vmul.f32 %v424, 0.70710677
    %v639 = verf.f32.pop %v638
    %v640 = vadd.f32 %v639, 1.0
    %v641 = vmul.f32 %v637, %v640
    %v642 = vpack.c.bf16 %v641, %v641
    %v643 = vld [vmem:[#allocation8] sm:$0xff]
    %v644 = vld [vmem:[#allocation8 + $0x8] sm:$0xff]
    %v645 = vld [vmem:[#allocation8 + $0x10] sm:$0xff]
    %v646 = vld [vmem:[#allocation8 + $0x18] sm:$0xff]
    %v647 = vld [vmem:[#allocation8 + $0x20] sm:$0xff]
    %v648 = vld [vmem:[#allocation8 + $0x28] sm:$0xff]
    %v649 = vld [vmem:[#allocation8 + $0x30] sm:$0xff]
    %v650 = vld [vmem:[#allocation8 + $0x38] sm:$0xff]
    %v651 = vld [vmem:[#allocation8 + $0x40] sm:$0xff]
    %v652 = vld [vmem:[#allocation8 + $0x48] sm:$0xff]
    %v653 = vld [vmem:[#allocation8 + $0x50] sm:$0xff]
    %v654 = vld [vmem:[#allocation8 + $0x58] sm:$0xff]
    %v655 = vld [vmem:[#allocation8 + $0x60] sm:$0xff]
    %v656 = vld [vmem:[#allocation8 + $0x68] sm:$0xff]
    %v657 = vld [vmem:[#allocation8 + $0x70] sm:$0xff]
    %v658 = vld [vmem:[#allocation8 + $0x78] sm:$0xff]
    %v659 = vld [vmem:[#allocation10] sm:$0xff]
    %v660 = vld [vmem:[#allocation10 + $0x8] sm:$0xff]
    %v661 = vld [vmem:[#allocation10 + $0x10] sm:$0xff]
    %v662 = vld [vmem:[#allocation10 + $0x18] sm:$0xff]
    %v663 = vld [vmem:[#allocation10 + $0x20] sm:$0xff]
    %v664 = vld [vmem:[#allocation10 + $0x28] sm:$0xff]
    %v665 = vld [vmem:[#allocation10 + $0x30] sm:$0xff]
    %v666 = vld [vmem:[#allocation10 + $0x38] sm:$0xff]
    %v667 = vld [vmem:[#allocation10 + $0x40] sm:$0xff]
    %v668 = vld [vmem:[#allocation10 + $0x48] sm:$0xff]
    %v669 = vld [vmem:[#allocation10 + $0x50] sm:$0xff]
    %v670 = vld [vmem:[#allocation10 + $0x58] sm:$0xff]
    %v671 = vld [vmem:[#allocation10 + $0x60] sm:$0xff]
    %v672 = vld [vmem:[#allocation10 + $0x68] sm:$0xff]
    %v673 = vld [vmem:[#allocation10 + $0x70] sm:$0xff]
    %v674 = vld [vmem:[#allocation10 + $0x78] sm:$0xff]
    %v691 = vunpack.c.l.b16 %v659
    %v692 = vunpack.c.h.b16 %v659
    %v693 = vunpack.c.l.b16 %v660
    %v694 = vunpack.c.h.b16 %v660
    %v695 = vunpack.c.l.b16 %v661
    %v696 = vunpack.c.h.b16 %v661
    %v697 = vunpack.c.l.b16 %v662
    %v698 = vunpack.c.h.b16 %v662
    %v699 = vunpack.c.l.b16 %v663
    %v700 = vunpack.c.h.b16 %v663
    %v701 = vunpack.c.l.b16 %v664
    %v702 = vunpack.c.h.b16 %v664
    %v703 = vunpack.c.l.b16 %v665
    %v704 = vunpack.c.h.b16 %v665
    %v705 = vunpack.c.l.b16 %v666
    %v706 = vunpack.c.h.b16 %v666
    %v707 = vunpack.c.l.b16 %v667
    %v708 = vunpack.c.h.b16 %v667
    %v709 = vunpack.c.l.b16 %v668
    %v710 = vunpack.c.h.b16 %v668
    %v711 = vunpack.c.l.b16 %v669
    %v712 = vunpack.c.h.b16 %v669
    %v713 = vunpack.c.l.b16 %v670
    %v714 = vunpack.c.h.b16 %v670
    %v715 = vunpack.c.l.b16 %v671
    %v716 = vunpack.c.h.b16 %v671
    %v717 = vunpack.c.l.b16 %v672
    %v718 = vunpack.c.h.b16 %v672
    %v719 = vunpack.c.l.b16 %v673
    %v720 = vunpack.c.h.b16 %v673
    %v721 = vunpack.c.l.b16 %v674
    %v722 = vunpack.c.h.b16 %v674
    %v723 = vpack.c.b16 %v693, %v691
    %v724 = vpack.c.b16 %v694, %v692
    %v725 = vpack.c.b16 %v697, %v695
    %v726 = vpack.c.b16 %v698, %v696
    %v727 = vpack.c.b16 %v701, %v699
    %v728 = vpack.c.b16 %v702, %v700
    %v729 = vpack.c.b16 %v705, %v703
    %v730 = vpack.c.b16 %v706, %v704
    %v731 = vpack.c.b16 %v709, %v707
    %v732 = vpack.c.b16 %v710, %v708
    %v733 = vpack.c.b16 %v713, %v711
    %v734 = vpack.c.b16 %v714, %v712
    %v735 = vpack.c.b16 %v717, %v715
    %v736 = vpack.c.b16 %v718, %v716
    %v737 = vpack.c.b16 %v721, %v719
    %v738 = vpack.c.b16 %v722, %v720
    %755 = vmatprep.subr.bf16.mxu0 %v738
    %756 = vmatpush1.bf16.msra.mxu0 %v737
    %757 = vmatprep.subr.bf16.mxu0 %v736
    %758 = vmatpush1.bf16.msra.mxu0 %v735
    %759 = vmatprep.subr.bf16.mxu0 %v734
    %760 = vmatpush1.bf16.msra.mxu0 %v733
    %761 = vmatprep.subr.bf16.mxu0 %v732
    %762 = vmatpush1.bf16.msra.mxu0 %v731
    %763 = vmatprep.subr.bf16.mxu0 %v730
    %764 = vmatpush1.bf16.msra.mxu0 %v729
    %765 = vmatprep.subr.bf16.mxu0 %v728
    %766 = vmatpush1.bf16.msra.mxu0 %v727
    %767 = vmatprep.subr.bf16.mxu0 %v726
    %768 = vmatpush1.bf16.msra.mxu0 %v725
    %769 = vmatprep.subr.bf16.mxu0 %v724
    %770 = vmatpush1.bf16.msra.mxu0 %v723
    %771 = vmatprep.subr.bf16.mxu0 0
    %772 = vmatpush2.bf16.msra.mxu0 0
    %773 = vmatprep.subr.bf16.mxu0 0
    %774 = vmatpush2.bf16.msra.mxu0 0
    %775 = vmatprep.subr.bf16.mxu0 0
    %776 = vmatpush2.bf16.msra.mxu0 0
    %777 = vmatprep.subr.bf16.mxu0 0
    %778 = vmatpush2.bf16.msra.mxu0 0
    %779 = vmatprep.subr.bf16.mxu0 0
    %780 = vmatpush2.bf16.msra.mxu0 0
    %781 = vmatprep.subr.bf16.mxu0 0
    %782 = vmatpush2.bf16.msra.mxu0 0
    %783 = vmatprep.subr.bf16.mxu0 0
    %784 = vmatpush2.bf16.msra.mxu0 0
    %785 = vmatprep.subr.bf16.mxu0 0
    %786 = vmatpush2.bf16.msra.mxu0 0
    %787 = vmatprep.mubr.bf16.mxu0 0
    %788 = vmatmul.mubr.bf16.gmra.mxu0 %v636
    %v789 = vpop.f32.mrf.mxu0
    %v790 = vadd.f32 0.0, %v789
    %v791 = vpop.f32.mrf.mxu0
    %v792 = vadd.f32 0.0, %v791
    %v793 = vpop.f32.mrf.mxu0
    %v794 = vpop.f32.mrf.mxu0
    %795 = vdwg.mxu0
    %v812 = vunpack.c.l.b16 %v643
    %v813 = vunpack.c.h.b16 %v643
    %v814 = vunpack.c.l.b16 %v644
    %v815 = vunpack.c.h.b16 %v644
    %v816 = vunpack.c.l.b16 %v645
    %v817 = vunpack.c.h.b16 %v645
    %v818 = vunpack.c.l.b16 %v646
    %v819 = vunpack.c.h.b16 %v646
    %v820 = vunpack.c.l.b16 %v647
    %v821 = vunpack.c.h.b16 %v647
    %v822 = vunpack.c.l.b16 %v648
    %v823 = vunpack.c.h.b16 %v648
    %v824 = vunpack.c.l.b16 %v649
    %v825 = vunpack.c.h.b16 %v649
    %v826 = vunpack.c.l.b16 %v650
    %v827 = vunpack.c.h.b16 %v650
    %v828 = vunpack.c.l.b16 %v651
    %v829 = vunpack.c.h.b16 %v651
    %v830 = vunpack.c.l.b16 %v652
    %v831 = vunpack.c.h.b16 %v652
    %v832 = vunpack.c.l.b16 %v653
    %v833 = vunpack.c.h.b16 %v653
    %v834 = vunpack.c.l.b16 %v654
    %v835 = vunpack.c.h.b16 %v654
    %v836 = vunpack.c.l.b16 %v655
    %v837 = vunpack.c.h.b16 %v655
    %v838 = vunpack.c.l.b16 %v656
    %v839 = vunpack.c.h.b16 %v656
    %v840 = vunpack.c.l.b16 %v657
    %v841 = vunpack.c.h.b16 %v657
    %v842 = vunpack.c.l.b16 %v658
    %v843 = vunpack.c.h.b16 %v658
    %v844 = vpack.c.b16 %v814, %v812
    %v845 = vpack.c.b16 %v815, %v813
    %v846 = vpack.c.b16 %v818, %v816
    %v847 = vpack.c.b16 %v819, %v817
    %v848 = vpack.c.b16 %v822, %v820
    %v849 = vpack.c.b16 %v823, %v821
    %v850 = vpack.c.b16 %v826, %v824
    %v851 = vpack.c.b16 %v827, %v825
    %v852 = vpack.c.b16 %v830, %v828
    %v853 = vpack.c.b16 %v831, %v829
    %v854 = vpack.c.b16 %v834, %v832
    %v855 = vpack.c.b16 %v835, %v833
    %v856 = vpack.c.b16 %v838, %v836
    %v857 = vpack.c.b16 %v839, %v837
    %v858 = vpack.c.b16 %v842, %v840
    %v859 = vpack.c.b16 %v843, %v841
    %876 = vmatprep.subr.bf16.mxu0 %v859
    %877 = vmatpush1.bf16.msra.mxu0 %v858
    %878 = vmatprep.subr.bf16.mxu0 %v857
    %879 = vmatpush1.bf16.msra.mxu0 %v856
    %880 = vmatprep.subr.bf16.mxu0 %v855
    %881 = vmatpush1.bf16.msra.mxu0 %v854
    %882 = vmatprep.subr.bf16.mxu0 %v853
    %883 = vmatpush1.bf16.msra.mxu0 %v852
    %884 = vmatprep.subr.bf16.mxu0 %v851
    %885 = vmatpush1.bf16.msra.mxu0 %v850
    %886 = vmatprep.subr.bf16.mxu0 %v849
    %887 = vmatpush1.bf16.msra.mxu0 %v848
    %888 = vmatprep.subr.bf16.mxu0 %v847
    %889 = vmatpush1.bf16.msra.mxu0 %v846
    %890 = vmatprep.subr.bf16.mxu0 %v845
    %891 = vmatpush1.bf16.msra.mxu0 %v844
    %892 = vmatprep.subr.bf16.mxu0 0
    %893 = vmatpush2.bf16.msra.mxu0 0
    %894 = vmatprep.subr.bf16.mxu0 0
    %895 = vmatpush2.bf16.msra.mxu0 0
    %896 = vmatprep.subr.bf16.mxu0 0
    %897 = vmatpush2.bf16.msra.mxu0 0
    %898 = vmatprep.subr.bf16.mxu0 0
    %899 = vmatpush2.bf16.msra.mxu0 0
    %900 = vmatprep.subr.bf16.mxu0 0
    %901 = vmatpush2.bf16.msra.mxu0 0
    %902 = vmatprep.subr.bf16.mxu0 0
    %903 = vmatpush2.bf16.msra.mxu0 0
    %904 = vmatprep.subr.bf16.mxu0 0
    %905 = vmatpush2.bf16.msra.mxu0 0
    %906 = vmatprep.subr.bf16.mxu0 0
    %907 = vmatpush2.bf16.msra.mxu0 0
    %908 = vmatprep.mubr.bf16.mxu0 0
    %909 = vmatmul.mubr.bf16.gmra.mxu0 %v531
    %v910 = vpop.f32.mrf.mxu0
    %v911 = vadd.f32 %v790, %v910
    %v912 = vpop.f32.mrf.mxu0
    %v913 = vadd.f32 %v792, %v912
    %v914 = vpop.f32.mrf.mxu0
    %v915 = vpop.f32.mrf.mxu0
    %916 = vdwg.mxu0
    %v917 = vld [vmem:[#allocation11] sm:$0xff]
    %v918 = vld [vmem:[#allocation11 + $0x8] sm:$0xff]
    %v919 = vld [vmem:[#allocation11 + $0x10] sm:$0xff]
    %v920 = vld [vmem:[#allocation11 + $0x18] sm:$0xff]
    %v921 = vld [vmem:[#allocation11 + $0x20] sm:$0xff]
    %v922 = vld [vmem:[#allocation11 + $0x28] sm:$0xff]
    %v923 = vld [vmem:[#allocation11 + $0x30] sm:$0xff]
    %v924 = vld [vmem:[#allocation11 + $0x38] sm:$0xff]
    %v925 = vld [vmem:[#allocation11 + $0x40] sm:$0xff]
    %v926 = vld [vmem:[#allocation11 + $0x48] sm:$0xff]
    %v927 = vld [vmem:[#allocation11 + $0x50] sm:$0xff]
    %v928 = vld [vmem:[#allocation11 + $0x58] sm:$0xff]
    %v929 = vld [vmem:[#allocation11 + $0x60] sm:$0xff]
    %v930 = vld [vmem:[#allocation11 + $0x68] sm:$0xff]
    %v931 = vld [vmem:[#allocation11 + $0x70] sm:$0xff]
    %v932 = vld [vmem:[#allocation11 + $0x78] sm:$0xff]
    %v949 = vunpack.c.l.b16 %v917
    %v950 = vunpack.c.h.b16 %v917
    %v951 = vunpack.c.l.b16 %v918
    %v952 = vunpack.c.h.b16 %v918
    %v953 = vunpack.c.l.b16 %v919
    %v954 = vunpack.c.h.b16 %v919
    %v955 = vunpack.c.l.b16 %v920
    %v956 = vunpack.c.h.b16 %v920
    %v957 = vunpack.c.l.b16 %v921
    %v958 = vunpack.c.h.b16 %v921
    %v959 = vunpack.c.l.b16 %v922
    %v960 = vunpack.c.h.b16 %v922
    %v961 = vunpack.c.l.b16 %v923
    %v962 = vunpack.c.h.b16 %v923
    %v963 = vunpack.c.l.b16 %v924
    %v964 = vunpack.c.h.b16 %v924
    %v965 = vunpack.c.l.b16 %v925
    %v966 = vunpack.c.h.b16 %v925
    %v967 = vunpack.c.l.b16 %v926
    %v968 = vunpack.c.h.b16 %v926
    %v969 = vunpack.c.l.b16 %v927
    %v970 = vunpack.c.h.b16 %v927
    %v971 = vunpack.c.l.b16 %v928
    %v972 = vunpack.c.h.b16 %v928
    %v973 = vunpack.c.l.b16 %v929
    %v974 = vunpack.c.h.b16 %v929
    %v975 = vunpack.c.l.b16 %v930
    %v976 = vunpack.c.h.b16 %v930
    %v977 = vunpack.c.l.b16 %v931
    %v978 = vunpack.c.h.b16 %v931
    %v979 = vunpack.c.l.b16 %v932
    %v980 = vunpack.c.h.b16 %v932
    %v981 = vpack.c.b16 %v951, %v949
    %v982 = vpack.c.b16 %v952, %v950
    %v983 = vpack.c.b16 %v955, %v953
    %v984 = vpack.c.b16 %v956, %v954
    %v985 = vpack.c.b16 %v959, %v957
    %v986 = vpack.c.b16 %v960, %v958
    %v987 = vpack.c.b16 %v963, %v961
    %v988 = vpack.c.b16 %v964, %v962
    %v989 = vpack.c.b16 %v967, %v965
    %v990 = vpack.c.b16 %v968, %v966
    %v991 = vpack.c.b16 %v971, %v969
    %v992 = vpack.c.b16 %v972, %v970
    %v993 = vpack.c.b16 %v975, %v973
    %v994 = vpack.c.b16 %v976, %v974
    %v995 = vpack.c.b16 %v979, %v977
    %v996 = vpack.c.b16 %v980, %v978
    %1013 = vmatprep.subr.bf16.mxu0 %v996
    %1014 = vmatpush1.bf16.msra.mxu0 %v995
    %1015 = vmatprep.subr.bf16.mxu0 %v994
    %1016 = vmatpush1.bf16.msra.mxu0 %v993
    %1017 = vmatprep.subr.bf16.mxu0 %v992
    %1018 = vmatpush1.bf16.msra.mxu0 %v991
    %1019 = vmatprep.subr.bf16.mxu0 %v990
    %1020 = vmatpush1.bf16.msra.mxu0 %v989
    %1021 = vmatprep.subr.bf16.mxu0 %v988
    %1022 = vmatpush1.bf16.msra.mxu0 %v987
    %1023 = vmatprep.subr.bf16.mxu0 %v986
    %1024 = vmatpush1.bf16.msra.mxu0 %v985
    %1025 = vmatprep.subr.bf16.mxu0 %v984
    %1026 = vmatpush1.bf16.msra.mxu0 %v983
    %1027 = vmatprep.subr.bf16.mxu0 %v982
    %1028 = vmatpush1.bf16.msra.mxu0 %v981
    %1029 = vmatprep.subr.bf16.mxu0 0
    %1030 = vmatpush2.bf16.msra.mxu0 0
    %1031 = vmatprep.subr.bf16.mxu0 0
    %1032 = vmatpush2.bf16.msra.mxu0 0
    %1033 = vmatprep.subr.bf16.mxu0 0
    %1034 = vmatpush2.bf16.msra.mxu0 0
    %1035 = vmatprep.subr.bf16.mxu0 0
    %1036 = vmatpush2.bf16.msra.mxu0 0
    %1037 = vmatprep.subr.bf16.mxu0 0
    %1038 = vmatpush2.bf16.msra.mxu0 0
    %1039 = vmatprep.subr.bf16.mxu0 0
    %1040 = vmatpush2.bf16.msra.mxu0 0
    %1041 = vmatprep.subr.bf16.mxu0 0
    %1042 = vmatpush2.bf16.msra.mxu0 0
    %1043 = vmatprep.subr.bf16.mxu0 0
    %1044 = vmatpush2.bf16.msra.mxu0 0
    %1045 = vmatprep.mubr.bf16.mxu0 0
    %1046 = vmatmul.mubr.bf16.gmra.mxu0 %v642
    %v1047 = vpop.f32.mrf.mxu0
    %v1048 = vadd.f32 0.0, %v1047
    %v1049 = vpop.f32.mrf.mxu0
    %v1050 = vadd.f32 0.0, %v1049
    %v1051 = vpop.f32.mrf.mxu0
    %v1052 = vpop.f32.mrf.mxu0
    %1053 = vdwg.mxu0
    %v1054 = vadd.f32 %v911, %v1048
    %v1055 = vadd.f32 %v913, %v1050
    %v1056 = vld [vmem:[%s8] sm:$0x3]
    %v1058 = vlaneseq
    %v1059 = vshrl.u32 %v1058, 7
    %v1060 = vsub.s32 0, %v1059
    %v1061 = vrot.slane %v1056, %v1060
    %v1062 = vlaneseq
    %v1063 = vshrl.u32 %v1062, 7
    %v1064 = vsub.s32 1, %v1063
    %v1065 = vrot.slane %v1056, %v1064
    %v1068 = vadd.f32 %v1054, %v1061
    %v1069 = vadd.f32 %v1055, %v1065
    %v1070 = vand.u32 2147483647, %v1068
    %vm1071 = vcmp.le.f32.partialorder %v1070, 0.7853982
    %vm1072 = vcmp.lt.s32.totalorder %v1068, 0
    %v1073 = vand.u32 %v1068, 2139095040
    %v1074 = vshrl.u32 %v1073, 23
    %v1075 = vsub.s32 %v1074, 127
    %v1076 = vand.u32 2147483647, %v1068
    %v1077 = vand.u32 %v1076, 8388607
    %v1078 = vor.u32 %v1077, 8388608
    %v1079 = vsub.s32 0, %v1078
    %v1080 = vadd.s32 %v1075, 1
    %vm1081 = vcmp.gt.s32.totalorder %v1080, 0
    %v1082 = vsel %vm1081, %v1080, 0
    %v1083 = vshrl.u32 %v1082, 5
    %v1084 = vand.u32 %v1082, 31
    %v1085 = vsub.s32 32, %v1084
    %v1086 = vshrl.u32 683565275, %v1085
    %v1087 = vshll.u32 683565275, %v1084
    %v1088 = vshrl.u32 2475754826, %v1085
    %v1089 = vor.u32 %v1087, %v1088
    %v1090 = vshll.u32 2475754826, %v1084
    %v1091 = vshrl.u32 2131351028, %v1085
    %v1092 = vor.u32 %v1090, %v1091
    %v1093 = vshll.u32 2131351028, %v1084
    %v1094 = vshrl.u32 2102212464, %v1085
    %v1095 = vor.u32 %v1093, %v1094
    %v1096 = vshll.u32 2102212464, %v1084
    %v1097 = vshrl.u32 920167782, %v1085
    %v1098 = vor.u32 %v1096, %v1097
    %v1099 = vshll.u32 920167782, %v1084
    %v1100 = vshrl.u32 1326507024, %v1085
    %v1101 = vor.u32 %v1099, %v1100
    %vm1102 = vcmp.lt.s32.totalorder %v1083, 1
    %vm1103 = vcmp.lt.s32.totalorder %v1083, 2
    %vm1104 = vcmp.lt.s32.totalorder %v1083, 3
    %vm1105 = vcmp.lt.s32.totalorder %v1083, 4
    %v1106 = vsel %vm1102, %v1086, %v1089
    %v1107 = vsel %vm1105, %v1095, 2102212464
    %v1108 = vsel %vm1104, %v1092, %v1107
    %v1109 = vsel %vm1103, %v1106, %v1108
    %v1110 = vsel %vm1102, %v1089, %v1092
    %v1111 = vsel %vm1105, %v1098, 920167782
    %v1112 = vsel %vm1104, %v1095, %v1111
    %v1113 = vsel %vm1103, %v1110, %v1112
    %v1114 = vsel %vm1102, %v1092, %v1095
    %v1115 = vsel %vm1105, %v1101, 1326507024
    %v1116 = vsel %vm1104, %v1098, %v1115
    %v1117 = vsel %vm1103, %v1114, %v1116
    %v1118 = vshll.u32 %v1078, 8
    %v1119 = vmul.u32.u64.compose %v1118, %v1117
    %v1120 = vextract.low.u32 %v1119
    %v1121 = vextract.high.u32 %v1119
    %v1122 = vmul.u32.u64.compose %v1118, %v1113
    %v1123 = vextract.low.u32 %v1122
    %v1124 = vextract.high.u32 %v1122
    %v1125 = vmul.u32 %v1118, %v1109
    %v1126 = vadd.s32 %v1121, %v1123
    %vm1127 = vc.u32 %v1121, %v1123
    %v1128 = vadd.s32 %v1124, 1
    %v1129 = vsel %vm1127, %v1128, %v1124
    %v1130 = vadd.s32 %v1125, %v1129
    %v1131 = vadd.s32 %v1130, 536870912
    %v1132 = vshrl.u32 %v1131, 30
    %v1133 = vshll.u32 %v1132, 30
    %v1134 = vsub.s32 %v1130, %v1133
    %vm1135 = vcmp.lt.s32.totalorder %v1134, 0
    %v1136 = vsub.s32 0, %v1134
    %v1137 = vsel %vm1135, %v1136, %v1134
    %v1138 = vclz %v1137
    %v1139 = vsub.s32 %v1138, 2
    %vm1140 = vcmp.gt.s32.totalorder 0, %v1139
    %v1141 = vsel %vm1140, 0, %v1139
    %v1142 = vsub.s32 32, %v1141
    %v1143 = vshll.u32 %v1134, %v1141
    %v1144 = vshrl.u32 %v1126, %v1142
    %v1145 = vor.u32 %v1143, %v1144
    %v1146 = vsub.s32 4294967266, %v1141
    %v1147 = vadd.s32 %v1146, 127
    %v1148 = vshll.u32 %v1147, 23
    %v1149 = vor.u32 4788187, %v1148
    %v1150 = vand.u32 2147483647, %v1149
    %v1152 = vcvt.s32.f32 %v1145
    %v1153 = vmul.f32 %v1152, %v1150
    %v1154 = vxor.u32 %v1153, 2147483648
    %v1155 = vsel %vm1072, %v1154, %v1153
    %v1156 = vsub.s32 4, %v1132
    %v1157 = vsel %vm1072, %v1156, %v1132
    %v1158 = vsel %vm1071, %v1068, %v1155
    %v1159 = vsel %vm1071, 0, %v1157
    %v1160 = vcosq.f32.pop %v1158
    %v1161 = vsinq.f32.pop %v1158
    %vm1162 = vweird.f32 %v1068
    %v1163 = vand.u32 %v1159, 3
    %vm1164 = vcmp.lt.s32.totalorder %v1163, 2
    %vm1165 = vcmp.eq.s32.totalorder %v1163, 0
    %v1166 = vxor.u32 %v1161, 2147483648
    %v1167 = vsel %vm1165, %v1160, %v1166
    %vm1168 = vcmp.eq.s32.totalorder %v1163, 2
    %v1169 = vxor.u32 %v1160, 2147483648
    %v1170 = vsel %vm1168, %v1169, %v1161
    %v1171 = vsel %vm1164, %v1167, %v1170
    %v1172 = vsel %vm1162, nan, %v1171
    %v1173 = vpack.c.bf16 %v1172, %v1172
    %v1174 = vand.u32 2147483647, %v1068
    %vm1175 = vcmp.le.f32.partialorder %v1174, 0.7853982
    %vm1176 = vcmp.lt.s32.totalorder %v1068, 0
    %v1177 = vand.u32 %v1068, 2139095040
    %v1178 = vshrl.u32 %v1177, 23
    %v1179 = vsub.s32 %v1178, 127
    %v1180 = vand.u32 2147483647, %v1068
    %v1181 = vand.u32 %v1180, 8388607
    %v1182 = vor.u32 %v1181, 8388608
    %v1183 = vsub.s32 0, %v1182
    %v1184 = vadd.s32 %v1179, 1
    %vm1185 = vcmp.gt.s32.totalorder %v1184, 0
    %v1186 = vsel %vm1185, %v1184, 0
    %v1187 = vshrl.u32 %v1186, 5
    %v1188 = vand.u32 %v1186, 31
    %v1189 = vsub.s32 32, %v1188
    %v1190 = vshrl.u32 683565275, %v1189
    %v1191 = vshll.u32 683565275, %v1188
    %v1192 = vshrl.u32 2475754826, %v1189
    %v1193 = vor.u32 %v1191, %v1192
    %v1194 = vshll.u32 2475754826, %v1188
    %v1195 = vshrl.u32 2131351028, %v1189
    %v1196 = vor.u32 %v1194, %v1195
    %v1197 = vshll.u32 2131351028, %v1188
    %v1198 = vshrl.u32 2102212464, %v1189
    %v1199 = vor.u32 %v1197, %v1198
    %v1200 = vshll.u32 2102212464, %v1188
    %v1201 = vshrl.u32 920167782, %v1189
    %v1202 = vor.u32 %v1200, %v1201
    %v1203 = vshll.u32 920167782, %v1188
    %v1204 = vshrl.u32 1326507024, %v1189
    %v1205 = vor.u32 %v1203, %v1204
    %vm1206 = vcmp.lt.s32.totalorder %v1187, 1
    %vm1207 = vcmp.lt.s32.totalorder %v1187, 2
    %vm1208 = vcmp.lt.s32.totalorder %v1187, 3
    %vm1209 = vcmp.lt.s32.totalorder %v1187, 4
    %v1210 = vsel %vm1206, %v1190, %v1193
    %v1211 = vsel %vm1209, %v1199, 2102212464
    %v1212 = vsel %vm1208, %v1196, %v1211
    %v1213 = vsel %vm1207, %v1210, %v1212
    %v1214 = vsel %vm1206, %v1193, %v1196
    %v1215 = vsel %vm1209, %v1202, 920167782
    %v1216 = vsel %vm1208, %v1199, %v1215
    %v1217 = vsel %vm1207, %v1214, %v1216
    %v1218 = vsel %vm1206, %v1196, %v1199
    %v1219 = vsel %vm1209, %v1205, 1326507024
    %v1220 = vsel %vm1208, %v1202, %v1219
    %v1221 = vsel %vm1207, %v1218, %v1220
    %v1222 = vshll.u32 %v1182, 8
    %v1223 = vmul.u32.u64.compose %v1222, %v1221
    %v1224 = vextract.low.u32 %v1223
    %v1225 = vextract.high.u32 %v1223
    %v1226 = vmul.u32.u64.compose %v1222, %v1217
    %v1227 = vextract.low.u32 %v1226
    %v1228 = vextract.high.u32 %v1226
    %v1229 = vmul.u32 %v1222, %v1213
    %v1230 = vadd.s32 %v1225, %v1227
    %vm1231 = vc.u32 %v1225, %v1227
    %v1232 = vadd.s32 %v1228, 1
    %v1233 = vsel %vm1231, %v1232, %v1228
    %v1234 = vadd.s32 %v1229, %v1233
    %v1235 = vadd.s32 %v1234, 536870912
    %v1236 = vshrl.u32 %v1235, 30
    %v1237 = vshll.u32 %v1236, 30
    %v1238 = vsub.s32 %v1234, %v1237
    %vm1239 = vcmp.lt.s32.totalorder %v1238, 0
    %v1240 = vsub.s32 0, %v1238
    %v1241 = vsel %vm1239, %v1240, %v1238
    %v1242 = vclz %v1241
    %v1243 = vsub.s32 %v1242, 2
    %vm1244 = vcmp.gt.s32.totalorder 0, %v1243
    %v1245 = vsel %vm1244, 0, %v1243
    %v1246 = vsub.s32 32, %v1245
    %v1247 = vshll.u32 %v1238, %v1245
    %v1248 = vshrl.u32 %v1230, %v1246
    %v1249 = vor.u32 %v1247, %v1248
    %v1250 = vsub.s32 4294967266, %v1245
    %v1251 = vadd.s32 %v1250, 127
    %v1252 = vshll.u32 %v1251, 23
    %v1253 = vor.u32 4788187, %v1252
    %v1254 = vand.u32 2147483647, %v1253
    %v1256 = vcvt.s32.f32 %v1249
    %v1257 = vmul.f32 %v1256, %v1254
    %v1258 = vxor.u32 %v1257, 2147483648
    %v1259 = vsel %vm1176, %v1258, %v1257
    %v1260 = vsub.s32 4, %v1236
    %v1261 = vsel %vm1176, %v1260, %v1236
    %v1262 = vsel %vm1175, %v1068, %v1259
    %v1263 = vsel %vm1175, 0, %v1261
    %v1264 = vcosq.f32.pop %v1262
    %v1265 = vsinq.f32.pop %v1262
    %vm1266 = vweird.f32 %v1068
    %v1267 = vadd.s32 %v1263, 3
    %v1268 = vand.u32 %v1267, 3
    %vm1269 = vcmp.lt.s32.totalorder %v1268, 2
    %vm1270 = vcmp.eq.s32.totalorder %v1268, 0
    %v1271 = vxor.u32 %v1265, 2147483648
    %v1272 = vsel %vm1270, %v1264, %v1271
    %vm1273 = vcmp.eq.s32.totalorder %v1268, 2
    %v1274 = vxor.u32 %v1264, 2147483648
    %v1275 = vsel %vm1273, %v1274, %v1265
    %v1276 = vsel %vm1269, %v1272, %v1275
    %v1277 = vsel %vm1266, nan, %v1276
    %v1278 = vpack.c.bf16 %v1277, %v1277
    %v1279 = vmul.f32 %v1069, 0.5
    %v1280 = vmul.f32 %v1069, 0.70710677
    %v1281 = verf.f32.pop %v1280
    %v1282 = vadd.f32 %v1281, 1.0
    %v1283 = vmul.f32 %v1279, %v1282
    %v1284 = vpack.c.bf16 %v1283, %v1283
    %v1285 = vld [vmem:[#allocation13] sm:$0xf]
    %v1286 = vld [vmem:[#allocation13 + $0x4] sm:$0xf]
    %v1287 = vld [vmem:[#allocation13 + $0x8] sm:$0xf]
    %v1288 = vld [vmem:[#allocation13 + $0xc] sm:$0xf]
    %v1289 = vld [vmem:[#allocation13 + $0x10] sm:$0xf]
    %v1290 = vld [vmem:[#allocation13 + $0x14] sm:$0xf]
    %v1291 = vld [vmem:[#allocation13 + $0x18] sm:$0xf]
    %v1292 = vld [vmem:[#allocation13 + $0x1c] sm:$0xf]
    %v1293 = vld [vmem:[#allocation13 + $0x20] sm:$0xf]
    %v1294 = vld [vmem:[#allocation13 + $0x24] sm:$0xf]
    %v1295 = vld [vmem:[#allocation13 + $0x28] sm:$0xf]
    %v1296 = vld [vmem:[#allocation13 + $0x2c] sm:$0xf]
    %v1297 = vld [vmem:[#allocation13 + $0x30] sm:$0xf]
    %v1298 = vld [vmem:[#allocation13 + $0x34] sm:$0xf]
    %v1299 = vld [vmem:[#allocation13 + $0x38] sm:$0xf]
    %v1300 = vld [vmem:[#allocation13 + $0x3c] sm:$0xf]
    %v1301 = vld [vmem:[#allocation14] sm:$0xf]
    %v1302 = vld [vmem:[#allocation14 + $0x4] sm:$0xf]
    %v1303 = vld [vmem:[#allocation14 + $0x8] sm:$0xf]
    %v1304 = vld [vmem:[#allocation14 + $0xc] sm:$0xf]
    %v1305 = vld [vmem:[#allocation14 + $0x10] sm:$0xf]
    %v1306 = vld [vmem:[#allocation14 + $0x14] sm:$0xf]
    %v1307 = vld [vmem:[#allocation14 + $0x18] sm:$0xf]
    %v1308 = vld [vmem:[#allocation14 + $0x1c] sm:$0xf]
    %v1309 = vld [vmem:[#allocation14 + $0x20] sm:$0xf]
    %v1310 = vld [vmem:[#allocation14 + $0x24] sm:$0xf]
    %v1311 = vld [vmem:[#allocation14 + $0x28] sm:$0xf]
    %v1312 = vld [vmem:[#allocation14 + $0x2c] sm:$0xf]
    %v1313 = vld [vmem:[#allocation14 + $0x30] sm:$0xf]
    %v1314 = vld [vmem:[#allocation14 + $0x34] sm:$0xf]
    %v1315 = vld [vmem:[#allocation14 + $0x38] sm:$0xf]
    %v1316 = vld [vmem:[#allocation14 + $0x3c] sm:$0xf]
    %v1333 = vunpack.c.l.b16 %v1301
    %v1334 = vunpack.c.l.b16 %v1302
    %v1335 = vunpack.c.l.b16 %v1303
    %v1336 = vunpack.c.l.b16 %v1304
    %v1337 = vunpack.c.l.b16 %v1305
    %v1338 = vunpack.c.l.b16 %v1306
    %v1339 = vunpack.c.l.b16 %v1307
    %v1340 = vunpack.c.l.b16 %v1308
    %v1341 = vunpack.c.l.b16 %v1309
    %v1342 = vunpack.c.l.b16 %v1310
    %v1343 = vunpack.c.l.b16 %v1311
    %v1344 = vunpack.c.l.b16 %v1312
    %v1345 = vunpack.c.l.b16 %v1313
    %v1346 = vunpack.c.l.b16 %v1314
    %v1347 = vunpack.c.l.b16 %v1315
    %v1348 = vunpack.c.l.b16 %v1316
    %v1349 = vpack.c.b16 %v1334, %v1333
    %v1350 = vpack.c.b16 %v1336, %v1335
    %v1351 = vpack.c.b16 %v1338, %v1337
    %v1352 = vpack.c.b16 %v1340, %v1339
    %v1353 = vpack.c.b16 %v1342, %v1341
    %v1354 = vpack.c.b16 %v1344, %v1343
    %v1355 = vpack.c.b16 %v1346, %v1345
    %v1356 = vpack.c.b16 %v1348, %v1347
    %1365 = vmatprep.subr.bf16.mxu0 0
    %1366 = vmatpush1.bf16.msra.mxu0 %v1356
    %1367 = vmatprep.subr.bf16.mxu0 0
    %1368 = vmatpush1.bf16.msra.mxu0 %v1355
    %1369 = vmatprep.subr.bf16.mxu0 0
    %1370 = vmatpush1.bf16.msra.mxu0 %v1354
    %1371 = vmatprep.subr.bf16.mxu0 0
    %1372 = vmatpush1.bf16.msra.mxu0 %v1353
    %1373 = vmatprep.subr.bf16.mxu0 0
    %1374 = vmatpush1.bf16.msra.mxu0 %v1352
    %1375 = vmatprep.subr.bf16.mxu0 0
    %1376 = vmatpush1.bf16.msra.mxu0 %v1351
    %1377 = vmatprep.subr.bf16.mxu0 0
    %1378 = vmatpush1.bf16.msra.mxu0 %v1350
    %1379 = vmatprep.subr.bf16.mxu0 0
    %1380 = vmatpush1.bf16.msra.mxu0 %v1349
    %1381 = vmatprep.subr.bf16.mxu0 0
    %1382 = vmatpush2.bf16.msra.mxu0 0
    %1383 = vmatprep.subr.bf16.mxu0 0
    %1384 = vmatpush2.bf16.msra.mxu0 0
    %1385 = vmatprep.subr.bf16.mxu0 0
    %1386 = vmatpush2.bf16.msra.mxu0 0
    %1387 = vmatprep.subr.bf16.mxu0 0
    %1388 = vmatpush2.bf16.msra.mxu0 0
    %1389 = vmatprep.subr.bf16.mxu0 0
    %1390 = vmatpush2.bf16.msra.mxu0 0
    %1391 = vmatprep.subr.bf16.mxu0 0
    %1392 = vmatpush2.bf16.msra.mxu0 0
    %1393 = vmatprep.subr.bf16.mxu0 0
    %1394 = vmatpush2.bf16.msra.mxu0 0
    %1395 = vmatprep.subr.bf16.mxu0 0
    %1396 = vmatpush2.bf16.msra.mxu0 0
    %1397 = vmatprep.mubr.bf16.mxu0 0
    %1398 = vmatmul.mubr.bf16.gmra.mxu0 %v1278
    %v1399 = vpop.f32.mrf.mxu0
    %v1400 = vadd.f32 0.0, %v1399
    %v1401 = vpop.f32.mrf.mxu0
    %v1402 = vpop.f32.mrf.mxu0
    %v1403 = vpop.f32.mrf.mxu0
    %1404 = vdwg.mxu0
    %v1421 = vunpack.c.l.b16 %v1285
    %v1422 = vunpack.c.l.b16 %v1286
    %v1423 = vunpack.c.l.b16 %v1287
    %v1424 = vunpack.c.l.b16 %v1288
    %v1425 = vunpack.c.l.b16 %v1289
    %v1426 = vunpack.c.l.b16 %v1290
    %v1427 = vunpack.c.l.b16 %v1291
    %v1428 = vunpack.c.l.b16 %v1292
    %v1429 = vunpack.c.l.b16 %v1293
    %v1430 = vunpack.c.l.b16 %v1294
    %v1431 = vunpack.c.l.b16 %v1295
    %v1432 = vunpack.c.l.b16 %v1296
    %v1433 = vunpack.c.l.b16 %v1297
    %v1434 = vunpack.c.l.b16 %v1298
    %v1435 = vunpack.c.l.b16 %v1299
    %v1436 = vunpack.c.l.b16 %v1300
    %v1437 = vpack.c.b16 %v1422, %v1421
    %v1438 = vpack.c.b16 %v1424, %v1423
    %v1439 = vpack.c.b16 %v1426, %v1425
    %v1440 = vpack.c.b16 %v1428, %v1427
    %v1441 = vpack.c.b16 %v1430, %v1429
    %v1442 = vpack.c.b16 %v1432, %v1431
    %v1443 = vpack.c.b16 %v1434, %v1433
    %v1444 = vpack.c.b16 %v1436, %v1435
    %1453 = vmatprep.subr.bf16.mxu0 0
    %1454 = vmatpush1.bf16.msra.mxu0 %v1444
    %1455 = vmatprep.subr.bf16.mxu0 0
    %1456 = vmatpush1.bf16.msra.mxu0 %v1443
    %1457 = vmatprep.subr.bf16.mxu0 0
    %1458 = vmatpush1.bf16.msra.mxu0 %v1442
    %1459 = vmatprep.subr.bf16.mxu0 0
    %1460 = vmatpush1.bf16.msra.mxu0 %v1441
    %1461 = vmatprep.subr.bf16.mxu0 0
    %1462 = vmatpush1.bf16.msra.mxu0 %v1440
    %1463 = vmatprep.subr.bf16.mxu0 0
    %1464 = vmatpush1.bf16.msra.mxu0 %v1439
    %1465 = vmatprep.subr.bf16.mxu0 0
    %1466 = vmatpush1.bf16.msra.mxu0 %v1438
    %1467 = vmatprep.subr.bf16.mxu0 0
    %1468 = vmatpush1.bf16.msra.mxu0 %v1437
    %1469 = vmatprep.subr.bf16.mxu0 0
    %1470 = vmatpush2.bf16.msra.mxu0 0
    %1471 = vmatprep.subr.bf16.mxu0 0
    %1472 = vmatpush2.bf16.msra.mxu0 0
    %1473 = vmatprep.subr.bf16.mxu0 0
    %1474 = vmatpush2.bf16.msra.mxu0 0
    %1475 = vmatprep.subr.bf16.mxu0 0
    %1476 = vmatpush2.bf16.msra.mxu0 0
    %1477 = vmatprep.subr.bf16.mxu0 0
    %1478 = vmatpush2.bf16.msra.mxu0 0
    %1479 = vmatprep.subr.bf16.mxu0 0
    %1480 = vmatpush2.bf16.msra.mxu0 0
    %1481 = vmatprep.subr.bf16.mxu0 0
    %1482 = vmatpush2.bf16.msra.mxu0 0
    %1483 = vmatprep.subr.bf16.mxu0 0
    %1484 = vmatpush2.bf16.msra.mxu0 0
    %1485 = vmatprep.mubr.bf16.mxu0 0
    %1486 = vmatmul.mubr.bf16.gmra.mxu0 %v1173
    %v1487 = vpop.f32.mrf.mxu0
    %v1488 = vadd.f32 %v1400, %v1487
    %v1489 = vpop.f32.mrf.mxu0
    %v1490 = vpop.f32.mrf.mxu0
    %v1491 = vpop.f32.mrf.mxu0
    %1492 = vdwg.mxu0
    %v1493 = vld [vmem:[#allocation16] sm:$0xf]
    %v1494 = vld [vmem:[#allocation16 + $0x4] sm:$0xf]
    %v1495 = vld [vmem:[#allocation16 + $0x8] sm:$0xf]
    %v1496 = vld [vmem:[#allocation16 + $0xc] sm:$0xf]
    %v1497 = vld [vmem:[#allocation16 + $0x10] sm:$0xf]
    %v1498 = vld [vmem:[#allocation16 + $0x14] sm:$0xf]
    %v1499 = vld [vmem:[#allocation16 + $0x18] sm:$0xf]
    %v1500 = vld [vmem:[#allocation16 + $0x1c] sm:$0xf]
    %v1501 = vld [vmem:[#allocation16 + $0x20] sm:$0xf]
    %v1502 = vld [vmem:[#allocation16 + $0x24] sm:$0xf]
    %v1503 = vld [vmem:[#allocation16 + $0x28] sm:$0xf]
    %v1504 = vld [vmem:[#allocation16 + $0x2c] sm:$0xf]
    %v1505 = vld [vmem:[#allocation16 + $0x30] sm:$0xf]
    %v1506 = vld [vmem:[#allocation16 + $0x34] sm:$0xf]
    %v1507 = vld [vmem:[#allocation16 + $0x38] sm:$0xf]
    %v1508 = vld [vmem:[#allocation16 + $0x3c] sm:$0xf]
    %v1525 = vunpack.c.l.b16 %v1493
    %v1526 = vunpack.c.l.b16 %v1494
    %v1527 = vunpack.c.l.b16 %v1495
    %v1528 = vunpack.c.l.b16 %v1496
    %v1529 = vunpack.c.l.b16 %v1497
    %v1530 = vunpack.c.l.b16 %v1498
    %v1531 = vunpack.c.l.b16 %v1499
    %v1532 = vunpack.c.l.b16 %v1500
    %v1533 = vunpack.c.l.b16 %v1501
    %v1534 = vunpack.c.l.b16 %v1502
    %v1535 = vunpack.c.l.b16 %v1503
    %v1536 = vunpack.c.l.b16 %v1504
    %v1537 = vunpack.c.l.b16 %v1505
    %v1538 = vunpack.c.l.b16 %v1506
    %v1539 = vunpack.c.l.b16 %v1507
    %v1540 = vunpack.c.l.b16 %v1508
    %v1541 = vpack.c.b16 %v1526, %v1525
    %v1542 = vpack.c.b16 %v1528, %v1527
    %v1543 = vpack.c.b16 %v1530, %v1529
    %v1544 = vpack.c.b16 %v1532, %v1531
    %v1545 = vpack.c.b16 %v1534, %v1533
    %v1546 = vpack.c.b16 %v1536, %v1535
    %v1547 = vpack.c.b16 %v1538, %v1537
    %v1548 = vpack.c.b16 %v1540, %v1539
    %1557 = vmatprep.subr.bf16.mxu0 0
    %1558 = vmatpush1.bf16.msra.mxu0 %v1548
    %1559 = vmatprep.subr.bf16.mxu0 0
    %1560 = vmatpush1.bf16.msra.mxu0 %v1547
    %1561 = vmatprep.subr.bf16.mxu0 0
    %1562 = vmatpush1.bf16.msra.mxu0 %v1546
    %1563 = vmatprep.subr.bf16.mxu0 0
    %1564 = vmatpush1.bf16.msra.mxu0 %v1545
    %1565 = vmatprep.subr.bf16.mxu0 0
    %1566 = vmatpush1.bf16.msra.mxu0 %v1544
    %1567 = vmatprep.subr.bf16.mxu0 0
    %1568 = vmatpush1.bf16.msra.mxu0 %v1543
    %1569 = vmatprep.subr.bf16.mxu0 0
    %1570 = vmatpush1.bf16.msra.mxu0 %v1542
    %1571 = vmatprep.subr.bf16.mxu0 0
    %1572 = vmatpush1.bf16.msra.mxu0 %v1541
    %1573 = vmatprep.subr.bf16.mxu0 0
    %1574 = vmatpush2.bf16.msra.mxu0 0
    %1575 = vmatprep.subr.bf16.mxu0 0
    %1576 = vmatpush2.bf16.msra.mxu0 0
    %1577 = vmatprep.subr.bf16.mxu0 0
    %1578 = vmatpush2.bf16.msra.mxu0 0
    %1579 = vmatprep.subr.bf16.mxu0 0
    %1580 = vmatpush2.bf16.msra.mxu0 0
    %1581 = vmatprep.subr.bf16.mxu0 0
    %1582 = vmatpush2.bf16.msra.mxu0 0
    %1583 = vmatprep.subr.bf16.mxu0 0
    %1584 = vmatpush2.bf16.msra.mxu0 0
    %1585 = vmatprep.subr.bf16.mxu0 0
    %1586 = vmatpush2.bf16.msra.mxu0 0
    %1587 = vmatprep.subr.bf16.mxu0 0
    %1588 = vmatpush2.bf16.msra.mxu0 0
    %1589 = vmatprep.mubr.bf16.mxu0 0
    %1590 = vmatmul.mubr.bf16.gmra.mxu0 %v1284
    %v1591 = vpop.f32.mrf.mxu0
    %v1592 = vadd.f32 0.0, %v1591
    %v1593 = vpop.f32.mrf.mxu0
    %v1594 = vpop.f32.mrf.mxu0
    %v1595 = vpop.f32.mrf.mxu0
    %1596 = vdwg.mxu0
    %v1597 = vadd.f32 %v1488, %v1592
    %v1598 = vld [vmem:[%s12] sm:$0x1]
    %v1600 = vlaneseq
    %v1601 = vshrl.u32 %v1600, 7
    %v1602 = vsub.s32 0, %v1601
    %v1603 = vrot.slane %v1598, %v1602
    %v1605 = vadd.f32 %v1597, %v1603
    %1606 = vst [vmem:[#allocation17] sm:$0xff] %v1605
    // Predicated region
    $region90: #{tpu_custom_call.1} parent=1 // pred_check
      _
    $region91: #{tpu_custom_call.1} parent=1 // pred_check_branch
      %1608 = sbr.rel (0) target = $region93
    $region92: #{tpu_custom_call.1} parent=1 // pred_region
      %s1610 = ssub.s32 128, 128
      %1611 = vsyncadd [#allocation4], %s1610
      %s1613 = sshll.u32 [#allocation17], 4
      %s1614 = int_to_ptr.vmem [resolvable:$true] %s1613
      %1616 = dma.vmem_to_hbm [thread:$0]  %s1614, 128, %s13, [#allocation4]
    $region93: #{tpu_custom_call.1} parent=1 // pred_fallthru
      _
    // Predicated region
    $region94: #{tpu_custom_call.1} parent=1 // pred_check
      _
    $region95: #{tpu_custom_call.1} parent=1 // pred_check_branch
      %1618 = sbr.rel (0) target = $region97
    $region96: #{tpu_custom_call.1} parent=1 // pred_region
      %1619 = dma.done [#allocation4], 128
    $region97: #{tpu_custom_call.1} parent=1 // pred_fallthru
      _
    %1620 = vsyncpa [#allocation3], 1
    %1621 = vsyncpa [#allocation6], 1
    %1622 = vsyncpa [#allocation9], 1
    %1623 = vsyncpa [#allocation12], 1
    %1624 = vsyncpa [#allocation15], 1
    %1625 = vsyncpa [#allocation4], 1

// kernel: tpu_custom_call.1
$region0: #{tpu_custom_call.1}
  #allocation0 [shape = 'u32[]', space=smem, size = 0x4, offset = 0x4, fixed_abs, tag = 'smem constant byte address 0x4 - core index']
  #allocation1 [shape = 'u32[144,128]{1,0:T(1,128)}', space=vmem, size = 0x12000, scoped, tag = 'internal scratch']
  %s0 = inlined_call_operand.hbm [shape: bf16[8,128], index: 0, kind: input, shape index: {}]
  %s1 = inlined_call_operand.hbm [shape: bf16[128,128], index: 1, kind: input, shape index: {}]
  %s2 = inlined_call_operand.vmem [shape: f32[1,128], index: 2, kind: input, shape index: {}]
  %s3 = inlined_call_operand.hbm [shape: bf16[128,256], index: 3, kind: input, shape index: {}]
  %s4 = inlined_call_operand.vmem [shape: f32[1,256], index: 4, kind: input, shape index: {}]
  %s5 = inlined_call_operand.hbm [shape: bf16[128,256], index: 5, kind: input, shape index: {}]
  %s6 = inlined_call_operand.hbm [shape: bf16[128,256], index: 6, kind: input, shape index: {}]
  %s7 = inlined_call_operand.hbm [shape: bf16[128,256], index: 7, kind: input, shape index: {}]
  %s8 = inlined_call_operand.vmem [shape: f32[1,256], index: 8, kind: input, shape index: {}]
  %s9 = inlined_call_operand.hbm [shape: bf16[128,128], index: 9, kind: input, shape index: {}]
  %s10 = inlined_call_operand.hbm [shape: bf16[128,128], index: 10, kind: input, shape index: {}]
  %s11 = inlined_call_operand.hbm [shape: bf16[128,128], index: 11, kind: input, shape index: {}]
  %s12 = inlined_call_operand.vmem [shape: f32[1,128], index: 12, kind: input, shape index: {}]
  %s13 = inlined_call_operand.hbm [shape: f32[8,128], index: 13, kind: output, shape index: {}]
  %s14 = sld [smem:[#allocation0]]
  $region98: #{tpu_custom_call.1} parent=0
    _
  %s16 = ssub.s32 1, %s14
  %s17 = scalar_select 0, %s16, %s14
  $region1: #{tpu_custom_call.1} parent=0
    #allocation2 [shape = 'u8[2048]{0}', space=vmem, size = 0x800, scoped, tag = 'input window, operand 0, single buffered']
    #allocation3 [shape = 's32[1]{0}', space=sflag, size = 0x4, scoped, tag = 'scoped memory for tpu_custom_call.1']
    #allocation4 [shape = 's32[1]{0}', space=sflag, size = 0x4, scoped, tag = 'scoped memory for tpu_custom_call.1']
    #allocation5 [shape = 'u8[32768]{0}', space=vmem, size = 0x8000, scoped, tag = 'input window, operand 1, single buffered']
    #allocation6 [shape = 's32[1]{0}', space=sflag, size = 0x4, scoped, tag = 'scoped memory for tpu_custom_call.1']
    #allocation7 [shape = 'u8[65536]{0}', space=vmem, size = 0x10000, scoped, tag = 'input window, operand 3, single buffered']
    #allocation8 [shape = 'u8[65536]{0}', space=vmem, size = 0x10000, scoped, tag = 'input window, operand 5, single buffered']
    #allocation9 [shape = 's32[1]{0}', space=sflag, size = 0x4, scoped, tag = 'scoped memory for tpu_custom_call.1']
    #allocation10 [shape = 'u8[65536]{0}', space=vmem, size = 0x10000, scoped, tag = 'input window, operand 6, single buffered']
    #allocation11 [shape = 'u8[65536]{0}', space=vmem, size = 0x10000, scoped, tag = 'input window, operand 7, single buffered']
    #allocation12 [shape = 's32[1]{0}', space=sflag, size = 0x4, scoped, tag = 'scoped memory for tpu_custom_call.1']
    #allocation13 [shape = 'u8[32768]{0}', space=vmem, size = 0x8000, scoped, tag = 'input window, operand 9, single buffered']
    #allocation14 [shape = 'u8[32768]{0}', space=vmem, size = 0x8000, scoped, tag = 'input window, operand 10, single buffered']
    #allocation15 [shape = 's32[1]{0}', space=sflag, size = 0x4, scoped, tag = 'scoped memory for tpu_custom_call.1']
    #allocation16 [shape = 'u8[32768]{0}', space=vmem, size = 0x8000, scoped, tag = 'input window, operand 11, single buffered']
    #allocation17 [shape = 'u8[4096]{0}', space=vmem, size = 0x1000, scoped, tag = 'output window, operand 0, single buffered']
    %18 = vsyncpa [#allocation3], 0
    %19 = vsyncpa [#allocation6], 0
    %20 = vsyncpa [#allocation9], 0
    %21 = vsyncpa [#allocation12], 0
    %22 = vsyncpa [#allocation15], 0
    %23 = vsyncpa [#allocation4], 0
    // Predicated region
    $region2: #{tpu_custom_call.1} parent=1 // pred_check
      _
    $region3: #{tpu_custom_call.1} parent=1 // pred_check_branch
      %25 = sbr.rel (0) target = $region5
    $region4: #{tpu_custom_call.1} parent=1 // pred_region
      %s27 = ssub.s32 64, 64
      %28 = vsyncadd [#allocation3], %s27
      %s30 = sshll.u32 [#allocation2], 4
      %s31 = int_to_ptr.vmem [resolvable:$true] %s30
      %33 = dma.hbm_to_vmem [thread:$0]  %s0, 64, %s31, [#allocation3]
    $region5: #{tpu_custom_call.1} parent=1 // pred_fallthru
      _
    // Predicated region
    $region6: #{tpu_custom_call.1} parent=1 // pred_check
      _
    $region7: #{tpu_custom_call.1} parent=1 // pred_check_branch
      %35 = sbr.rel (0) target = $region9
    $region8: #{tpu_custom_call.1} parent=1 // pred_region
      %s37 = ssub.s32 1024, 1024
      %38 = vsyncadd [#allocation6], %s37
      %s39 = sshll.u32 [#allocation5], 4
      %s40 = int_to_ptr.vmem [resolvable:$true] %s39
      %45 = dma.hbm_to_vmem [thread:$0]  %s1, 1024, %s40, [#allocation6], 64, 64, 4
    $region9: #{tpu_custom_call.1} parent=1 // pred_fallthru
      _
    // Predicated region
    $region10: #{tpu_custom_call.1} parent=1 // pred_check
      _
    $region11: #{tpu_custom_call.1} parent=1 // pred_check_branch
      %47 = sbr.rel (0) target = $region13
    $region12: #{tpu_custom_call.1} parent=1 // pred_region
      _
    $region13: #{tpu_custom_call.1} parent=1 // pred_fallthru
      _
    // Predicated region
    $region14: #{tpu_custom_call.1} parent=1 // pred_check
      _
    $region15: #{tpu_custom_call.1} parent=1 // pred_check_branch
      %49 = sbr.rel (0) target = $region17
    $region16: #{tpu_custom_call.1} parent=1 // pred_region
      %s51 = ssub.s32 2048, 2048
      %52 = vsyncadd [#allocation6], %s51
      %s53 = sshll.u32 [#allocation7], 4
      %s54 = int_to_ptr.vmem [resolvable:$true] %s53
      %59 = dma.hbm_to_vmem [thread:$0]  %s3, 2048, %s54, [#allocation6], 128, 128, 8
    $region17: #{tpu_custom_call.1} parent=1 // pred_fallthru
      _
    // Predicated region
    $region18: #{tpu_custom_call.1} parent=1 // pred_check
      _
    $region19: #{tpu_custom_call.1} parent=1 // pred_check_branch
      %61 = sbr.rel (0) target = $region21
    $region20: #{tpu_custom_call.1} parent=1 // pred_region
      _
    $region21: #{tpu_custom_call.1} parent=1 // pred_fallthru
      _
    // Predicated region
    $region22: #{tpu_custom_call.1} parent=1 // pred_check
      _
    $region23: #{tpu_custom_call.1} parent=1 // pred_check_branch
      %63 = sbr.rel (0) target = $region25
    $region24: #{tpu_custom_call.1} parent=1 // pred_region
      %s65 = ssub.s32 2048, 2048
      %66 = vsyncadd [#allocation9], %s65
      %s67 = sshll.u32 [#allocation8], 4
      %s68 = int_to_ptr.vmem [resolvable:$true] %s67
      %73 = dma.hbm_to_vmem [thread:$0]  %s5, 2048, %s68, [#allocation9], 128, 128, 8
    $region25: #{tpu_custom_call.1} parent=1 // pred_fallthru
      _
    // Predicated region
    $region26: #{tpu_custom_call.1} parent=1 // pred_check
      _
    $region27: #{tpu_custom_call.1} parent=1 // pred_check_branch
      %75 = sbr.rel (0) target = $region29
    $region28: #{tpu_custom_call.1} parent=1 // pred_region
      %s77 = ssub.s32 2048, 2048
      %78 = vsyncadd [#allocation9], %s77
      %s79 = sshll.u32 [#allocation10], 4
      %s80 = int_to_ptr.vmem [resolvable:$true] %s79
      %85 = dma.hbm_to_vmem [thread:$0]  %s6, 2048, %s80, [#allocation9], 128, 128, 8
    $region29: #{tpu_custom_call.1} parent=1 // pred_fallthru
      _
    // Predicated region
    $region30: #{tpu_custom_call.1} parent=1 // pred_check
      _
    $region31: #{tpu_custom_call.1} parent=1 // pred_check_branch
      %87 = sbr.rel (0) target = $region33
    $region32: #{tpu_custom_call.1} parent=1 // pred_region
      %s89 = ssub.s32 2048, 2048
      %90 = vsyncadd [#allocation12], %s89
      %s91 = sshll.u32 [#allocation11], 4
      %s92 = int_to_ptr.vmem [resolvable:$true] %s91
      %97 = dma.hbm_to_vmem [thread:$0]  %s7, 2048, %s92, [#allocation12], 128, 128, 8
    $region33: #{tpu_custom_call.1} parent=1 // pred_fallthru
      _
    // Predicated region
    $region34: #{tpu_custom_call.1} parent=1 // pred_check
      _
    $region35: #{tpu_custom_call.1} parent=1 // pred_check_branch
      %99 = sbr.rel (0) target = $region37
    $region36: #{tpu_custom_call.1} parent=1 // pred_region
      _
    $region37: #{tpu_custom_call.1} parent=1 // pred_fallthru
      _
    // Predicated region
    $region38: #{tpu_custom_call.1} parent=1 // pred_check
      _
    $region39: #{tpu_custom_call.1} parent=1 // pred_check_branch
      %101 = sbr.rel (0) target = $region41
    $region40: #{tpu_custom_call.1} parent=1 // pred_region
      %s103 = ssub.s32 1024, 1024
      %104 = vsyncadd [#allocation12], %s103
      %s105 = sshll.u32 [#allocation13], 4
      %s106 = int_to_ptr.vmem [resolvable:$true] %s105
      %111 = dma.hbm_to_vmem [thread:$0]  %s9, 1024, %s106, [#allocation12], 64, 64, 4
    $region41: #{tpu_custom_call.1} parent=1 // pred_fallthru
      _
    // Predicated region
    $region42: #{tpu_custom_call.1} parent=1 // pred_check
      _
    $region43: #{tpu_custom_call.1} parent=1 // pred_check_branch
      %113 = sbr.rel (0) target = $region45
    $region44: #{tpu_custom_call.1} parent=1 // pred_region
      %s115 = ssub.s32 1024, 1024
      %116 = vsyncadd [#allocation15], %s115
      %s117 = sshll.u32 [#allocation14], 4
      %s118 = int_to_ptr.vmem [resolvable:$true] %s117
      %123 = dma.hbm_to_vmem [thread:$0]  %s10, 1024, %s118, [#allocation15], 64, 64, 4
    $region45: #{tpu_custom_call.1} parent=1 // pred_fallthru
      _
    // Predicated region
    $region46: #{tpu_custom_call.1} parent=1 // pred_check
      _
    $region47: #{tpu_custom_call.1} parent=1 // pred_check_branch
      %125 = sbr.rel (0) target = $region49
    $region48: #{tpu_custom_call.1} parent=1 // pred_region
      %s127 = ssub.s32 1024, 1024
      %128 = vsyncadd [#allocation15], %s127
      %s129 = sshll.u32 [#allocation16], 4
      %s130 = int_to_ptr.vmem [resolvable:$true] %s129
      %135 = dma.hbm_to_vmem [thread:$0]  %s11, 1024, %s130, [#allocation15], 64, 64, 4
    $region49: #{tpu_custom_call.1} parent=1 // pred_fallthru
      _
    // Predicated region
    $region50: #{tpu_custom_call.1} parent=1 // pred_check
      _
    $region51: #{tpu_custom_call.1} parent=1 // pred_check_branch
      %137 = sbr.rel (0) target = $region53
    $region52: #{tpu_custom_call.1} parent=1 // pred_region
      _
    $region53: #{tpu_custom_call.1} parent=1 // pred_fallthru
      _
    // Predicated region
    $region54: #{tpu_custom_call.1} parent=1 // pred_check
      _
    $region55: #{tpu_custom_call.1} parent=1 // pred_check_branch
      %139 = sbr.rel (0) target = $region57
    $region56: #{tpu_custom_call.1} parent=1 // pred_region
      %140 = dma.done [#allocation3], 64
    $region57: #{tpu_custom_call.1} parent=1 // pred_fallthru
      _
    // Predicated region
    $region58: #{tpu_custom_call.1} parent=1 // pred_check
      _
    $region59: #{tpu_custom_call.1} parent=1 // pred_check_branch
      %142 = sbr.rel (0) target = $region61
    $region60: #{tpu_custom_call.1} parent=1 // pred_region
      %143 = dma.done [#allocation6], 1024
    $region61: #{tpu_custom_call.1} parent=1 // pred_fallthru
      _
    // Predicated region
    $region62: #{tpu_custom_call.1} parent=1 // pred_check
      _
    $region63: #{tpu_custom_call.1} parent=1 // pred_check_branch
      %145 = sbr.rel (0) target = $region65
    $region64: #{tpu_custom_call.1} parent=1 // pred_region
      %146 = dma.done [#allocation6], 2048
    $region65: #{tpu_custom_call.1} parent=1 // pred_fallthru
      _
    // Predicated region
    $region66: #{tpu_custom_call.1} parent=1 // pred_check
      _
    $region67: #{tpu_custom_call.1} parent=1 // pred_check_branch
      %148 = sbr.rel (0) target = $region69
    $region68: #{tpu_custom_call.1} parent=1 // pred_region
      %149 = dma.done [#allocation9], 2048
    $region69: #{tpu_custom_call.1} parent=1 // pred_fallthru
      _
    // Predicated region
    $region70: #{tpu_custom_call.1} parent=1 // pred_check
      _
    $region71: #{tpu_custom_call.1} parent=1 // pred_check_branch
      %151 = sbr.rel (0) target = $region73
    $region72: #{tpu_custom_call.1} parent=1 // pred_region
      %152 = dma.done [#allocation9], 2048
    $region73: #{tpu_custom_call.1} parent=1 // pred_fallthru
      _
    // Predicated region
    $region74: #{tpu_custom_call.1} parent=1 // pred_check
      _
    $region75: #{tpu_custom_call.1} parent=1 // pred_check_branch
      %154 = sbr.rel (0) target = $region77
    $region76: #{tpu_custom_call.1} parent=1 // pred_region
      %155 = dma.done [#allocation12], 2048
    $region77: #{tpu_custom_call.1} parent=1 // pred_fallthru
      _
    // Predicated region
    $region78: #{tpu_custom_call.1} parent=1 // pred_check
      _
    $region79: #{tpu_custom_call.1} parent=1 // pred_check_branch
      %157 = sbr.rel (0) target = $region81
    $region80: #{tpu_custom_call.1} parent=1 // pred_region
      %158 = dma.done [#allocation12], 1024
    $region81: #{tpu_custom_call.1} parent=1 // pred_fallthru
      _
    // Predicated region
    $region82: #{tpu_custom_call.1} parent=1 // pred_check
      _
    $region83: #{tpu_custom_call.1} parent=1 // pred_check_branch
      %160 = sbr.rel (0) target = $region85
    $region84: #{tpu_custom_call.1} parent=1 // pred_region
      %161 = dma.done [#allocation15], 1024
    $region85: #{tpu_custom_call.1} parent=1 // pred_fallthru
      _
    // Predicated region
    $region86: #{tpu_custom_call.1} parent=1 // pred_check
      _
    $region87: #{tpu_custom_call.1} parent=1 // pred_check_branch
      %163 = sbr.rel (0) target = $region89
    $region88: #{tpu_custom_call.1} parent=1 // pred_region
      %164 = dma.done [#allocation15], 1024
    $region89: #{tpu_custom_call.1} parent=1 // pred_fallthru
      _
    %v166 = vld [vmem:[#allocation2] sm:$0xf]
    %v167 = vld [vmem:[#allocation5] sm:$0xf]
    %v168 = vld [vmem:[#allocation5 + $0x4] sm:$0xf]
    %v169 = vld [vmem:[#allocation5 + $0x8] sm:$0xf]
    %v170 = vld [vmem:[#allocation5 + $0xc] sm:$0xf]
    %v171 = vld [vmem:[#allocation5 + $0x10] sm:$0xf]
    %v172 = vld [vmem:[#allocation5 + $0x14] sm:$0xf]
    %v173 = vld [vmem:[#allocation5 + $0x18] sm:$0xf]
    %v174 = vld [vmem:[#allocation5 + $0x1c] sm:$0xf]
    %v175 = vld [vmem:[#allocation5 + $0x20] sm:$0xf]
    %v176 = vld [vmem:[#allocation5 + $0x24] sm:$0xf]
    %v177 = vld [vmem:[#allocation5 + $0x28] sm:$0xf]
    %v178 = vld [vmem:[#allocation5 + $0x2c] sm:$0xf]
    %v179 = vld [vmem:[#allocation5 + $0x30] sm:$0xf]
    %v180 = vld [vmem:[#allocation5 + $0x34] sm:$0xf]
    %v181 = vld [vmem:[#allocation5 + $0x38] sm:$0xf]
    %v182 = vld [vmem:[#allocation5 + $0x3c] sm:$0xf]
    %v183 = vld [vmem:[%s2] sm:$0x1]
    %v185 = vlaneseq
    %v186 = vshrl.u32 %v185, 7
    %v187 = vsub.s32 0, %v186
    %v188 = vrot.slane %v183, %v187
    %v206 = vunpack.c.l.b16 %v167
    %v207 = vunpack.c.l.b16 %v168
    %v208 = vunpack.c.l.b16 %v169
    %v209 = vunpack.c.l.b16 %v170
    %v210 = vunpack.c.l.b16 %v171
    %v211 = vunpack.c.l.b16 %v172
    %v212 = vunpack.c.l.b16 %v173
    %v213 = vunpack.c.l.b16 %v174
    %v214 = vunpack.c.l.b16 %v175
    %v215 = vunpack.c.l.b16 %v176
    %v216 = vunpack.c.l.b16 %v177
    %v217 = vunpack.c.l.b16 %v178
    %v218 = vunpack.c.l.b16 %v179
    %v219 = vunpack.c.l.b16 %v180
    %v220 = vunpack.c.l.b16 %v181
    %v221 = vunpack.c.l.b16 %v182
    %v222 = vpack.c.b16 %v207, %v206
    %v223 = vpack.c.b16 %v209, %v208
    %v224 = vpack.c.b16 %v211, %v210
    %v225 = vpack.c.b16 %v213, %v212
    %v226 = vpack.c.b16 %v215, %v214
    %v227 = vpack.c.b16 %v217, %v216
    %v228 = vpack.c.b16 %v219, %v218
    %v229 = vpack.c.b16 %v221, %v220
    %238 = vmatprep.subr.bf16.mxu0 0
    %239 = vmatpush1.bf16.msra.mxu0 %v229
    %240 = vmatprep.subr.bf16.mxu0 0
    %241 = vmatpush1.bf16.msra.mxu0 %v228
    %242 = vmatprep.subr.bf16.mxu0 0
    %243 = vmatpush1.bf16.msra.mxu0 %v227
    %244 = vmatprep.subr.bf16.mxu0 0
    %245 = vmatpush1.bf16.msra.mxu0 %v226
    %246 = vmatprep.subr.bf16.mxu0 0
    %247 = vmatpush1.bf16.msra.mxu0 %v225
    %248 = vmatprep.subr.bf16.mxu0 0
    %249 = vmatpush1.bf16.msra.mxu0 %v224
    %250 = vmatprep.subr.bf16.mxu0 0
    %251 = vmatpush1.bf16.msra.mxu0 %v223
    %252 = vmatprep.subr.bf16.mxu0 0
    %253 = vmatpush1.bf16.msra.mxu0 %v222
    %254 = vmatprep.subr.bf16.mxu0 0
    %255 = vmatpush2.bf16.msra.mxu0 0
    %256 = vmatprep.subr.bf16.mxu0 0
    %257 = vmatpush2.bf16.msra.mxu0 0
    %258 = vmatprep.subr.bf16.mxu0 0
    %259 = vmatpush2.bf16.msra.mxu0 0
    %260 = vmatprep.subr.bf16.mxu0 0
    %261 = vmatpush2.bf16.msra.mxu0 0
    %262 = vmatprep.subr.bf16.mxu0 0
    %263 = vmatpush2.bf16.msra.mxu0 0
    %264 = vmatprep.subr.bf16.mxu0 0
    %265 = vmatpush2.bf16.msra.mxu0 0
    %266 = vmatprep.subr.bf16.mxu0 0
    %267 = vmatpush2.bf16.msra.mxu0 0
    %268 = vmatprep.subr.bf16.mxu0 0
    %269 = vmatpush2.bf16.msra.mxu0 0
    %270 = vmatprep.mubr.bf16.mxu0 0
    %271 = vmatmul.mubr.bf16.gmra.mxu0 %v166
    %v272 = vpop.f32.mrf.mxu0
    %v273 = vadd.f32 %v188, %v272
    %v274 = vpop.f32.mrf.mxu0
    %v275 = vpop.f32.mrf.mxu0
    %v276 = vpop.f32.mrf.mxu0
    %277 = vdwg.mxu0
    %v278 = vpack.c.bf16 %v273, %v273
    %v279 = vld [vmem:[#allocation7] sm:$0xff]
    %v280 = vld [vmem:[#allocation7 + $0x8] sm:$0xff]
    %v281 = vld [vmem:[#allocation7 + $0x10] sm:$0xff]
    %v282 = vld [vmem:[#allocation7 + $0x18] sm:$0xff]
    %v283 = vld [vmem:[#allocation7 + $0x20] sm:$0xff]
    %v284 = vld [vmem:[#allocation7 + $0x28] sm:$0xff]
    %v285 = vld [vmem:[#allocation7 + $0x30] sm:$0xff]
    %v286 = vld [vmem:[#allocation7 + $0x38] sm:$0xff]
    %v287 = vld [vmem:[#allocation7 + $0x40] sm:$0xff]
    %v288 = vld [vmem:[#allocation7 + $0x48] sm:$0xff]
    %v289 = vld [vmem:[#allocation7 + $0x50] sm:$0xff]
    %v290 = vld [vmem:[#allocation7 + $0x58] sm:$0xff]
    %v291 = vld [vmem:[#allocation7 + $0x60] sm:$0xff]
    %v292 = vld [vmem:[#allocation7 + $0x68] sm:$0xff]
    %v293 = vld [vmem:[#allocation7 + $0x70] sm:$0xff]
    %v294 = vld [vmem:[#allocation7 + $0x78] sm:$0xff]
    %v295 = vld [vmem:[%s4] sm:$0x3]
    %v297 = vlaneseq
    %v298 = vshrl.u32 %v297, 7
    %v299 = vsub.s32 0, %v298
    %v300 = vrot.slane %v295, %v299
    %v301 = vlaneseq
    %v302 = vshrl.u32 %v301, 7
    %v303 = vsub.s32 1, %v302
    %v304 = vrot.slane %v295, %v303
    %v323 = vunpack.c.l.b16 %v279
    %v324 = vunpack.c.h.b16 %v279
    %v325 = vunpack.c.l.b16 %v280
    %v326 = vunpack.c.h.b16 %v280
    %v327 = vunpack.c.l.b16 %v281
    %v328 = vunpack.c.h.b16 %v281
    %v329 = vunpack.c.l.b16 %v282
    %v330 = vunpack.c.h.b16 %v282
    %v331 = vunpack.c.l.b16 %v283
    %v332 = vunpack.c.h.b16 %v283
    %v333 = vunpack.c.l.b16 %v284
    %v334 = vunpack.c.h.b16 %v284
    %v335 = vunpack.c.l.b16 %v285
    %v336 = vunpack.c.h.b16 %v285
    %v337 = vunpack.c.l.b16 %v286
    %v338 = vunpack.c.h.b16 %v286
    %v339 = vunpack.c.l.b16 %v287
    %v340 = vunpack.c.h.b16 %v287
    %v341 = vunpack.c.l.b16 %v288
    %v342 = vunpack.c.h.b16 %v288
    %v343 = vunpack.c.l.b16 %v289
    %v344 = vunpack.c.h.b16 %v289
    %v345 = vunpack.c.l.b16 %v290
    %v346 = vunpack.c.h.b16 %v290
    %v347 = vunpack.c.l.b16 %v291
    %v348 = vunpack.c.h.b16 %v291
    %v349 = vunpack.c.l.b16 %v292
    %v350 = vunpack.c.h.b16 %v292
    %v351 = vunpack.c.l.b16 %v293
    %v352 = vunpack.c.h.b16 %v293
    %v353 = vunpack.c.l.b16 %v294
    %v354 = vunpack.c.h.b16 %v294
    %v355 = vpack.c.b16 %v325, %v323
    %v356 = vpack.c.b16 %v326, %v324
    %v357 = vpack.c.b16 %v329, %v327
    %v358 = vpack.c.b16 %v330, %v328
    %v359 = vpack.c.b16 %v333, %v331
    %v360 = vpack.c.b16 %v334, %v332
    %v361 = vpack.c.b16 %v337, %v335
    %v362 = vpack.c.b16 %v338, %v336
    %v363 = vpack.c.b16 %v341, %v339
    %v364 = vpack.c.b16 %v342, %v340
    %v365 = vpack.c.b16 %v345, %v343
    %v366 = vpack.c.b16 %v346, %v344
    %v367 = vpack.c.b16 %v349, %v347
    %v368 = vpack.c.b16 %v350, %v348
    %v369 = vpack.c.b16 %v353, %v351
    %v370 = vpack.c.b16 %v354, %v352
    %387 = vmatprep.subr.bf16.mxu0 %v370
    %388 = vmatpush1.bf16.msra.mxu0 %v369
    %389 = vmatprep.subr.bf16.mxu0 %v368
    %390 = vmatpush1.bf16.msra.mxu0 %v367
    %391 = vmatprep.subr.bf16.mxu0 %v366
    %392 = vmatpush1.bf16.msra.mxu0 %v365
    %393 = vmatprep.subr.bf16.mxu0 %v364
    %394 = vmatpush1.bf16.msra.mxu0 %v363
    %395 = vmatprep.subr.bf16.mxu0 %v362
    %396 = vmatpush1.bf16.msra.mxu0 %v361
    %397 = vmatprep.subr.bf16.mxu0 %v360
    %398 = vmatpush1.bf16.msra.mxu0 %v359
    %399 = vmatprep.subr.bf16.mxu0 %v358
    %400 = vmatpush1.bf16.msra.mxu0 %v357
    %401 = vmatprep.subr.bf16.mxu0 %v356
    %402 = vmatpush1.bf16.msra.mxu0 %v355
    %403 = vmatprep.subr.bf16.mxu0 0
    %404 = vmatpush2.bf16.msra.mxu0 0
    %405 = vmatprep.subr.bf16.mxu0 0
    %406 = vmatpush2.bf16.msra.mxu0 0
    %407 = vmatprep.subr.bf16.mxu0 0
    %408 = vmatpush2.bf16.msra.mxu0 0
    %409 = vmatprep.subr.bf16.mxu0 0
    %410 = vmatpush2.bf16.msra.mxu0 0
    %411 = vmatprep.subr.bf16.mxu0 0
    %412 = vmatpush2.bf16.msra.mxu0 0
    %413 = vmatprep.subr.bf16.mxu0 0
    %414 = vmatpush2.bf16.msra.mxu0 0
    %415 = vmatprep.subr.bf16.mxu0 0
    %416 = vmatpush2.bf16.msra.mxu0 0
    %417 = vmatprep.subr.bf16.mxu0 0
    %418 = vmatpush2.bf16.msra.mxu0 0
    %419 = vmatprep.mubr.bf16.mxu0 0
    %420 = vmatmul.mubr.bf16.gmra.mxu0 %v278
    %v421 = vpop.f32.mrf.mxu0
    %v422 = vadd.f32 %v300, %v421
    %v423 = vpop.f32.mrf.mxu0
    %v424 = vadd.f32 %v304, %v423
    %v425 = vpop.f32.mrf.mxu0
    %v426 = vpop.f32.mrf.mxu0
    %427 = vdwg.mxu0
    %v428 = vand.u32 2147483647, %v422
    %vm429 = vcmp.le.f32.partialorder %v428, 0.7853982
    %vm430 = vcmp.lt.s32.totalorder %v422, 0
    %v431 = vand.u32 %v422, 2139095040
    %v432 = vshrl.u32 %v431, 23
    %v433 = vsub.s32 %v432, 127
    %v434 = vand.u32 2147483647, %v422
    %v435 = vand.u32 %v434, 8388607
    %v436 = vor.u32 %v435, 8388608
    %v437 = vsub.s32 0, %v436
    %v438 = vadd.s32 %v433, 1
    %vm439 = vcmp.gt.s32.totalorder %v438, 0
    %v440 = vsel %vm439, %v438, 0
    %v441 = vshrl.u32 %v440, 5
    %v442 = vand.u32 %v440, 31
    %v443 = vsub.s32 32, %v442
    %v444 = vshrl.u32 683565275, %v443
    %v445 = vshll.u32 683565275, %v442
    %v446 = vshrl.u32 2475754826, %v443
    %v447 = vor.u32 %v445, %v446
    %v448 = vshll.u32 2475754826, %v442
    %v449 = vshrl.u32 2131351028, %v443
    %v450 = vor.u32 %v448, %v449
    %v451 = vshll.u32 2131351028, %v442
    %v452 = vshrl.u32 2102212464, %v443
    %v453 = vor.u32 %v451, %v452
    %v454 = vshll.u32 2102212464, %v442
    %v455 = vshrl.u32 920167782, %v443
    %v456 = vor.u32 %v454, %v455
    %v457 = vshll.u32 920167782, %v442
    %v458 = vshrl.u32 1326507024, %v443
    %v459 = vor.u32 %v457, %v458
    %vm460 = vcmp.lt.s32.totalorder %v441, 1
    %vm461 = vcmp.lt.s32.totalorder %v441, 2
    %vm462 = vcmp.lt.s32.totalorder %v441, 3
    %vm463 = vcmp.lt.s32.totalorder %v441, 4
    %v464 = vsel %vm460, %v444, %v447
    %v465 = vsel %vm463, %v453, 2102212464
    %v466 = vsel %vm462, %v450, %v465
    %v467 = vsel %vm461, %v464, %v466
    %v468 = vsel %vm460, %v447, %v450
    %v469 = vsel %vm463, %v456, 920167782
    %v470 = vsel %vm462, %v453, %v469
    %v471 = vsel %vm461, %v468, %v470
    %v472 = vsel %vm460, %v450, %v453
    %v473 = vsel %vm463, %v459, 1326507024
    %v474 = vsel %vm462, %v456, %v473
    %v475 = vsel %vm461, %v472, %v474
    %v476 = vshll.u32 %v436, 8
    %v477 = vmul.u32.u64.compose %v476, %v475
    %v478 = vextract.low.u32 %v477
    %v479 = vextract.high.u32 %v477
    %v480 = vmul.u32.u64.compose %v476, %v471
    %v481 = vextract.low.u32 %v480
    %v482 = vextract.high.u32 %v480
    %v483 = vmul.u32 %v476, %v467
    %v484 = vadd.s32 %v479, %v481
    %vm485 = vc.u32 %v479, %v481
    %v486 = vadd.s32 %v482, 1
    %v487 = vsel %vm485, %v486, %v482
    %v488 = vadd.s32 %v483, %v487
    %v489 = vadd.s32 %v488, 536870912
    %v490 = vshrl.u32 %v489, 30
    %v491 = vshll.u32 %v490, 30
    %v492 = vsub.s32 %v488, %v491
    %vm493 = vcmp.lt.s32.totalorder %v492, 0
    %v494 = vsub.s32 0, %v492
    %v495 = vsel %vm493, %v494, %v492
    %v496 = vclz %v495
    %v497 = vsub.s32 %v496, 2
    %vm498 = vcmp.gt.s32.totalorder 0, %v497
    %v499 = vsel %vm498, 0, %v497
    %v500 = vsub.s32 32, %v499
    %v501 = vshll.u32 %v492, %v499
    %v502 = vshrl.u32 %v484, %v500
    %v503 = vor.u32 %v501, %v502
    %v504 = vsub.s32 4294967266, %v499
    %v505 = vadd.s32 %v504, 127
    %v506 = vshll.u32 %v505, 23
    %v507 = vor.u32 4788187, %v506
    %v508 = vand.u32 2147483647, %v507
    %v510 = vcvt.s32.f32 %v503
    %v511 = vmul.f32 %v510, %v508
    %v512 = vxor.u32 %v511, 2147483648
    %v513 = vsel %vm430, %v512, %v511
    %v514 = vsub.s32 4, %v490
    %v515 = vsel %vm430, %v514, %v490
    %v516 = vsel %vm429, %v422, %v513
    %v517 = vsel %vm429, 0, %v515
    %v518 = vcosq.f32.pop %v516
    %v519 = vsinq.f32.pop %v516
    %vm520 = vweird.f32 %v422
    %v521 = vand.u32 %v517, 3
    %vm522 = vcmp.lt.s32.totalorder %v521, 2
    %vm523 = vcmp.eq.s32.totalorder %v521, 0
    %v524 = vxor.u32 %v519, 2147483648
    %v525 = vsel %vm523, %v518, %v524
    %vm526 = vcmp.eq.s32.totalorder %v521, 2
    %v527 = vxor.u32 %v518, 2147483648
    %v528 = vsel %vm526, %v527, %v519
    %v529 = vsel %vm522, %v525, %v528
    %v530 = vsel %vm520, nan, %v529
    %v531 = vpack.c.bf16 %v530, %v530
    %v532 = vand.u32 2147483647, %v422
    %vm533 = vcmp.le.f32.partialorder %v532, 0.7853982
    %vm534 = vcmp.lt.s32.totalorder %v422, 0
    %v535 = vand.u32 %v422, 2139095040
    %v536 = vshrl.u32 %v535, 23
    %v537 = vsub.s32 %v536, 127
    %v538 = vand.u32 2147483647, %v422
    %v539 = vand.u32 %v538, 8388607
    %v540 = vor.u32 %v539, 8388608
    %v541 = vsub.s32 0, %v540
    %v542 = vadd.s32 %v537, 1
    %vm543 = vcmp.gt.s32.totalorder %v542, 0
    %v544 = vsel %vm543, %v542, 0
    %v545 = vshrl.u32 %v544, 5
    %v546 = vand.u32 %v544, 31
    %v547 = vsub.s32 32, %v546
    %v548 = vshrl.u32 683565275, %v547
    %v549 = vshll.u32 683565275, %v546
    %v550 = vshrl.u32 2475754826, %v547
    %v551 = vor.u32 %v549, %v550
    %v552 = vshll.u32 2475754826, %v546
    %v553 = vshrl.u32 2131351028, %v547
    %v554 = vor.u32 %v552, %v553
    %v555 = vshll.u32 2131351028, %v546
    %v556 = vshrl.u32 2102212464, %v547
    %v557 = vor.u32 %v555, %v556
    %v558 = vshll.u32 2102212464, %v546
    %v559 = vshrl.u32 920167782, %v547
    %v560 = vor.u32 %v558, %v559
    %v561 = vshll.u32 920167782, %v546
    %v562 = vshrl.u32 1326507024, %v547
    %v563 = vor.u32 %v561, %v562
    %vm564 = vcmp.lt.s32.totalorder %v545, 1
    %vm565 = vcmp.lt.s32.totalorder %v545, 2
    %vm566 = vcmp.lt.s32.totalorder %v545, 3
    %vm567 = vcmp.lt.s32.totalorder %v545, 4
    %v568 = vsel %vm564, %v548, %v551
    %v569 = vsel %vm567, %v557, 2102212464
    %v570 = vsel %vm566, %v554, %v569
    %v571 = vsel %vm565, %v568, %v570
    %v572 = vsel %vm564, %v551, %v554
    %v573 = vsel %vm567, %v560, 920167782
    %v574 = vsel %vm566, %v557, %v573
    %v575 = vsel %vm565, %v572, %v574
    %v576 = vsel %vm564, %v554, %v557
    %v577 = vsel %vm567, %v563, 1326507024
    %v578 = vsel %vm566, %v560, %v577
    %v579 = vsel %vm565, %v576, %v578
    %v580 = vshll.u32 %v540, 8
    %v581 = vmul.u32.u64.compose %v580, %v579
    %v582 = vextract.low.u32 %v581
    %v583 = vextract.high.u32 %v581
    %v584 = vmul.u32.u64.compose %v580, %v575
    %v585 = vextract.low.u32 %v584
    %v586 = vextract.high.u32 %v584
    %v587 = vmul.u32 %v580, %v571
    %v588 = vadd.s32 %v583, %v585
    %vm589 = vc.u32 %v583, %v585
    %v590 = vadd.s32 %v586, 1
    %v591 = vsel %vm589, %v590, %v586
    %v592 = vadd.s32 %v587, %v591
    %v593 = vadd.s32 %v592, 536870912
    %v594 = vshrl.u32 %v593, 30
    %v595 = vshll.u32 %v594, 30
    %v596 = vsub.s32 %v592, %v595
    %vm597 = vcmp.lt.s32.totalorder %v596, 0
    %v598 = vsub.s32 0, %v596
    %v599 = vsel %vm597, %v598, %v596
    %v600 = vclz %v599
    %v601 = vsub.s32 %v600, 2
    %vm602 = vcmp.gt.s32.totalorder 0, %v601
    %v603 = vsel %vm602, 0, %v601
    %v604 = vsub.s32 32, %v603
    %v605 = vshll.u32 %v596, %v603
    %v606 = vshrl.u32 %v588, %v604
    %v607 = vor.u32 %v605, %v606
    %v608 = vsub.s32 4294967266, %v603
    %v609 = vadd.s32 %v608, 127
    %v610 = vshll.u32 %v609, 23
    %v611 = vor.u32 4788187, %v610
    %v612 = vand.u32 2147483647, %v611
    %v614 = vcvt.s32.f32 %v607
    %v615 = vmul.f32 %v614, %v612
    %v616 = vxor.u32 %v615, 2147483648
    %v617 = vsel %vm534, %v616, %v615
    %v618 = vsub.s32 4, %v594
    %v619 = vsel %vm534, %v618, %v594
    %v620 = vsel %vm533, %v422, %v617
    %v621 = vsel %vm533, 0, %v619
    %v622 = vcosq.f32.pop %v620
    %v623 = vsinq.f32.pop %v620
    %vm624 = vweird.f32 %v422
    %v625 = vadd.s32 %v621, 3
    %v626 = vand.u32 %v625, 3
    %vm627 = vcmp.lt.s32.totalorder %v626, 2
    %vm628 = vcmp.eq.s32.totalorder %v626, 0
    %v629 = vxor.u32 %v623, 2147483648
    %v630 = vsel %vm628, %v622, %v629
    %vm631 = vcmp.eq.s32.totalorder %v626, 2
    %v632 = vxor.u32 %v622, 2147483648
    %v633 = vsel %vm631, %v632, %v623
    %v634 = vsel %vm627, %v630, %v633
    %v635 = vsel %vm624, nan, %v634
    %v636 = vpack.c.bf16 %v635, %v635
    %v637 = vmul.f32 %v424, 0.5
    %v638 = vmul.f32 %v424, 0.70710677
    %v639 = verf.f32.pop %v638
    %v640 = vadd.f32 %v639, 1.0
    %v641 = vmul.f32 %v637, %v640
    %v642 = vpack.c.bf16 %v641, %v641
    %v643 = vld [vmem:[#allocation8] sm:$0xff]
    %v644 = vld [vmem:[#allocation8 + $0x8] sm:$0xff]
    %v645 = vld [vmem:[#allocation8 + $0x10] sm:$0xff]
    %v646 = vld [vmem:[#allocation8 + $0x18] sm:$0xff]
    %v647 = vld [vmem:[#allocation8 + $0x20] sm:$0xff]
    %v648 = vld [vmem:[#allocation8 + $0x28] sm:$0xff]
    %v649 = vld [vmem:[#allocation8 + $0x30] sm:$0xff]
    %v650 = vld [vmem:[#allocation8 + $0x38] sm:$0xff]
    %v651 = vld [vmem:[#allocation8 + $0x40] sm:$0xff]
    %v652 = vld [vmem:[#allocation8 + $0x48] sm:$0xff]
    %v653 = vld [vmem:[#allocation8 + $0x50] sm:$0xff]
    %v654 = vld [vmem:[#allocation8 + $0x58] sm:$0xff]
    %v655 = vld [vmem:[#allocation8 + $0x60] sm:$0xff]
    %v656 = vld [vmem:[#allocation8 + $0x68] sm:$0xff]
    %v657 = vld [vmem:[#allocation8 + $0x70] sm:$0xff]
    %v658 = vld [vmem:[#allocation8 + $0x78] sm:$0xff]
    %v659 = vld [vmem:[#allocation10] sm:$0xff]
    %v660 = vld [vmem:[#allocation10 + $0x8] sm:$0xff]
    %v661 = vld [vmem:[#allocation10 + $0x10] sm:$0xff]
    %v662 = vld [vmem:[#allocation10 + $0x18] sm:$0xff]
    %v663 = vld [vmem:[#allocation10 + $0x20] sm:$0xff]
    %v664 = vld [vmem:[#allocation10 + $0x28] sm:$0xff]
    %v665 = vld [vmem:[#allocation10 + $0x30] sm:$0xff]
    %v666 = vld [vmem:[#allocation10 + $0x38] sm:$0xff]
    %v667 = vld [vmem:[#allocation10 + $0x40] sm:$0xff]
    %v668 = vld [vmem:[#allocation10 + $0x48] sm:$0xff]
    %v669 = vld [vmem:[#allocation10 + $0x50] sm:$0xff]
    %v670 = vld [vmem:[#allocation10 + $0x58] sm:$0xff]
    %v671 = vld [vmem:[#allocation10 + $0x60] sm:$0xff]
    %v672 = vld [vmem:[#allocation10 + $0x68] sm:$0xff]
    %v673 = vld [vmem:[#allocation10 + $0x70] sm:$0xff]
    %v674 = vld [vmem:[#allocation10 + $0x78] sm:$0xff]
    %v691 = vunpack.c.l.b16 %v659
    %v692 = vunpack.c.h.b16 %v659
    %v693 = vunpack.c.l.b16 %v660
    %v694 = vunpack.c.h.b16 %v660
    %v695 = vunpack.c.l.b16 %v661
    %v696 = vunpack.c.h.b16 %v661
    %v697 = vunpack.c.l.b16 %v662
    %v698 = vunpack.c.h.b16 %v662
    %v699 = vunpack.c.l.b16 %v663
    %v700 = vunpack.c.h.b16 %v663
    %v701 = vunpack.c.l.b16 %v664
    %v702 = vunpack.c.h.b16 %v664
    %v703 = vunpack.c.l.b16 %v665
    %v704 = vunpack.c.h.b16 %v665
    %v705 = vunpack.c.l.b16 %v666
    %v706 = vunpack.c.h.b16 %v666
    %v707 = vunpack.c.l.b16 %v667
    %v708 = vunpack.c.h.b16 %v667
    %v709 = vunpack.c.l.b16 %v668
    %v710 = vunpack.c.h.b16 %v668
    %v711 = vunpack.c.l.b16 %v669
    %v712 = vunpack.c.h.b16 %v669
    %v713 = vunpack.c.l.b16 %v670
    %v714 = vunpack.c.h.b16 %v670
    %v715 = vunpack.c.l.b16 %v671
    %v716 = vunpack.c.h.b16 %v671
    %v717 = vunpack.c.l.b16 %v672
    %v718 = vunpack.c.h.b16 %v672
    %v719 = vunpack.c.l.b16 %v673
    %v720 = vunpack.c.h.b16 %v673
    %v721 = vunpack.c.l.b16 %v674
    %v722 = vunpack.c.h.b16 %v674
    %v723 = vpack.c.b16 %v693, %v691
    %v724 = vpack.c.b16 %v694, %v692
    %v725 = vpack.c.b16 %v697, %v695
    %v726 = vpack.c.b16 %v698, %v696
    %v727 = vpack.c.b16 %v701, %v699
    %v728 = vpack.c.b16 %v702, %v700
    %v729 = vpack.c.b16 %v705, %v703
    %v730 = vpack.c.b16 %v706, %v704
    %v731 = vpack.c.b16 %v709, %v707
    %v732 = vpack.c.b16 %v710, %v708
    %v733 = vpack.c.b16 %v713, %v711
    %v734 = vpack.c.b16 %v714, %v712
    %v735 = vpack.c.b16 %v717, %v715
    %v736 = vpack.c.b16 %v718, %v716
    %v737 = vpack.c.b16 %v721, %v719
    %v738 = vpack.c.b16 %v722, %v720
    %755 = vmatprep.subr.bf16.mxu0 %v738
    %756 = vmatpush1.bf16.msra.mxu0 %v737
    %757 = vmatprep.subr.bf16.mxu0 %v736
    %758 = vmatpush1.bf16.msra.mxu0 %v735
    %759 = vmatprep.subr.bf16.mxu0 %v734
    %760 = vmatpush1.bf16.msra.mxu0 %v733
    %761 = vmatprep.subr.bf16.mxu0 %v732
    %762 = vmatpush1.bf16.msra.mxu0 %v731
    %763 = vmatprep.subr.bf16.mxu0 %v730
    %764 = vmatpush1.bf16.msra.mxu0 %v729
    %765 = vmatprep.subr.bf16.mxu0 %v728
    %766 = vmatpush1.bf16.msra.mxu0 %v727
    %767 = vmatprep.subr.bf16.mxu0 %v726
    %768 = vmatpush1.bf16.msra.mxu0 %v725
    %769 = vmatprep.subr.bf16.mxu0 %v724
    %770 = vmatpush1.bf16.msra.mxu0 %v723
    %771 = vmatprep.subr.bf16.mxu0 0
    %772 = vmatpush2.bf16.msra.mxu0 0
    %773 = vmatprep.subr.bf16.mxu0 0
    %774 = vmatpush2.bf16.msra.mxu0 0
    %775 = vmatprep.subr.bf16.mxu0 0
    %776 = vmatpush2.bf16.msra.mxu0 0
    %777 = vmatprep.subr.bf16.mxu0 0
    %778 = vmatpush2.bf16.msra.mxu0 0
    %779 = vmatprep.subr.bf16.mxu0 0
    %780 = vmatpush2.bf16.msra.mxu0 0
    %781 = vmatprep.subr.bf16.mxu0 0
    %782 = vmatpush2.bf16.msra.mxu0 0
    %783 = vmatprep.subr.bf16.mxu0 0
    %784 = vmatpush2.bf16.msra.mxu0 0
    %785 = vmatprep.subr.bf16.mxu0 0
    %786 = vmatpush2.bf16.msra.mxu0 0
    %787 = vmatprep.mubr.bf16.mxu0 0
    %788 = vmatmul.mubr.bf16.gmra.mxu0 %v636
    %v789 = vpop.f32.mrf.mxu0
    %v790 = vadd.f32 0.0, %v789
    %v791 = vpop.f32.mrf.mxu0
    %v792 = vadd.f32 0.0, %v791
    %v793 = vpop.f32.mrf.mxu0
    %v794 = vpop.f32.mrf.mxu0
    %795 = vdwg.mxu0
    %v812 = vunpack.c.l.b16 %v643
    %v813 = vunpack.c.h.b16 %v643
    %v814 = vunpack.c.l.b16 %v644
    %v815 = vunpack.c.h.b16 %v644
    %v816 = vunpack.c.l.b16 %v645
    %v817 = vunpack.c.h.b16 %v645
    %v818 = vunpack.c.l.b16 %v646
    %v819 = vunpack.c.h.b16 %v646
    %v820 = vunpack.c.l.b16 %v647
    %v821 = vunpack.c.h.b16 %v647
    %v822 = vunpack.c.l.b16 %v648
    %v823 = vunpack.c.h.b16 %v648
    %v824 = vunpack.c.l.b16 %v649
    %v825 = vunpack.c.h.b16 %v649
    %v826 = vunpack.c.l.b16 %v650
    %v827 = vunpack.c.h.b16 %v650
    %v828 = vunpack.c.l.b16 %v651
    %v829 = vunpack.c.h.b16 %v651
    %v830 = vunpack.c.l.b16 %v652
    %v831 = vunpack.c.h.b16 %v652
    %v832 = vunpack.c.l.b16 %v653
    %v833 = vunpack.c.h.b16 %v653
    %v834 = vunpack.c.l.b16 %v654
    %v835 = vunpack.c.h.b16 %v654
    %v836 = vunpack.c.l.b16 %v655
    %v837 = vunpack.c.h.b16 %v655
    %v838 = vunpack.c.l.b16 %v656
    %v839 = vunpack.c.h.b16 %v656
    %v840 = vunpack.c.l.b16 %v657
    %v841 = vunpack.c.h.b16 %v657
    %v842 = vunpack.c.l.b16 %v658
    %v843 = vunpack.c.h.b16 %v658
    %v844 = vpack.c.b16 %v814, %v812
    %v845 = vpack.c.b16 %v815, %v813
    %v846 = vpack.c.b16 %v818, %v816
    %v847 = vpack.c.b16 %v819, %v817
    %v848 = vpack.c.b16 %v822, %v820
    %v849 = vpack.c.b16 %v823, %v821
    %v850 = vpack.c.b16 %v826, %v824
    %v851 = vpack.c.b16 %v827, %v825
    %v852 = vpack.c.b16 %v830, %v828
    %v853 = vpack.c.b16 %v831, %v829
    %v854 = vpack.c.b16 %v834, %v832
    %v855 = vpack.c.b16 %v835, %v833
    %v856 = vpack.c.b16 %v838, %v836
    %v857 = vpack.c.b16 %v839, %v837
    %v858 = vpack.c.b16 %v842, %v840
    %v859 = vpack.c.b16 %v843, %v841
    %876 = vmatprep.subr.bf16.mxu0 %v859
    %877 = vmatpush1.bf16.msra.mxu0 %v858
    %878 = vmatprep.subr.bf16.mxu0 %v857
    %879 = vmatpush1.bf16.msra.mxu0 %v856
    %880 = vmatprep.subr.bf16.mxu0 %v855
    %881 = vmatpush1.bf16.msra.mxu0 %v854
    %882 = vmatprep.subr.bf16.mxu0 %v853
    %883 = vmatpush1.bf16.msra.mxu0 %v852
    %884 = vmatprep.subr.bf16.mxu0 %v851
    %885 = vmatpush1.bf16.msra.mxu0 %v850
    %886 = vmatprep.subr.bf16.mxu0 %v849
    %887 = vmatpush1.bf16.msra.mxu0 %v848
    %888 = vmatprep.subr.bf16.mxu0 %v847
    %889 = vmatpush1.bf16.msra.mxu0 %v846
    %890 = vmatprep.subr.bf16.mxu0 %v845
    %891 = vmatpush1.bf16.msra.mxu0 %v844
    %892 = vmatprep.subr.bf16.mxu0 0
    %893 = vmatpush2.bf16.msra.mxu0 0
    %894 = vmatprep.subr.bf16.mxu0 0
    %895 = vmatpush2.bf16.msra.mxu0 0
    %896 = vmatprep.subr.bf16.mxu0 0
    %897 = vmatpush2.bf16.msra.mxu0 0
    %898 = vmatprep.subr.bf16.mxu0 0
    %899 = vmatpush2.bf16.msra.mxu0 0
    %900 = vmatprep.subr.bf16.mxu0 0
    %901 = vmatpush2.bf16.msra.mxu0 0
    %902 = vmatprep.subr.bf16.mxu0 0
    %903 = vmatpush2.bf16.msra.mxu0 0
    %904 = vmatprep.subr.bf16.mxu0 0
    %905 = vmatpush2.bf16.msra.mxu0 0
    %906 = vmatprep.subr.bf16.mxu0 0
    %907 = vmatpush2.bf16.msra.mxu0 0
    %908 = vmatprep.mubr.bf16.mxu0 0
    %909 = vmatmul.mubr.bf16.gmra.mxu0 %v531
    %v910 = vpop.f32.mrf.mxu0
    %v911 = vadd.f32 %v790, %v910
    %v912 = vpop.f32.mrf.mxu0
    %v913 = vadd.f32 %v792, %v912
    %v914 = vpop.f32.mrf.mxu0
    %v915 = vpop.f32.mrf.mxu0
    %916 = vdwg.mxu0
    %v917 = vld [vmem:[#allocation11] sm:$0xff]
    %v918 = vld [vmem:[#allocation11 + $0x8] sm:$0xff]
    %v919 = vld [vmem:[#allocation11 + $0x10] sm:$0xff]
    %v920 = vld [vmem:[#allocation11 + $0x18] sm:$0xff]
    %v921 = vld [vmem:[#allocation11 + $0x20] sm:$0xff]
    %v922 = vld [vmem:[#allocation11 + $0x28] sm:$0xff]
    %v923 = vld [vmem:[#allocation11 + $0x30] sm:$0xff]
    %v924 = vld [vmem:[#allocation11 + $0x38] sm:$0xff]
    %v925 = vld [vmem:[#allocation11 + $0x40] sm:$0xff]
    %v926 = vld [vmem:[#allocation11 + $0x48] sm:$0xff]
    %v927 = vld [vmem:[#allocation11 + $0x50] sm:$0xff]
    %v928 = vld [vmem:[#allocation11 + $0x58] sm:$0xff]
    %v929 = vld [vmem:[#allocation11 + $0x60] sm:$0xff]
    %v930 = vld [vmem:[#allocation11 + $0x68] sm:$0xff]
    %v931 = vld [vmem:[#allocation11 + $0x70] sm:$0xff]
    %v932 = vld [vmem:[#allocation11 + $0x78] sm:$0xff]
    %v949 = vunpack.c.l.b16 %v917
    %v950 = vunpack.c.h.b16 %v917
    %v951 = vunpack.c.l.b16 %v918
    %v952 = vunpack.c.h.b16 %v918
    %v953 = vunpack.c.l.b16 %v919
    %v954 = vunpack.c.h.b16 %v919
    %v955 = vunpack.c.l.b16 %v920
    %v956 = vunpack.c.h.b16 %v920
    %v957 = vunpack.c.l.b16 %v921
    %v958 = vunpack.c.h.b16 %v921
    %v959 = vunpack.c.l.b16 %v922
    %v960 = vunpack.c.h.b16 %v922
    %v961 = vunpack.c.l.b16 %v923
    %v962 = vunpack.c.h.b16 %v923
    %v963 = vunpack.c.l.b16 %v924
    %v964 = vunpack.c.h.b16 %v924
    %v965 = vunpack.c.l.b16 %v925
    %v966 = vunpack.c.h.b16 %v925
    %v967 = vunpack.c.l.b16 %v926
    %v968 = vunpack.c.h.b16 %v926
    %v969 = vunpack.c.l.b16 %v927
    %v970 = vunpack.c.h.b16 %v927
    %v971 = vunpack.c.l.b16 %v928
    %v972 = vunpack.c.h.b16 %v928
    %v973 = vunpack.c.l.b16 %v929
    %v974 = vunpack.c.h.b16 %v929
    %v975 = vunpack.c.l.b16 %v930
    %v976 = vunpack.c.h.b16 %v930
    %v977 = vunpack.c.l.b16 %v931
    %v978 = vunpack.c.h.b16 %v931
    %v979 = vunpack.c.l.b16 %v932
    %v980 = vunpack.c.h.b16 %v932
    %v981 = vpack.c.b16 %v951, %v949
    %v982 = vpack.c.b16 %v952, %v950
    %v983 = vpack.c.b16 %v955, %v953
    %v984 = vpack.c.b16 %v956, %v954
    %v985 = vpack.c.b16 %v959, %v957
    %v986 = vpack.c.b16 %v960, %v958
    %v987 = vpack.c.b16 %v963, %v961
    %v988 = vpack.c.b16 %v964, %v962
    %v989 = vpack.c.b16 %v967, %v965
    %v990 = vpack.c.b16 %v968, %v966
    %v991 = vpack.c.b16 %v971, %v969
    %v992 = vpack.c.b16 %v972, %v970
    %v993 = vpack.c.b16 %v975, %v973
    %v994 = vpack.c.b16 %v976, %v974
    %v995 = vpack.c.b16 %v979, %v977
    %v996 = vpack.c.b16 %v980, %v978
    %1013 = vmatprep.subr.bf16.mxu0 %v996
    %1014 = vmatpush1.bf16.msra.mxu0 %v995
    %1015 = vmatprep.subr.bf16.mxu0 %v994
    %1016 = vmatpush1.bf16.msra.mxu0 %v993
    %1017 = vmatprep.subr.bf16.mxu0 %v992
    %1018 = vmatpush1.bf16.msra.mxu0 %v991
    %1019 = vmatprep.subr.bf16.mxu0 %v990
    %1020 = vmatpush1.bf16.msra.mxu0 %v989
    %1021 = vmatprep.subr.bf16.mxu0 %v988
    %1022 = vmatpush1.bf16.msra.mxu0 %v987
    %1023 = vmatprep.subr.bf16.mxu0 %v986
    %1024 = vmatpush1.bf16.msra.mxu0 %v985
    %1025 = vmatprep.subr.bf16.mxu0 %v984
    %1026 = vmatpush1.bf16.msra.mxu0 %v983
    %1027 = vmatprep.subr.bf16.mxu0 %v982
    %1028 = vmatpush1.bf16.msra.mxu0 %v981
    %1029 = vmatprep.subr.bf16.mxu0 0
    %1030 = vmatpush2.bf16.msra.mxu0 0
    %1031 = vmatprep.subr.bf16.mxu0 0
    %1032 = vmatpush2.bf16.msra.mxu0 0
    %1033 = vmatprep.subr.bf16.mxu0 0
    %1034 = vmatpush2.bf16.msra.mxu0 0
    %1035 = vmatprep.subr.bf16.mxu0 0
    %1036 = vmatpush2.bf16.msra.mxu0 0
    %1037 = vmatprep.subr.bf16.mxu0 0
    %1038 = vmatpush2.bf16.msra.mxu0 0
    %1039 = vmatprep.subr.bf16.mxu0 0
    %1040 = vmatpush2.bf16.msra.mxu0 0
    %1041 = vmatprep.subr.bf16.mxu0 0
    %1042 = vmatpush2.bf16.msra.mxu0 0
    %1043 = vmatprep.subr.bf16.mxu0 0
    %1044 = vmatpush2.bf16.msra.mxu0 0
    %1045 = vmatprep.mubr.bf16.mxu0 0
    %1046 = vmatmul.mubr.bf16.gmra.mxu0 %v642
    %v1047 = vpop.f32.mrf.mxu0
    %v1048 = vadd.f32 0.0, %v1047
    %v1049 = vpop.f32.mrf.mxu0
    %v1050 = vadd.f32 0.0, %v1049
    %v1051 = vpop.f32.mrf.mxu0
    %v1052 = vpop.f32.mrf.mxu0
    %1053 = vdwg.mxu0
    %v1054 = vadd.f32 %v911, %v1048
    %v1055 = vadd.f32 %v913, %v1050
    %v1056 = vld [vmem:[%s8] sm:$0x3]
    %v1058 = vlaneseq
    %v1059 = vshrl.u32 %v1058, 7
    %v1060 = vsub.s32 0, %v1059
    %v1061 = vrot.slane %v1056, %v1060
    %v1062 = vlaneseq
    %v1063 = vshrl.u32 %v1062, 7
    %v1064 = vsub.s32 1, %v1063
    %v1065 = vrot.slane %v1056, %v1064
    %v1068 = vadd.f32 %v1054, %v1061
    %v1069 = vadd.f32 %v1055, %v1065
    %v1070 = vand.u32 2147483647, %v1068
    %vm1071 = vcmp.le.f32.partialorder %v1070, 0.7853982
    %vm1072 = vcmp.lt.s32.totalorder %v1068, 0
    %v1073 = vand.u32 %v1068, 2139095040
    %v1074 = vshrl.u32 %v1073, 23
    %v1075 = vsub.s32 %v1074, 127
    %v1076 = vand.u32 2147483647, %v1068
    %v1077 = vand.u32 %v1076, 8388607
    %v1078 = vor.u32 %v1077, 8388608
    %v1079 = vsub.s32 0, %v1078
    %v1080 = vadd.s32 %v1075, 1
    %vm1081 = vcmp.gt.s32.totalorder %v1080, 0
    %v1082 = vsel %vm1081, %v1080, 0
    %v1083 = vshrl.u32 %v1082, 5
    %v1084 = vand.u32 %v1082, 31
    %v1085 = vsub.s32 32, %v1084
    %v1086 = vshrl.u32 683565275, %v1085
    %v1087 = vshll.u32 683565275, %v1084
    %v1088 = vshrl.u32 2475754826, %v1085
    %v1089 = vor.u32 %v1087, %v1088
    %v1090 = vshll.u32 2475754826, %v1084
    %v1091 = vshrl.u32 2131351028, %v1085
    %v1092 = vor.u32 %v1090, %v1091
    %v1093 = vshll.u32 2131351028, %v1084
    %v1094 = vshrl.u32 2102212464, %v1085
    %v1095 = vor.u32 %v1093, %v1094
    %v1096 = vshll.u32 2102212464, %v1084
    %v1097 = vshrl.u32 920167782, %v1085
    %v1098 = vor.u32 %v1096, %v1097
    %v1099 = vshll.u32 920167782, %v1084
    %v1100 = vshrl.u32 1326507024, %v1085
    %v1101 = vor.u32 %v1099, %v1100
    %vm1102 = vcmp.lt.s32.totalorder %v1083, 1
    %vm1103 = vcmp.lt.s32.totalorder %v1083, 2
    %vm1104 = vcmp.lt.s32.totalorder %v1083, 3
    %vm1105 = vcmp.lt.s32.totalorder %v1083, 4
    %v1106 = vsel %vm1102, %v1086, %v1089
    %v1107 = vsel %vm1105, %v1095, 2102212464
    %v1108 = vsel %vm1104, %v1092, %v1107
    %v1109 = vsel %vm1103, %v1106, %v1108
    %v1110 = vsel %vm1102, %v1089, %v1092
    %v1111 = vsel %vm1105, %v1098, 920167782
    %v1112 = vsel %vm1104, %v1095, %v1111
    %v1113 = vsel %vm1103, %v1110, %v1112
    %v1114 = vsel %vm1102, %v1092, %v1095
    %v1115 = vsel %vm1105, %v1101, 1326507024
    %v1116 = vsel %vm1104, %v1098, %v1115
    %v1117 = vsel %vm1103, %v1114, %v1116
    %v1118 = vshll.u32 %v1078, 8
    %v1119 = vmul.u32.u64.compose %v1118, %v1117
    %v1120 = vextract.low.u32 %v1119
    %v1121 = vextract.high.u32 %v1119
    %v1122 = vmul.u32.u64.compose %v1118, %v1113
    %v1123 = vextract.low.u32 %v1122
    %v1124 = vextract.high.u32 %v1122
    %v1125 = vmul.u32 %v1118, %v1109
    %v1126 = vadd.s32 %v1121, %v1123
    %vm1127 = vc.u32 %v1121, %v1123
    %v1128 = vadd.s32 %v1124, 1
    %v1129 = vsel %vm1127, %v1128, %v1124
    %v1130 = vadd.s32 %v1125, %v1129
    %v1131 = vadd.s32 %v1130, 536870912
    %v1132 = vshrl.u32 %v1131, 30
    %v1133 = vshll.u32 %v1132, 30
    %v1134 = vsub.s32 %v1130, %v1133
    %vm1135 = vcmp.lt.s32.totalorder %v1134, 0
    %v1136 = vsub.s32 0, %v1134
    %v1137 = vsel %vm1135, %v1136, %v1134
    %v1138 = vclz %v1137
    %v1139 = vsub.s32 %v1138, 2
    %vm1140 = vcmp.gt.s32.totalorder 0, %v1139
    %v1141 = vsel %vm1140, 0, %v1139
    %v1142 = vsub.s32 32, %v1141
    %v1143 = vshll.u32 %v1134, %v1141
    %v1144 = vshrl.u32 %v1126, %v1142
    %v1145 = vor.u32 %v1143, %v1144
    %v1146 = vsub.s32 4294967266, %v1141
    %v1147 = vadd.s32 %v1146, 127
    %v1148 = vshll.u32 %v1147, 23
    %v1149 = vor.u32 4788187, %v1148
    %v1150 = vand.u32 2147483647, %v1149
    %v1152 = vcvt.s32.f32 %v1145
    %v1153 = vmul.f32 %v1152, %v1150
    %v1154 = vxor.u32 %v1153, 2147483648
    %v1155 = vsel %vm1072, %v1154, %v1153
    %v1156 = vsub.s32 4, %v1132
    %v1157 = vsel %vm1072, %v1156, %v1132
    %v1158 = vsel %vm1071, %v1068, %v1155
    %v1159 = vsel %vm1071, 0, %v1157
    %v1160 = vcosq.f32.pop %v1158
    %v1161 = vsinq.f32.pop %v1158
    %vm1162 = vweird.f32 %v1068
    %v1163 = vand.u32 %v1159, 3
    %vm1164 = vcmp.lt.s32.totalorder %v1163, 2
    %vm1165 = vcmp.eq.s32.totalorder %v1163, 0
    %v1166 = vxor.u32 %v1161, 2147483648
    %v1167 = vsel %vm1165, %v1160, %v1166
    %vm1168 = vcmp.eq.s32.totalorder %v1163, 2
    %v1169 = vxor.u32 %v1160, 2147483648
    %v1170 = vsel %vm1168, %v1169, %v1161
    %v1171 = vsel %vm1164, %v1167, %v1170
    %v1172 = vsel %vm1162, nan, %v1171
    %v1173 = vpack.c.bf16 %v1172, %v1172
    %v1174 = vand.u32 2147483647, %v1068
    %vm1175 = vcmp.le.f32.partialorder %v1174, 0.7853982
    %vm1176 = vcmp.lt.s32.totalorder %v1068, 0
    %v1177 = vand.u32 %v1068, 2139095040
    %v1178 = vshrl.u32 %v1177, 23
    %v1179 = vsub.s32 %v1178, 127
    %v1180 = vand.u32 2147483647, %v1068
    %v1181 = vand.u32 %v1180, 8388607
    %v1182 = vor.u32 %v1181, 8388608
    %v1183 = vsub.s32 0, %v1182
    %v1184 = vadd.s32 %v1179, 1
    %vm1185 = vcmp.gt.s32.totalorder %v1184, 0
    %v1186 = vsel %vm1185, %v1184, 0
    %v1187 = vshrl.u32 %v1186, 5
    %v1188 = vand.u32 %v1186, 31
    %v1189 = vsub.s32 32, %v1188
    %v1190 = vshrl.u32 683565275, %v1189
    %v1191 = vshll.u32 683565275, %v1188
    %v1192 = vshrl.u32 2475754826, %v1189
    %v1193 = vor.u32 %v1191, %v1192
    %v1194 = vshll.u32 2475754826, %v1188
    %v1195 = vshrl.u32 2131351028, %v1189
    %v1196 = vor.u32 %v1194, %v1195
    %v1197 = vshll.u32 2131351028, %v1188
    %v1198 = vshrl.u32 2102212464, %v1189
    %v1199 = vor.u32 %v1197, %v1198
    %v1200 = vshll.u32 2102212464, %v1188
    %v1201 = vshrl.u32 920167782, %v1189
    %v1202 = vor.u32 %v1200, %v1201
    %v1203 = vshll.u32 920167782, %v1188
    %v1204 = vshrl.u32 1326507024, %v1189
    %v1205 = vor.u32 %v1203, %v1204
    %vm1206 = vcmp.lt.s32.totalorder %v1187, 1
    %vm1207 = vcmp.lt.s32.totalorder %v1187, 2
    %vm1208 = vcmp.lt.s32.totalorder %v1187, 3
    %vm1209 = vcmp.lt.s32.totalorder %v1187, 4
    %v1210 = vsel %vm1206, %v1190, %v1193
    %v1211 = vsel %vm1209, %v1199, 2102212464
    %v1212 = vsel %vm1208, %v1196, %v1211
    %v1213 = vsel %vm1207, %v1210, %v1212
    %v1214 = vsel %vm1206, %v1193, %v1196
    %v1215 = vsel %vm1209, %v1202, 920167782
    %v1216 = vsel %vm1208, %v1199, %v1215
    %v1217 = vsel %vm1207, %v1214, %v1216
    %v1218 = vsel %vm1206, %v1196, %v1199
    %v1219 = vsel %vm1209, %v1205, 1326507024
    %v1220 = vsel %vm1208, %v1202, %v1219
    %v1221 = vsel %vm1207, %v1218, %v1220
    %v1222 = vshll.u32 %v1182, 8
    %v1223 = vmul.u32.u64.compose %v1222, %v1221
    %v1224 = vextract.low.u32 %v1223
    %v1225 = vextract.high.u32 %v1223
    %v1226 = vmul.u32.u64.compose %v1222, %v1217
    %v1227 = vextract.low.u32 %v1226
    %v1228 = vextract.high.u32 %v1226
    %v1229 = vmul.u32 %v1222, %v1213
    %v1230 = vadd.s32 %v1225, %v1227
    %vm1231 = vc.u32 %v1225, %v1227
    %v1232 = vadd.s32 %v1228, 1
    %v1233 = vsel %vm1231, %v1232, %v1228
    %v1234 = vadd.s32 %v1229, %v1233
    %v1235 = vadd.s32 %v1234, 536870912
    %v1236 = vshrl.u32 %v1235, 30
    %v1237 = vshll.u32 %v1236, 30
    %v1238 = vsub.s32 %v1234, %v1237
    %vm1239 = vcmp.lt.s32.totalorder %v1238, 0
    %v1240 = vsub.s32 0, %v1238
    %v1241 = vsel %vm1239, %v1240, %v1238
    %v1242 = vclz %v1241
    %v1243 = vsub.s32 %v1242, 2
    %vm1244 = vcmp.gt.s32.totalorder 0, %v1243
    %v1245 = vsel %vm1244, 0, %v1243
    %v1246 = vsub.s32 32, %v1245
    %v1247 = vshll.u32 %v1238, %v1245
    %v1248 = vshrl.u32 %v1230, %v1246
    %v1249 = vor.u32 %v1247, %v1248
    %v1250 = vsub.s32 4294967266, %v1245
    %v1251 = vadd.s32 %v1250, 127
    %v1252 = vshll.u32 %v1251, 23
    %v1253 = vor.u32 4788187, %v1252
    %v1254 = vand.u32 2147483647, %v1253
    %v1256 = vcvt.s32.f32 %v1249
    %v1257 = vmul.f32 %v1256, %v1254
    %v1258 = vxor.u32 %v1257, 2147483648
    %v1259 = vsel %vm1176, %v1258, %v1257
    %v1260 = vsub.s32 4, %v1236
    %v1261 = vsel %vm1176, %v1260, %v1236
    %v1262 = vsel %vm1175, %v1068, %v1259
    %v1263 = vsel %vm1175, 0, %v1261
    %v1264 = vcosq.f32.pop %v1262
    %v1265 = vsinq.f32.pop %v1262
    %vm1266 = vweird.f32 %v1068
    %v1267 = vadd.s32 %v1263, 3
    %v1268 = vand.u32 %v1267, 3
    %vm1269 = vcmp.lt.s32.totalorder %v1268, 2
    %vm1270 = vcmp.eq.s32.totalorder %v1268, 0
    %v1271 = vxor.u32 %v1265, 2147483648
    %v1272 = vsel %vm1270, %v1264, %v1271
    %vm1273 = vcmp.eq.s32.totalorder %v1268, 2
    %v1274 = vxor.u32 %v1264, 2147483648
    %v1275 = vsel %vm1273, %v1274, %v1265
    %v1276 = vsel %vm1269, %v1272, %v1275
    %v1277 = vsel %vm1266, nan, %v1276
    %v1278 = vpack.c.bf16 %v1277, %v1277
    %v1279 = vmul.f32 %v1069, 0.5
    %v1280 = vmul.f32 %v1069, 0.70710677
    %v1281 = verf.f32.pop %v1280
    %v1282 = vadd.f32 %v1281, 1.0
    %v1283 = vmul.f32 %v1279, %v1282
    %v1284 = vpack.c.bf16 %v1283, %v1283
    %v1285 = vld [vmem:[#allocation13] sm:$0xf]
    %v1286 = vld [vmem:[#allocation13 + $0x4] sm:$0xf]
    %v1287 = vld [vmem:[#allocation13 + $0x8] sm:$0xf]
    %v1288 = vld [vmem:[#allocation13 + $0xc] sm:$0xf]
    %v1289 = vld [vmem:[#allocation13 + $0x10] sm:$0xf]
    %v1290 = vld [vmem:[#allocation13 + $0x14] sm:$0xf]
    %v1291 = vld [vmem:[#allocation13 + $0x18] sm:$0xf]
    %v1292 = vld [vmem:[#allocation13 + $0x1c] sm:$0xf]
    %v1293 = vld [vmem:[#allocation13 + $0x20] sm:$0xf]
    %v1294 = vld [vmem:[#allocation13 + $0x24] sm:$0xf]
    %v1295 = vld [vmem:[#allocation13 + $0x28] sm:$0xf]
    %v1296 = vld [vmem:[#allocation13 + $0x2c] sm:$0xf]
    %v1297 = vld [vmem:[#allocation13 + $0x30] sm:$0xf]
    %v1298 = vld [vmem:[#allocation13 + $0x34] sm:$0xf]
    %v1299 = vld [vmem:[#allocation13 + $0x38] sm:$0xf]
    %v1300 = vld [vmem:[#allocation13 + $0x3c] sm:$0xf]
    %v1301 = vld [vmem:[#allocation14] sm:$0xf]
    %v1302 = vld [vmem:[#allocation14 + $0x4] sm:$0xf]
    %v1303 = vld [vmem:[#allocation14 + $0x8] sm:$0xf]
    %v1304 = vld [vmem:[#allocation14 + $0xc] sm:$0xf]
    %v1305 = vld [vmem:[#allocation14 + $0x10] sm:$0xf]
    %v1306 = vld [vmem:[#allocation14 + $0x14] sm:$0xf]
    %v1307 = vld [vmem:[#allocation14 + $0x18] sm:$0xf]
    %v1308 = vld [vmem:[#allocation14 + $0x1c] sm:$0xf]
    %v1309 = vld [vmem:[#allocation14 + $0x20] sm:$0xf]
    %v1310 = vld [vmem:[#allocation14 + $0x24] sm:$0xf]
    %v1311 = vld [vmem:[#allocation14 + $0x28] sm:$0xf]
    %v1312 = vld [vmem:[#allocation14 + $0x2c] sm:$0xf]
    %v1313 = vld [vmem:[#allocation14 + $0x30] sm:$0xf]
    %v1314 = vld [vmem:[#allocation14 + $0x34] sm:$0xf]
    %v1315 = vld [vmem:[#allocation14 + $0x38] sm:$0xf]
    %v1316 = vld [vmem:[#allocation14 + $0x3c] sm:$0xf]
    %v1333 = vunpack.c.l.b16 %v1301
    %v1334 = vunpack.c.l.b16 %v1302
    %v1335 = vunpack.c.l.b16 %v1303
    %v1336 = vunpack.c.l.b16 %v1304
    %v1337 = vunpack.c.l.b16 %v1305
    %v1338 = vunpack.c.l.b16 %v1306
    %v1339 = vunpack.c.l.b16 %v1307
    %v1340 = vunpack.c.l.b16 %v1308
    %v1341 = vunpack.c.l.b16 %v1309
    %v1342 = vunpack.c.l.b16 %v1310
    %v1343 = vunpack.c.l.b16 %v1311
    %v1344 = vunpack.c.l.b16 %v1312
    %v1345 = vunpack.c.l.b16 %v1313
    %v1346 = vunpack.c.l.b16 %v1314
    %v1347 = vunpack.c.l.b16 %v1315
    %v1348 = vunpack.c.l.b16 %v1316
    %v1349 = vpack.c.b16 %v1334, %v1333
    %v1350 = vpack.c.b16 %v1336, %v1335
    %v1351 = vpack.c.b16 %v1338, %v1337
    %v1352 = vpack.c.b16 %v1340, %v1339
    %v1353 = vpack.c.b16 %v1342, %v1341
    %v1354 = vpack.c.b16 %v1344, %v1343
    %v1355 = vpack.c.b16 %v1346, %v1345
    %v1356 = vpack.c.b16 %v1348, %v1347
    %1365 = vmatprep.subr.bf16.mxu0 0
    %1366 = vmatpush1.bf16.msra.mxu0 %v1356
    %1367 = vmatprep.subr.bf16.mxu0 0
    %1368 = vmatpush1.bf16.msra.mxu0 %v1355
    %1369 = vmatprep.subr.bf16.mxu0 0
    %1370 = vmatpush1.bf16.msra.mxu0 %v1354
    %1371 = vmatprep.subr.bf16.mxu0 0
    %1372 = vmatpush1.bf16.msra.mxu0 %v1353
    %1373 = vmatprep.subr.bf16.mxu0 0
    %1374 = vmatpush1.bf16.msra.mxu0 %v1352
    %1375 = vmatprep.subr.bf16.mxu0 0
    %1376 = vmatpush1.bf16.msra.mxu0 %v1351
    %1377 = vmatprep.subr.bf16.mxu0 0
    %1378 = vmatpush1.bf16.msra.mxu0 %v1350
    %1379 = vmatprep.subr.bf16.mxu0 0
    %1380 = vmatpush1.bf16.msra.mxu0 %v1349
    %1381 = vmatprep.subr.bf16.mxu0 0
    %1382 = vmatpush2.bf16.msra.mxu0 0
    %1383 = vmatprep.subr.bf16.mxu0 0
    %1384 = vmatpush2.bf16.msra.mxu0 0
    %1385 = vmatprep.subr.bf16.mxu0 0
    %1386 = vmatpush2.bf16.msra.mxu0 0
    %1387 = vmatprep.subr.bf16.mxu0 0
    %1388 = vmatpush2.bf16.msra.mxu0 0
    %1389 = vmatprep.subr.bf16.mxu0 0
    %1390 = vmatpush2.bf16.msra.mxu0 0
    %1391 = vmatprep.subr.bf16.mxu0 0
    %1392 = vmatpush2.bf16.msra.mxu0 0
    %1393 = vmatprep.subr.bf16.mxu0 0
    %1394 = vmatpush2.bf16.msra.mxu0 0
    %1395 = vmatprep.subr.bf16.mxu0 0
    %1396 = vmatpush2.bf16.msra.mxu0 0
    %1397 = vmatprep.mubr.bf16.mxu0 0
    %1398 = vmatmul.mubr.bf16.gmra.mxu0 %v1278
    %v1399 = vpop.f32.mrf.mxu0
    %v1400 = vadd.f32 0.0, %v1399
    %v1401 = vpop.f32.mrf.mxu0
    %v1402 = vpop.f32.mrf.mxu0
    %v1403 = vpop.f32.mrf.mxu0
    %1404 = vdwg.mxu0
    %v1421 = vunpack.c.l.b16 %v1285
    %v1422 = vunpack.c.l.b16 %v1286
    %v1423 = vunpack.c.l.b16 %v1287
    %v1424 = vunpack.c.l.b16 %v1288
    %v1425 = vunpack.c.l.b16 %v1289
    %v1426 = vunpack.c.l.b16 %v1290
    %v1427 = vunpack.c.l.b16 %v1291
    %v1428 = vunpack.c.l.b16 %v1292
    %v1429 = vunpack.c.l.b16 %v1293
    %v1430 = vunpack.c.l.b16 %v1294
    %v1431 = vunpack.c.l.b16 %v1295
    %v1432 = vunpack.c.l.b16 %v1296
    %v1433 = vunpack.c.l.b16 %v1297
    %v1434 = vunpack.c.l.b16 %v1298
    %v1435 = vunpack.c.l.b16 %v1299
    %v1436 = vunpack.c.l.b16 %v1300
    %v1437 = vpack.c.b16 %v1422, %v1421
    %v1438 = vpack.c.b16 %v1424, %v1423
    %v1439 = vpack.c.b16 %v1426, %v1425
    %v1440 = vpack.c.b16 %v1428, %v1427
    %v1441 = vpack.c.b16 %v1430, %v1429
    %v1442 = vpack.c.b16 %v1432, %v1431
    %v1443 = vpack.c.b16 %v1434, %v1433
    %v1444 = vpack.c.b16 %v1436, %v1435
    %1453 = vmatprep.subr.bf16.mxu0 0
    %1454 = vmatpush1.bf16.msra.mxu0 %v1444
    %1455 = vmatprep.subr.bf16.mxu0 0
    %1456 = vmatpush1.bf16.msra.mxu0 %v1443
    %1457 = vmatprep.subr.bf16.mxu0 0
    %1458 = vmatpush1.bf16.msra.mxu0 %v1442
    %1459 = vmatprep.subr.bf16.mxu0 0
    %1460 = vmatpush1.bf16.msra.mxu0 %v1441
    %1461 = vmatprep.subr.bf16.mxu0 0
    %1462 = vmatpush1.bf16.msra.mxu0 %v1440
    %1463 = vmatprep.subr.bf16.mxu0 0
    %1464 = vmatpush1.bf16.msra.mxu0 %v1439
    %1465 = vmatprep.subr.bf16.mxu0 0
    %1466 = vmatpush1.bf16.msra.mxu0 %v1438
    %1467 = vmatprep.subr.bf16.mxu0 0
    %1468 = vmatpush1.bf16.msra.mxu0 %v1437
    %1469 = vmatprep.subr.bf16.mxu0 0
    %1470 = vmatpush2.bf16.msra.mxu0 0
    %1471 = vmatprep.subr.bf16.mxu0 0
    %1472 = vmatpush2.bf16.msra.mxu0 0
    %1473 = vmatprep.subr.bf16.mxu0 0
    %1474 = vmatpush2.bf16.msra.mxu0 0
    %1475 = vmatprep.subr.bf16.mxu0 0
    %1476 = vmatpush2.bf16.msra.mxu0 0
    %1477 = vmatprep.subr.bf16.mxu0 0
    %1478 = vmatpush2.bf16.msra.mxu0 0
    %1479 = vmatprep.subr.bf16.mxu0 0
    %1480 = vmatpush2.bf16.msra.mxu0 0
    %1481 = vmatprep.subr.bf16.mxu0 0
    %1482 = vmatpush2.bf16.msra.mxu0 0
    %1483 = vmatprep.subr.bf16.mxu0 0
    %1484 = vmatpush2.bf16.msra.mxu0 0
    %1485 = vmatprep.mubr.bf16.mxu0 0
    %1486 = vmatmul.mubr.bf16.gmra.mxu0 %v1173
    %v1487 = vpop.f32.mrf.mxu0
    %v1488 = vadd.f32 %v1400, %v1487
    %v1489 = vpop.f32.mrf.mxu0
    %v1490 = vpop.f32.mrf.mxu0
    %v1491 = vpop.f32.mrf.mxu0
    %1492 = vdwg.mxu0
    %v1493 = vld [vmem:[#allocation16] sm:$0xf]
    %v1494 = vld [vmem:[#allocation16 + $0x4] sm:$0xf]
    %v1495 = vld [vmem:[#allocation16 + $0x8] sm:$0xf]
    %v1496 = vld [vmem:[#allocation16 + $0xc] sm:$0xf]
    %v1497 = vld [vmem:[#allocation16 + $0x10] sm:$0xf]
    %v1498 = vld [vmem:[#allocation16 + $0x14] sm:$0xf]
    %v1499 = vld [vmem:[#allocation16 + $0x18] sm:$0xf]
    %v1500 = vld [vmem:[#allocation16 + $0x1c] sm:$0xf]
    %v1501 = vld [vmem:[#allocation16 + $0x20] sm:$0xf]
    %v1502 = vld [vmem:[#allocation16 + $0x24] sm:$0xf]
    %v1503 = vld [vmem:[#allocation16 + $0x28] sm:$0xf]
    %v1504 = vld [vmem:[#allocation16 + $0x2c] sm:$0xf]
    %v1505 = vld [vmem:[#allocation16 + $0x30] sm:$0xf]
    %v1506 = vld [vmem:[#allocation16 + $0x34] sm:$0xf]
    %v1507 = vld [vmem:[#allocation16 + $0x38] sm:$0xf]
    %v1508 = vld [vmem:[#allocation16 + $0x3c] sm:$0xf]
    %v1525 = vunpack.c.l.b16 %v1493
    %v1526 = vunpack.c.l.b16 %v1494
    %v1527 = vunpack.c.l.b16 %v1495
    %v1528 = vunpack.c.l.b16 %v1496
    %v1529 = vunpack.c.l.b16 %v1497
    %v1530 = vunpack.c.l.b16 %v1498
    %v1531 = vunpack.c.l.b16 %v1499
    %v1532 = vunpack.c.l.b16 %v1500
    %v1533 = vunpack.c.l.b16 %v1501
    %v1534 = vunpack.c.l.b16 %v1502
    %v1535 = vunpack.c.l.b16 %v1503
    %v1536 = vunpack.c.l.b16 %v1504
    %v1537 = vunpack.c.l.b16 %v1505
    %v1538 = vunpack.c.l.b16 %v1506
    %v1539 = vunpack.c.l.b16 %v1507
    %v1540 = vunpack.c.l.b16 %v1508
    %v1541 = vpack.c.b16 %v1526, %v1525
    %v1542 = vpack.c.b16 %v1528, %v1527
    %v1543 = vpack.c.b16 %v1530, %v1529
    %v1544 = vpack.c.b16 %v1532, %v1531
    %v1545 = vpack.c.b16 %v1534, %v1533
    %v1546 = vpack.c.b16 %v1536, %v1535
    %v1547 = vpack.c.b16 %v1538, %v1537
    %v1548 = vpack.c.b16 %v1540, %v1539
    %1557 = vmatprep.subr.bf16.mxu0 0
    %1558 = vmatpush1.bf16.msra.mxu0 %v1548
    %1559 = vmatprep.subr.bf16.mxu0 0
    %1560 = vmatpush1.bf16.msra.mxu0 %v1547
    %1561 = vmatprep.subr.bf16.mxu0 0
    %1562 = vmatpush1.bf16.msra.mxu0 %v1546
    %1563 = vmatprep.subr.bf16.mxu0 0
    %1564 = vmatpush1.bf16.msra.mxu0 %v1545
    %1565 = vmatprep.subr.bf16.mxu0 0
    %1566 = vmatpush1.bf16.msra.mxu0 %v1544
    %1567 = vmatprep.subr.bf16.mxu0 0
    %1568 = vmatpush1.bf16.msra.mxu0 %v1543
    %1569 = vmatprep.subr.bf16.mxu0 0
    %1570 = vmatpush1.bf16.msra.mxu0 %v1542
    %1571 = vmatprep.subr.bf16.mxu0 0
    %1572 = vmatpush1.bf16.msra.mxu0 %v1541
    %1573 = vmatprep.subr.bf16.mxu0 0
    %1574 = vmatpush2.bf16.msra.mxu0 0
    %1575 = vmatprep.subr.bf16.mxu0 0
    %1576 = vmatpush2.bf16.msra.mxu0 0
    %1577 = vmatprep.subr.bf16.mxu0 0
    %1578 = vmatpush2.bf16.msra.mxu0 0
    %1579 = vmatprep.subr.bf16.mxu0 0
    %1580 = vmatpush2.bf16.msra.mxu0 0
    %1581 = vmatprep.subr.bf16.mxu0 0
    %1582 = vmatpush2.bf16.msra.mxu0 0
    %1583 = vmatprep.subr.bf16.mxu0 0
    %1584 = vmatpush2.bf16.msra.mxu0 0
    %1585 = vmatprep.subr.bf16.mxu0 0
    %1586 = vmatpush2.bf16.msra.mxu0 0
    %1587 = vmatprep.subr.bf16.mxu0 0
    %1588 = vmatpush2.bf16.msra.mxu0 0
    %1589 = vmatprep.mubr.bf16.mxu0 0
    %1590 = vmatmul.mubr.bf16.gmra.mxu0 %v1284
    %v1591 = vpop.f32.mrf.mxu0
    %v1592 = vadd.f32 0.0, %v1591
    %v1593 = vpop.f32.mrf.mxu0
    %v1594 = vpop.f32.mrf.mxu0
    %v1595 = vpop.f32.mrf.mxu0
    %1596 = vdwg.mxu0
    %v1597 = vadd.f32 %v1488, %v1592
    %v1598 = vld [vmem:[%s12] sm:$0x1]
    %v1600 = vlaneseq
    %v1601 = vshrl.u32 %v1600, 7
    %v1602 = vsub.s32 0, %v1601
    %v1603 = vrot.slane %v1598, %v1602
    %v1605 = vadd.f32 %v1597, %v1603
    %1606 = vst [vmem:[#allocation17] sm:$0xff] %v1605
    // Predicated region
    $region90: #{tpu_custom_call.1} parent=1 // pred_check
      _
    $region91: #{tpu_custom_call.1} parent=1 // pred_check_branch
      %1608 = sbr.rel (0) target = $region93
    $region92: #{tpu_custom_call.1} parent=1 // pred_region
      %s1610 = ssub.s32 128, 128
      %1611 = vsyncadd [#allocation4], %s1610
      %s1613 = sshll.u32 [#allocation17], 4
      %s1614 = int_to_ptr.vmem [resolvable:$true] %s1613
      %1616 = dma.vmem_to_hbm [thread:$0]  %s1614, 128, %s13, [#allocation4]
    $region93: #{tpu_custom_call.1} parent=1 // pred_fallthru
      _
    // Predicated region
    $region94: #{tpu_custom_call.1} parent=1 // pred_check
      _
    $region95: #{tpu_custom_call.1} parent=1 // pred_check_branch
      %1618 = sbr.rel (0) target = $region97
    $region96: #{tpu_custom_call.1} parent=1 // pred_region
      %1619 = dma.done [#allocation4], 128
    $region97: #{tpu_custom_call.1} parent=1 // pred_fallthru
      _
    %1620 = vsyncpa [#allocation3], 1
    %1621 = vsyncpa [#allocation6], 1
    %1622 = vsyncpa [#allocation9], 1
    %1623 = vsyncpa [#allocation12], 1
    %1624 = vsyncpa [#allocation15], 1
    %1625 = vsyncpa [#allocation4], 1

</llo_original>
